<compile_context>
chip_gen: v5e
topology: v5e:2x2
jax: 0.10.0
libtpu: 0.0.40
codegen_flags: <defaults>
</compile_context>

<pallas_src>
import functools

import jax
import jax.numpy as jnp
from jax.experimental import pallas as pl
from jax.experimental.pallas import tpu as pltpu

EPS = 1e-5
MXU_DTYPE = jnp.bfloat16     # MXU operand / intermediate-activation storage dtype
PW_ROW_TILE = 1024           # row tile for the memory-bound pointwise epilogue


# ----------------------------- Pallas kernels ------------------------------ #

def _block_stats(acc, rows):
    """Per-block BN partials from the local f32 accumulator.

    Row 0: sum over rows.  Row 1: sum of squared deviations from the BLOCK mean
    (combined across blocks wrapper-side with Chan's parallel formula).
    Rows 2..7: padding so the stats block is a full (8, Cout) sublane tile.
    """
    cout = acc.shape[-1]
    s = jnp.sum(acc, axis=0, keepdims=True)                 # (1, Cout)
    mu = s * (1.0 / rows)
    d = acc - mu
    m2 = jnp.sum(d * d, axis=0, keepdims=True)              # (1, Cout)
    return jnp.concatenate([s, m2, jnp.zeros((6, cout), jnp.float32)], axis=0)


def _conv_pack_kernel(x_ref, w_ref, y_ref, st_ref, pack_ref, *, taps, stride, ho, wo):
    """Direct conv for one image: pack taps into one K = T*Cin MXU matmul.

    x_ref:    (P, Hp, Wp, Cin)  bf16  phase-split (halo-padded) input image
    w_ref:    (T*Cin, Cout)     bf16  packed tap weights (tap-major, then Cin)
    y_ref:    (Ho*Wo, Cout)     bf16  conv output rows for this image
    st_ref:   (1, 8, Cout)      f32   per-block BN partial statistics
    pack_ref: (Ho*Wo, T*Cin)    bf16  VMEM scratch: packed im2col operand
    """
    cin = x_ref.shape[-1]
    for t, (kh, kw) in enumerate(taps):
        p = (kh % stride) * stride + (kw % stride)     # stride phase
        qh, qw = kh // stride, kw // stride            # window offset in phase
        win = x_ref[p, qh:qh + ho, qw:qw + wo, :]      # (Ho, Wo, Cin)
        pack_ref[:, t * cin:(t + 1) * cin] = win.reshape(ho * wo, cin)
    acc = jnp.dot(pack_ref[...], w_ref[...], preferred_element_type=jnp.float32)
    y_ref[...] = acc.astype(y_ref.dtype)               # single store of the block
    st_ref[0] = _block_stats(acc, ho * wo)


def _bn_relu_conv_kernel(x_ref, s_ref, b_ref, w_ref, y_ref, st_ref,
                         xpad_ref, pack_ref, *, ksz, ho, wo):
    """Fused BN1-affine + ReLU + zero-pad + 3x3 stride-1 conv for one image.

    x_ref:    (1, Ho, Wo, Cin)   bf16  raw conv1 output (pre-BN) for this image
    s_ref:    (1, Cin)           f32   BN1 scale  (gamma / sqrt(var + eps))
    b_ref:    (1, Cin)           f32   BN1 shift  (beta - mean * scale)
    w_ref:    (ksz*ksz*Cin, Cout) bf16 packed conv2 weights
    y_ref:    (Ho*Wo, Cout)      bf16  conv2 output rows
    st_ref:   (1, 8, Cout)       f32   per-block BN2 partial statistics
    xpad_ref: (Ho+2, Wo+2, Cin)  bf16  VMEM scratch: zero-halo activation
    pack_ref: (Ho*Wo, 9*Cin)     bf16  VMEM scratch: packed im2col operand
    """
    cin = x_ref.shape[-1]
    h = jnp.maximum(x_ref[0].astype(jnp.float32) * s_ref[...] + b_ref[...], 0.0)
    xpad_ref[...] = jnp.zeros_like(xpad_ref)
    xpad_ref[1:1 + ho, 1:1 + wo, :] = h.astype(xpad_ref.dtype)
    t = 0
    for kh in range(ksz):
        for kw in range(ksz):
            win = xpad_ref[kh:kh + ho, kw:kw + wo, :]
            pack_ref[:, t * cin:(t + 1) * cin] = win.reshape(ho * wo, cin)
            t += 1
    acc = jnp.dot(pack_ref[...], w_ref[...], preferred_element_type=jnp.float32)
    y_ref[...] = acc.astype(y_ref.dtype)
    st_ref[0] = _block_stats(acc, ho * wo)


def _bn_add_relu_kernel(y_ref, s_ref, b_ref, r_ref, rs_ref, rb_ref, o_ref):
    # relu(y*s + b + r*rs + rb): BN2 affine + shortcut affine + add + relu.
    o_ref[...] = jnp.maximum(
        y_ref[...].astype(jnp.float32) * s_ref[...] + b_ref[...]
        + r_ref[...].astype(jnp.float32) * rs_ref[...] + rb_ref[...],
        0.0,
    ).astype(o_ref.dtype)


# -------------------------------- helpers ----------------------------------- #

def _phase_split(x, stride, pad):
    """(N,H,W,C) -> (N, s*s, Hp, Wp, C): halo-pad then split by stride phase.

    xb[n, a*s + b, i, j, c] == x_pad[n, s*i + a, s*j + b, c]
    """
    n, h, w, c = x.shape
    if pad:
        x = jnp.pad(x, ((0, 0), (pad, pad), (pad, pad), (0, 0)))
        h += 2 * pad
        w += 2 * pad
    s = stride
    hp = -(-h // s)
    wp = -(-w // s)
    if (hp * s, wp * s) != (h, w):
        x = jnp.pad(x, ((0, 0), (0, hp * s - h), (0, wp * s - w), (0, 0)))
    x = x.reshape(n, hp, s, wp, s, c)
    return jnp.transpose(x, (0, 2, 4, 1, 3, 5)).reshape(n, s * s, hp, wp, c)


def _pack_weights(w_oihw, taps):
    """(Cout, Cin, K, K) -> (T*Cin, Cout), tap-major, matching the in-kernel pack."""
    return jnp.concatenate([w_oihw[:, :, kh, kw].T for kh, kw in taps],
                           axis=0).astype(MXU_DTYPE)


def _combine_stats(st, rows_per_block, m):
    """Chan parallel combine of per-block (sum, M2) partials -> (mean, biased var)."""
    bsum = st[:, 0, :]
    bm2 = st[:, 1, :]
    mean = jnp.sum(bsum, axis=0) / m
    bmean = bsum / rows_per_block
    m2 = jnp.sum(bm2, axis=0) + rows_per_block * jnp.sum((bmean - mean) ** 2, axis=0)
    var = jnp.maximum(m2 / m, 0.0)
    return mean, var


def _bn_affine(gamma, beta, mean, var):
    scale = gamma / jnp.sqrt(var + EPS)
    shift = beta - mean * scale
    return scale, shift


def _lane_pack_factor(m, c):
    """Rows folded into lanes so the minor dim is a multiple of 128 (lane-dense)."""
    if c % 128 == 0:
        return 1
    if 128 % c == 0 and m % (128 // c) == 0:
        return 128 // c
    return 1


# --------------------------- pallas_call wrappers --------------------------- #

def conv_with_stats(xb, w_packed, taps, stride, n, ho, wo):
    """Tap-packed direct conv on a phase-split image tensor + fused BN partials."""
    np_, hp, wp, cin = xb.shape
    p = np_ // n
    tk, cout = w_packed.shape
    m = n * ho * wo
    kernel = functools.partial(_conv_pack_kernel, taps=tuple(taps), stride=stride,
                               ho=ho, wo=wo)
    y, st = pl.pallas_call(
        kernel,
        out_shape=(
            jax.ShapeDtypeStruct((m, cout), MXU_DTYPE),
            jax.ShapeDtypeStruct((n, 8, cout), jnp.float32),
        ),
        grid=(n,),
        in_specs=[
            pl.BlockSpec((p, hp, wp, cin), lambda i: (i, 0, 0, 0)),
            pl.BlockSpec((tk, cout), lambda i: (0, 0)),
        ],
        out_specs=(
            pl.BlockSpec((ho * wo, cout), lambda i: (i, 0)),
            pl.BlockSpec((1, 8, cout), lambda i: (i, 0, 0)),
        ),
        scratch_shapes=[pltpu.VMEM((ho * wo, tk), MXU_DTYPE)],
        compiler_params=pltpu.CompilerParams(dimension_semantics=("parallel",)),
    )(xb, w_packed)
    mean, var = _combine_stats(st, ho * wo, m)
    return y, mean, var


def bn_relu_conv_with_stats(y_prev, s_prev, b_prev, w_oihw):
    """Fused BN-affine + ReLU + 3x3 stride-1 pad-1 conv + BN partials (conv2)."""
    n, ho, wo, cin = y_prev.shape
    cout, _, ksz, _ = w_oihw.shape
    taps = [(kh, kw) for kh in range(ksz) for kw in range(ksz)]
    w_packed = _pack_weights(w_oihw, taps)
    m = n * ho * wo
    kernel = functools.partial(_bn_relu_conv_kernel, ksz=ksz, ho=ho, wo=wo)
    y, st = pl.pallas_call(
        kernel,
        out_shape=(
            jax.ShapeDtypeStruct((m, cout), MXU_DTYPE),
            jax.ShapeDtypeStruct((n, 8, cout), jnp.float32),
        ),
        grid=(n,),
        in_specs=[
            pl.BlockSpec((1, ho, wo, cin), lambda i: (i, 0, 0, 0)),
            pl.BlockSpec((1, cin), lambda i: (0, 0)),
            pl.BlockSpec((1, cin), lambda i: (0, 0)),
            pl.BlockSpec((ksz * ksz * cin, cout), lambda i: (0, 0)),
        ],
        out_specs=(
            pl.BlockSpec((ho * wo, cout), lambda i: (i, 0)),
            pl.BlockSpec((1, 8, cout), lambda i: (i, 0, 0)),
        ),
        scratch_shapes=[
            pltpu.VMEM((ho + 2, wo + 2, cin), MXU_DTYPE),
            pltpu.VMEM((ho * wo, ksz * ksz * cin), MXU_DTYPE),
        ],
        compiler_params=pltpu.CompilerParams(dimension_semantics=("parallel",)),
    )(y_prev, s_prev.reshape(1, cin), b_prev.reshape(1, cin), w_packed)
    mean, var = _combine_stats(st, ho * wo, m)
    return y, mean, var


def bn_add_relu(y, scale, shift, r, r_scale, r_shift):
    """relu(y*s + b + r*rs + rb) — lane-dense packed pointwise epilogue."""
    m, c = y.shape
    k = _lane_pack_factor(m, c)
    rows, width = m // k, k * c
    tm = min(rows, PW_ROW_TILE)
    out = pl.pallas_call(
        _bn_add_relu_kernel,
        out_shape=jax.ShapeDtypeStruct((rows, width), jnp.float32),
        grid=(pl.cdiv(rows, tm),),
        in_specs=[
            pl.BlockSpec((tm, width), lambda i: (i, 0)),
            pl.BlockSpec((1, width), lambda i: (0, 0)),
            pl.BlockSpec((1, width), lambda i: (0, 0)),
            pl.BlockSpec((tm, width), lambda i: (i, 0)),
            pl.BlockSpec((1, width), lambda i: (0, 0)),
            pl.BlockSpec((1, width), lambda i: (0, 0)),
        ],
        out_specs=pl.BlockSpec((tm, width), lambda i: (i, 0)),
        compiler_params=pltpu.CompilerParams(dimension_semantics=("parallel",)),
    )(y.reshape(rows, width),
      jnp.tile(scale, k).reshape(1, width),
      jnp.tile(shift, k).reshape(1, width),
      r.reshape(rows, width),
      jnp.tile(r_scale, k).reshape(1, width),
      jnp.tile(r_shift, k).reshape(1, width))
    return out.reshape(m, c)


# --------------------------------- forward ----------------------------------- #

@functools.partial(jax.jit, static_argnames=("stride",))
def residual_block_forward(x_nchw, params, stride=1):
    x = jnp.transpose(x_nchw, (0, 2, 3, 1)).astype(jnp.float32)       # NHWC f32
    n, h, w, cin = x.shape
    cout, _, ksz, _ = params["w1"].shape
    ho = (h + 2 - ksz) // stride + 1
    wo = (w + 2 - ksz) // stride + 1

    # One phase-split (halo-padded, bf16) copy of x feeds conv1 AND the 1x1 shortcut.
    xb = _phase_split(x.astype(MXU_DTYPE), stride, pad=1)
    xb = xb.reshape(n * stride * stride, xb.shape[2], xb.shape[3], cin)

    # conv1 + fused BN1 partial statistics
    taps1 = [(kh, kw) for kh in range(ksz) for kw in range(ksz)]
    y1, m1, v1 = conv_with_stats(xb, _pack_weights(params["w1"], taps1),
                                 taps1, stride, n, ho, wo)
    s1, b1 = _bn_affine(params["g1"], params["b1"], m1, v1)

    # conv2 with BN1-affine + ReLU fused into its window pack (+ BN2 partials)
    y2, m2, v2 = bn_relu_conv_with_stats(y1.reshape(n, ho, wo, cout), s1, b1,
                                         params["w2"])
    s2, b2 = _bn_affine(params["g2"], params["b2"], m2, v2)

    # shortcut branch
    if stride != 1 or cin != cout:
        # 1x1 / stride-s projection: kernel tap (1,1) on the pad=1 phase-split
        # tensor reads x_pad[s*i+1, s*j+1] == x[s*i, s*j]  (no strided copy of x);
        # the weight is the single (0,0) tap of ws.
        ws_packed = _pack_weights(params["ws"], [(0, 0)])
        ys, ms, vs = conv_with_stats(xb, ws_packed, [(1, 1)], stride, n, ho, wo)
        rs, rb = _bn_affine(params["gs"], params["bs"], ms, vs)
        r = ys
    else:
        r = x.reshape(n * h * w, cin)
        rs = jnp.ones((cout,), jnp.float32)
        rb = jnp.zeros((cout,), jnp.float32)

    # fused epilogue: relu(bn2(conv2) + shortcut)
    out = bn_add_relu(y2, s2, b2, r, rs, rb).reshape(n, ho, wo, cout)
    return jnp.transpose(out, (0, 3, 1, 2))                           # back to NCHW


# ----------------------------- pure-JAX reference ---------------------------- #

def _ref_forward(x_nchw, params, stride):
    def q(v):  # bf16 quantization at the same points as the kernels
        return v.astype(jnp.bfloat16).astype(jnp.float32)

    def conv(x, w, s, pad):
        return jax.lax.conv_general_dilated(
            q(x), q(w), (s, s), [(pad, pad), (pad, pad)],
            dimension_numbers=("NCHW", "OIHW", "NCHW"),
            precision=jax.lax.Precision.HIGHEST)

    def bn_affine(y, g, b):
        m = jnp.mean(y, axis=(0, 2, 3), keepdims=True)
        v = jnp.var(y, axis=(0, 2, 3), keepdims=True)        # biased, training mode
        s = g.reshape(1, -1, 1, 1) / jnp.sqrt(v + EPS)
        return s, b.reshape(1, -1, 1, 1) - m * s

    y1 = conv(x_nchw, params["w1"], stride, 1)
    s1, b1 = bn_affine(y1, params["g1"], params["b1"])
    h1 = jax.nn.relu(q(y1) * s1 + b1)                        # kernel stores y1 in bf16
    y2 = conv(h1, params["w2"], 1, 1)
    s2, b2 = bn_affine(y2, params["g2"], params["b2"])
    cin, cout = params["w1"].shape[1], params["w1"].shape[0]
    if stride != 1 or cin != cout:
        ys = conv(x_nchw, params["ws"], stride, 0)
        ss, bs = bn_affine(ys, params["gs"], params["bs"])
        sc = q(ys) * ss + bs
    else:
        sc = x_nchw
    return jax.nn.relu(q(y2) * s2 + b2 + sc)


# ------------------------------------ main ----------------------------------- #

if __name__ == "__main__":
    # Tolerance: conv outputs are stored in bf16 (review item); the kernel and the
    # lax-conv reference accumulate in f32 with different orderings, so a value can
    # round to an adjacent bf16 at the storage point (~1 ulp).  1e-2 covers that
    # while still catching any real (padding / stats / tap) bug by orders of magnitude.
    ATOL = RTOL = 1e-2

    key = jax.random.PRNGKey(0)
    k0, k1, k2, k3, k4, k5 = jax.random.split(key, 6)

    # Config A: projection shortcut (stride 2, channel change)
    N, C_IN, C_OUT, H, W, STRIDE = 2, 4, 8, 16, 16, 2
    params_a = {
        "w1": 0.1 * jax.random.normal(k1, (C_OUT, C_IN, 3, 3), jnp.float32),
        "w2": 0.1 * jax.random.normal(k2, (C_OUT, C_OUT, 3, 3), jnp.float32),
        "ws": 0.1 * jax.random.normal(k3, (C_OUT, C_IN, 1, 1), jnp.float32),
        "g1": jnp.ones((C_OUT,), jnp.float32), "b1": jnp.zeros((C_OUT,), jnp.float32),
        "g2": jnp.ones((C_OUT,), jnp.float32), "b2": jnp.zeros((C_OUT,), jnp.float32),
        "gs": jnp.ones((C_OUT,), jnp.float32), "bs": jnp.zeros((C_OUT,), jnp.float32),
    }
    x = jax.random.normal(k0, (N, C_IN, H, W), jnp.float32)

    out_a = jax.block_until_ready(residual_block_forward(x, params_a, stride=STRIDE))
    ref_a = jax.block_until_ready(_ref_forward(x, params_a, STRIDE))
    assert out_a.shape == ref_a.shape == (N, C_OUT, H // STRIDE, W // STRIDE)
    err_a = float(jnp.max(jnp.abs(out_a - ref_a)))
    assert jnp.allclose(out_a, ref_a, atol=ATOL, rtol=RTOL), err_a

    # Config B: identity shortcut (stride 1, cin == cout)
    C_B = 4
    params_b = {
        "w1": 0.1 * jax.random.normal(k4, (C_B, C_B, 3, 3), jnp.float32),
        "w2": 0.1 * jax.random.normal(k5, (C_B, C_B, 3, 3), jnp.float32),
        "g1": jnp.ones((C_B,), jnp.float32), "b1": jnp.zeros((C_B,), jnp.float32),
        "g2": jnp.ones((C_B,), jnp.float32), "b2": jnp.zeros((C_B,), jnp.float32),
    }
    out_b = jax.block_until_ready(residual_block_forward(x, params_b, stride=1))
    ref_b = jax.block_until_ready(_ref_forward(x, params_b, 1))
    assert out_b.shape == ref_b.shape == (N, C_B, H, W)
    err_b = float(jnp.max(jnp.abs(out_b - ref_b)))
    assert jnp.allclose(out_b, ref_b, atol=ATOL, rtol=RTOL), err_b

    print("KERNEL_OK")
</pallas_src>

<mosaic_0001>
module attributes {stable_mosaic.version = 11 : i64} {
  func.func @_conv_pack_kernel(%arg0: i32, %arg1: memref<4x9x9x4xbf16, #tpu.memory_space<vmem>>, %arg2: memref<36x8xbf16, #tpu.memory_space<vmem>>, %arg3: memref<64x8xbf16, #tpu.memory_space<vmem>>, %arg4: memref<1x8x8xf32, #tpu.memory_space<vmem>>, %arg5: memref<64x36xbf16, #tpu.memory_space<vmem>>) attributes {dimension_semantics = [#tpu.dimension_semantics<parallel>], iteration_bounds = array<i64: 2>, scalar_prefetch = 0 : i64, scratch_operands = 1 : i64, tpu.core_type = #tpu.core_type<tc>, window_params = [{transform_indices = @transform_0, window_bounds = array<i64: 4, 9, 9, 4>}, {pipeline_mode = #tpu.pipeline_mode<synchronous>, transform_indices = @transform_1, window_bounds = array<i64: 36, 8>}, {transform_indices = @transform_2, window_bounds = array<i64: 64, 8>}, {transform_indices = @transform_3, window_bounds = array<i64: 1, 8, 8>}]} {
    %c0 = arith.constant 0 : index
    %c0_0 = arith.constant 0 : index
    %c0_1 = arith.constant 0 : index
    %c0_2 = arith.constant 0 : index
    %0 = vector.load %arg1[%c0, %c0_0, %c0_1, %c0_2] : memref<4x9x9x4xbf16, #tpu.memory_space<vmem>>, vector<1x8x8x4xbf16>
    %1 = vector.shape_cast %0 : vector<1x8x8x4xbf16> to vector<8x8x4xbf16>
    %2 = vector.shape_cast %1 : vector<8x8x4xbf16> to vector<64x4xbf16>
    %c0_3 = arith.constant 0 : index
    %c0_4 = arith.constant 0 : index
    %3 = vector.load %arg5[%c0_3, %c0_4] : memref<64x36xbf16, #tpu.memory_space<vmem>>, vector<64x4xbf16>
    tpu.vector_store %arg5[%c0_3, %c0_4], %2 {strides = array<i32>} : memref<64x36xbf16, #tpu.memory_space<vmem>>, vector<64x4xbf16>,
    %c1 = arith.constant 1 : index
    %c0_5 = arith.constant 0 : index
    %c0_6 = arith.constant 0 : index
    %c0_7 = arith.constant 0 : index
    %4 = vector.load %arg1[%c1, %c0_5, %c0_6, %c0_7] : memref<4x9x9x4xbf16, #tpu.memory_space<vmem>>, vector<1x8x8x4xbf16>
    %5 = vector.shape_cast %4 : vector<1x8x8x4xbf16> to vector<8x8x4xbf16>
    %6 = vector.shape_cast %5 : vector<8x8x4xbf16> to vector<64x4xbf16>
    %c0_8 = arith.constant 0 : index
    %c4 = arith.constant 4 : index
    %7 = vector.load %arg5[%c0_8, %c4] : memref<64x36xbf16, #tpu.memory_space<vmem>>, vector<64x4xbf16>
    tpu.vector_store %arg5[%c0_8, %c4], %6 {strides = array<i32>} : memref<64x36xbf16, #tpu.memory_space<vmem>>, vector<64x4xbf16>,
    %c0_9 = arith.constant 0 : index
    %c0_10 = arith.constant 0 : index
    %c1_11 = arith.constant 1 : index
    %c0_12 = arith.constant 0 : index
    %8 = vector.load %arg1[%c0_9, %c0_10, %c1_11, %c0_12] : memref<4x9x9x4xbf16, #tpu.memory_space<vmem>>, vector<1x8x8x4xbf16>
    %9 = vector.shape_cast %8 : vector<1x8x8x4xbf16> to vector<8x8x4xbf16>
    %10 = vector.shape_cast %9 : vector<8x8x4xbf16> to vector<64x4xbf16>
    %c0_13 = arith.constant 0 : index
    %c8 = arith.constant 8 : index
    %11 = vector.load %arg5[%c0_13, %c8] : memref<64x36xbf16, #tpu.memory_space<vmem>>, vector<64x4xbf16>
    tpu.vector_store %arg5[%c0_13, %c8], %10 {strides = array<i32>} : memref<64x36xbf16, #tpu.memory_space<vmem>>, vector<64x4xbf16>,
    %c2 = arith.constant 2 : index
    %c0_14 = arith.constant 0 : index
    %c0_15 = arith.constant 0 : index
    %c0_16 = arith.constant 0 : index
    %12 = vector.load %arg1[%c2, %c0_14, %c0_15, %c0_16] : memref<4x9x9x4xbf16, #tpu.memory_space<vmem>>, vector<1x8x8x4xbf16>
    %13 = vector.shape_cast %12 : vector<1x8x8x4xbf16> to vector<8x8x4xbf16>
    %14 = vector.shape_cast %13 : vector<8x8x4xbf16> to vector<64x4xbf16>
    %c0_17 = arith.constant 0 : index
    %c12 = arith.constant 12 : index
    %15 = vector.load %arg5[%c0_17, %c12] : memref<64x36xbf16, #tpu.memory_space<vmem>>, vector<64x4xbf16>
    tpu.vector_store %arg5[%c0_17, %c12], %14 {strides = array<i32>} : memref<64x36xbf16, #tpu.memory_space<vmem>>, vector<64x4xbf16>,
    %c3 = arith.constant 3 : index
    %c0_18 = arith.constant 0 : index
    %c0_19 = arith.constant 0 : index
    %c0_20 = arith.constant 0 : index
    %16 = vector.load %arg1[%c3, %c0_18, %c0_19, %c0_20] : memref<4x9x9x4xbf16, #tpu.memory_space<vmem>>, vector<1x8x8x4xbf16>
    %17 = vector.shape_cast %16 : vector<1x8x8x4xbf16> to vector<8x8x4xbf16>
    %18 = vector.shape_cast %17 : vector<8x8x4xbf16> to vector<64x4xbf16>
    %c0_21 = arith.constant 0 : index
    %c16 = arith.constant 16 : index
    %19 = vector.load %arg5[%c0_21, %c16] : memref<64x36xbf16, #tpu.memory_space<vmem>>, vector<64x4xbf16>
    tpu.vector_store %arg5[%c0_21, %c16], %18 {strides = array<i32>} : memref<64x36xbf16, #tpu.memory_space<vmem>>, vector<64x4xbf16>,
    %c2_22 = arith.constant 2 : index
    %c0_23 = arith.constant 0 : index
    %c1_24 = arith.constant 1 : index
    %c0_25 = arith.constant 0 : index
    %20 = vector.load %arg1[%c2_22, %c0_23, %c1_24, %c0_25] : memref<4x9x9x4xbf16, #tpu.memory_space<vmem>>, vector<1x8x8x4xbf16>
    %21 = vector.shape_cast %20 : vector<1x8x8x4xbf16> to vector<8x8x4xbf16>
    %22 = vector.shape_cast %21 : vector<8x8x4xbf16> to vector<64x4xbf16>
    %c0_26 = arith.constant 0 : index
    %c20 = arith.constant 20 : index
    %23 = vector.load %arg5[%c0_26, %c20] : memref<64x36xbf16, #tpu.memory_space<vmem>>, vector<64x4xbf16>
    tpu.vector_store %arg5[%c0_26, %c20], %22 {strides = array<i32>} : memref<64x36xbf16, #tpu.memory_space<vmem>>, vector<64x4xbf16>,
    %c0_27 = arith.constant 0 : index
    %c1_28 = arith.constant 1 : index
    %c0_29 = arith.constant 0 : index
    %c0_30 = arith.constant 0 : index
    %24 = vector.load %arg1[%c0_27, %c1_28, %c0_29, %c0_30] : memref<4x9x9x4xbf16, #tpu.memory_space<vmem>>, vector<1x8x8x4xbf16>
    %25 = vector.shape_cast %24 : vector<1x8x8x4xbf16> to vector<8x8x4xbf16>
    %26 = vector.shape_cast %25 : vector<8x8x4xbf16> to vector<64x4xbf16>
    %c0_31 = arith.constant 0 : index
    %c24 = arith.constant 24 : index
    %27 = vector.load %arg5[%c0_31, %c24] : memref<64x36xbf16, #tpu.memory_space<vmem>>, vector<64x4xbf16>
    tpu.vector_store %arg5[%c0_31, %c24], %26 {strides = array<i32>} : memref<64x36xbf16, #tpu.memory_space<vmem>>, vector<64x4xbf16>,
    %c1_32 = arith.constant 1 : index
    %c1_33 = arith.constant 1 : index
    %c0_34 = arith.constant 0 : index
    %c0_35 = arith.constant 0 : index
    %28 = vector.load %arg1[%c1_32, %c1_33, %c0_34, %c0_35] : memref<4x9x9x4xbf16, #tpu.memory_space<vmem>>, vector<1x8x8x4xbf16>
    %29 = vector.shape_cast %28 : vector<1x8x8x4xbf16> to vector<8x8x4xbf16>
    %30 = vector.shape_cast %29 : vector<8x8x4xbf16> to vector<64x4xbf16>
    %c0_36 = arith.constant 0 : index
    %c28 = arith.constant 28 : index
    %31 = vector.load %arg5[%c0_36, %c28] : memref<64x36xbf16, #tpu.memory_space<vmem>>, vector<64x4xbf16>
    tpu.vector_store %arg5[%c0_36, %c28], %30 {strides = array<i32>} : memref<64x36xbf16, #tpu.memory_space<vmem>>, vector<64x4xbf16>,
    %c0_37 = arith.constant 0 : index
    %c1_38 = arith.constant 1 : index
    %c1_39 = arith.constant 1 : index
    %c0_40 = arith.constant 0 : index
    %32 = vector.load %arg1[%c0_37, %c1_38, %c1_39, %c0_40] : memref<4x9x9x4xbf16, #tpu.memory_space<vmem>>, vector<1x8x8x4xbf16>
    %33 = vector.shape_cast %32 : vector<1x8x8x4xbf16> to vector<8x8x4xbf16>
    %34 = vector.shape_cast %33 : vector<8x8x4xbf16> to vector<64x4xbf16>
    %c0_41 = arith.constant 0 : index
    %c32 = arith.constant 32 : index
    %35 = vector.load %arg5[%c0_41, %c32] : memref<64x36xbf16, #tpu.memory_space<vmem>>, vector<64x4xbf16>
    tpu.vector_store %arg5[%c0_41, %c32], %34 {strides = array<i32>} : memref<64x36xbf16, #tpu.memory_space<vmem>>, vector<64x4xbf16>,
    %c0_42 = arith.constant 0 : index
    %c0_43 = arith.constant 0 : index
    %36 = vector.load %arg5[%c0_42, %c0_43] : memref<64x36xbf16, #tpu.memory_space<vmem>>, vector<64x36xbf16>
    %c0_44 = arith.constant 0 : index
    %c0_45 = arith.constant 0 : index
    %37 = vector.load %arg2[%c0_44, %c0_45] : memref<36x8xbf16, #tpu.memory_space<vmem>>, vector<36x8xbf16>
    %cst = arith.constant dense<0.000000e+00> : vector<64x8xf32>
    %38 = tpu.matmul %36, %37, %cst {dimension_numbers = #tpu.dot_dimension_numbers<[1], [0], [0], [1], [0, 0, 1, 1], [], []>} : vector<64x36xbf16>, vector<36x8xbf16>, vector<64x8xf32> -> vector<64x8xf32>
    %39 = arith.truncf %38 : vector<64x8xf32> to vector<64x8xbf16>
    %c0_46 = arith.constant 0 : index
    %c0_47 = arith.constant 0 : index
    %40 = vector.load %arg3[%c0_46, %c0_47] : memref<64x8xbf16, #tpu.memory_space<vmem>>, vector<64x8xbf16>
    tpu.vector_store %arg3[%c0_46, %c0_47], %39 {strides = array<i32>} : memref<64x8xbf16, #tpu.memory_space<vmem>>, vector<64x8xbf16>,
    %cst_48 = arith.constant dense<0.000000e+00> : vector<8xf32>
    %41 = vector.multi_reduction <add>, %38, %cst_48 [0] : vector<64x8xf32> to vector<8xf32>
    %42 = vector.shape_cast %41 : vector<8xf32> to vector<1x8xf32>
    %cst_49 = arith.constant 1.562500e-02 : f32
    %43 = vector.broadcast %cst_49 : f32 to vector<1x8xf32>
    %44 = arith.mulf %42, %43 : vector<1x8xf32>
    %45 = vector.broadcast %44 : vector<1x8xf32> to vector<64x8xf32>
    %46 = arith.subf %38, %45 : vector<64x8xf32>
    %47 = arith.mulf %46, %46 : vector<64x8xf32>
    %cst_50 = arith.constant dense<0.000000e+00> : vector<8xf32>
    %48 = vector.multi_reduction <add>, %47, %cst_50 [0] : vector<64x8xf32> to vector<8xf32>
    %49 = vector.shape_cast %48 : vector<8xf32> to vector<1x8xf32>
    %cst_51 = arith.constant 0.000000e+00 : f32
    %50 = vector.broadcast %cst_51 : f32 to vector<6x8xf32>
    %51 = tpu.concatenate %42, %49, %50 in 0 : vector<1x8xf32>, vector<1x8xf32>, vector<6x8xf32> -> vector<8x8xf32>
    %c0_52 = arith.constant 0 : index
    %c0_53 = arith.constant 0 : index
    %c0_54 = arith.constant 0 : index
    %52 = vector.load %arg4[%c0_52, %c0_53, %c0_54] : memref<1x8x8xf32, #tpu.memory_space<vmem>>, vector<1x8x8xf32>
    %53 = vector.shape_cast %52 : vector<1x8x8xf32> to vector<8x8xf32>
    %54 = vector.shape_cast %51 : vector<8x8xf32> to vector<1x8x8xf32>
    tpu.vector_store %arg4[%c0_52, %c0_53, %c0_54], %54 {strides = array<i32>} : memref<1x8x8xf32, #tpu.memory_space<vmem>>, vector<1x8x8xf32>,
    return
  }
  func.func @transform_0(%arg0: i32) -> (i32, i32, i32, i32) {
    %c0_i32 = arith.constant 0 : i32
    %c0_i32_0 = arith.constant 0 : i32
    %c0_i32_1 = arith.constant 0 : i32
    %c0_i32_2 = arith.constant 0 : i32
    return %arg0, %c0_i32, %c0_i32_0, %c0_i32_1 : i32, i32, i32, i32
  }
  func.func @transform_1(%arg0: i32) -> (i32, i32) {
    %c0_i32 = arith.constant 0 : i32
    %c0_i32_0 = arith.constant 0 : i32
    %c0_i32_1 = arith.constant 0 : i32
    return %c0_i32, %c0_i32_0 : i32, i32
  }
  func.func @transform_2(%arg0: i32) -> (i32, i32) {
    %c0_i32 = arith.constant 0 : i32
    %c0_i32_0 = arith.constant 0 : i32
    return %arg0, %c0_i32 : i32, i32
  }
  func.func @transform_3(%arg0: i32) -> (i32, i32, i32) {
    %c0_i32 = arith.constant 0 : i32
    %c0_i32_0 = arith.constant 0 : i32
    %c0_i32_1 = arith.constant 0 : i32
    return %arg0, %c0_i32, %c0_i32_0 : i32, i32, i32
  }
}

module attributes {stable_mosaic.version = 11 : i64} {
  func.func @_bn_relu_conv_kernel(%arg0: i32, %arg1: memref<1x8x8x8xbf16, #tpu.memory_space<vmem>>, %arg2: memref<1x8xf32, #tpu.memory_space<vmem>>, %arg3: memref<1x8xf32, #tpu.memory_space<vmem>>, %arg4: memref<72x8xbf16, #tpu.memory_space<vmem>>, %arg5: memref<64x8xbf16, #tpu.memory_space<vmem>>, %arg6: memref<1x8x8xf32, #tpu.memory_space<vmem>>, %arg7: memref<10x10x8xbf16, #tpu.memory_space<vmem>>, %arg8: memref<64x72xbf16, #tpu.memory_space<vmem>>) attributes {dimension_semantics = [#tpu.dimension_semantics<parallel>], iteration_bounds = array<i64: 2>, scalar_prefetch = 0 : i64, scratch_operands = 2 : i64, tpu.core_type = #tpu.core_type<tc>, window_params = [{transform_indices = @transform_0, window_bounds = array<i64: 1, 8, 8, 8>}, {pipeline_mode = #tpu.pipeline_mode<synchronous>, transform_indices = @transform_1, window_bounds = array<i64: 1, 8>}, {pipeline_mode = #tpu.pipeline_mode<synchronous>, transform_indices = @transform_2, window_bounds = array<i64: 1, 8>}, {pipeline_mode = #tpu.pipeline_mode<synchronous>, transform_indices = @transform_3, window_bounds = array<i64: 72, 8>}, {transform_indices = @transform_4, window_bounds = array<i64: 64, 8>}, {transform_indices = @transform_5, window_bounds = array<i64: 1, 8, 8>}]} {
    %c0 = arith.constant 0 : index
    %c0_0 = arith.constant 0 : index
    %c0_1 = arith.constant 0 : index
    %c0_2 = arith.constant 0 : index
    %0 = vector.load %arg1[%c0, %c0_0, %c0_1, %c0_2] : memref<1x8x8x8xbf16, #tpu.memory_space<vmem>>, vector<1x8x8x8xbf16>
    %1 = vector.shape_cast %0 : vector<1x8x8x8xbf16> to vector<8x8x8xbf16>
    %2 = arith.extf %1 : vector<8x8x8xbf16> to vector<8x8x8xf32>
    %c0_3 = arith.constant 0 : index
    %c0_4 = arith.constant 0 : index
    %3 = vector.load %arg2[%c0_3, %c0_4] : memref<1x8xf32, #tpu.memory_space<vmem>>, vector<1x8xf32>
    %4 = vector.shape_cast %3 : vector<1x8xf32> to vector<1x1x8xf32>
    %5 = vector.broadcast %4 : vector<1x1x8xf32> to vector<8x8x8xf32>
    %6 = arith.mulf %2, %5 : vector<8x8x8xf32>
    %c0_5 = arith.constant 0 : index
    %c0_6 = arith.constant 0 : index
    %7 = vector.load %arg3[%c0_5, %c0_6] : memref<1x8xf32, #tpu.memory_space<vmem>>, vector<1x8xf32>
    %8 = vector.shape_cast %7 : vector<1x8xf32> to vector<1x1x8xf32>
    %9 = vector.broadcast %8 : vector<1x1x8xf32> to vector<8x8x8xf32>
    %10 = arith.addf %6, %9 : vector<8x8x8xf32>
    %cst = arith.constant 0.000000e+00 : f32
    %11 = vector.broadcast %cst : f32 to vector<8x8x8xf32>
    %12 = arith.maximumf %10, %11 : vector<8x8x8xf32>
    %cst_7 = arith.constant 0.000000e+00 : bf16
    %13 = vector.broadcast %cst_7 : bf16 to vector<10x10x8xbf16>
    %c0_8 = arith.constant 0 : index
    %c0_9 = arith.constant 0 : index
    %c0_10 = arith.constant 0 : index
    %14 = vector.load %arg7[%c0_8, %c0_9, %c0_10] : memref<10x10x8xbf16, #tpu.memory_space<vmem>>, vector<10x10x8xbf16>
    tpu.vector_store %arg7[%c0_8, %c0_9, %c0_10], %13 {strides = array<i32>} : memref<10x10x8xbf16, #tpu.memory_space<vmem>>, vector<10x10x8xbf16>,
    %15 = arith.truncf %12 : vector<8x8x8xf32> to vector<8x8x8xbf16>
    %c1 = arith.constant 1 : index
    %c1_11 = arith.constant 1 : index
    %c0_12 = arith.constant 0 : index
    %16 = vector.load %arg7[%c1, %c1_11, %c0_12] : memref<10x10x8xbf16, #tpu.memory_space<vmem>>, vector<8x8x8xbf16>
    tpu.vector_store %arg7[%c1, %c1_11, %c0_12], %15 {strides = array<i32>} : memref<10x10x8xbf16, #tpu.memory_space<vmem>>, vector<8x8x8xbf16>,
    %c0_13 = arith.constant 0 : index
    %c0_14 = arith.constant 0 : index
    %c0_15 = arith.constant 0 : index
    %17 = vector.load %arg7[%c0_13, %c0_14, %c0_15] : memref<10x10x8xbf16, #tpu.memory_space<vmem>>, vector<8x8x8xbf16>
    %18 = vector.shape_cast %17 : vector<8x8x8xbf16> to vector<64x8xbf16>
    %c0_16 = arith.constant 0 : index
    %c0_17 = arith.constant 0 : index
    %19 = vector.load %arg8[%c0_16, %c0_17] : memref<64x72xbf16, #tpu.memory_space<vmem>>, vector<64x8xbf16>
    tpu.vector_store %arg8[%c0_16, %c0_17], %18 {strides = array<i32>} : memref<64x72xbf16, #tpu.memory_space<vmem>>, vector<64x8xbf16>,
    %c0_18 = arith.constant 0 : index
    %c1_19 = arith.constant 1 : index
    %c0_20 = arith.constant 0 : index
    %20 = vector.load %arg7[%c0_18, %c1_19, %c0_20] : memref<10x10x8xbf16, #tpu.memory_space<vmem>>, vector<8x8x8xbf16>
    %21 = vector.shape_cast %20 : vector<8x8x8xbf16> to vector<64x8xbf16>
    %c0_21 = arith.constant 0 : index
    %c8 = arith.constant 8 : index
    %22 = vector.load %arg8[%c0_21, %c8] : memref<64x72xbf16, #tpu.memory_space<vmem>>, vector<64x8xbf16>
    tpu.vector_store %arg8[%c0_21, %c8], %21 {strides = array<i32>} : memref<64x72xbf16, #tpu.memory_space<vmem>>, vector<64x8xbf16>,
    %c0_22 = arith.constant 0 : index
    %c2 = arith.constant 2 : index
    %c0_23 = arith.constant 0 : index
    %23 = vector.load %arg7[%c0_22, %c2, %c0_23] : memref<10x10x8xbf16, #tpu.memory_space<vmem>>, vector<8x8x8xbf16>
    %24 = vector.shape_cast %23 : vector<8x8x8xbf16> to vector<64x8xbf16>
    %c0_24 = arith.constant 0 : index
    %c16 = arith.constant 16 : index
    %25 = vector.load %arg8[%c0_24, %c16] : memref<64x72xbf16, #tpu.memory_space<vmem>>, vector<64x8xbf16>
    tpu.vector_store %arg8[%c0_24, %c16], %24 {strides = array<i32>} : memref<64x72xbf16, #tpu.memory_space<vmem>>, vector<64x8xbf16>,
    %c1_25 = arith.constant 1 : index
    %c0_26 = arith.constant 0 : index
    %c0_27 = arith.constant 0 : index
    %26 = vector.load %arg7[%c1_25, %c0_26, %c0_27] : memref<10x10x8xbf16, #tpu.memory_space<vmem>>, vector<8x8x8xbf16>
    %27 = vector.shape_cast %26 : vector<8x8x8xbf16> to vector<64x8xbf16>
    %c0_28 = arith.constant 0 : index
    %c24 = arith.constant 24 : index
    %28 = vector.load %arg8[%c0_28, %c24] : memref<64x72xbf16, #tpu.memory_space<vmem>>, vector<64x8xbf16>
    tpu.vector_store %arg8[%c0_28, %c24], %27 {strides = array<i32>} : memref<64x72xbf16, #tpu.memory_space<vmem>>, vector<64x8xbf16>,
    %c1_29 = arith.constant 1 : index
    %c1_30 = arith.constant 1 : index
    %c0_31 = arith.constant 0 : index
    %29 = vector.load %arg7[%c1_29, %c1_30, %c0_31] : memref<10x10x8xbf16, #tpu.memory_space<vmem>>, vector<8x8x8xbf16>
    %30 = vector.shape_cast %29 : vector<8x8x8xbf16> to vector<64x8xbf16>
    %c0_32 = arith.constant 0 : index
    %c32 = arith.constant 32 : index
    %31 = vector.load %arg8[%c0_32, %c32] : memref<64x72xbf16, #tpu.memory_space<vmem>>, vector<64x8xbf16>
    tpu.vector_store %arg8[%c0_32, %c32], %30 {strides = array<i32>} : memref<64x72xbf16, #tpu.memory_space<vmem>>, vector<64x8xbf16>,
    %c1_33 = arith.constant 1 : index
    %c2_34 = arith.constant 2 : index
    %c0_35 = arith.constant 0 : index
    %32 = vector.load %arg7[%c1_33, %c2_34, %c0_35] : memref<10x10x8xbf16, #tpu.memory_space<vmem>>, vector<8x8x8xbf16>
    %33 = vector.shape_cast %32 : vector<8x8x8xbf16> to vector<64x8xbf16>
    %c0_36 = arith.constant 0 : index
    %c40 = arith.constant 40 : index
    %34 = vector.load %arg8[%c0_36, %c40] : memref<64x72xbf16, #tpu.memory_space<vmem>>, vector<64x8xbf16>
    tpu.vector_store %arg8[%c0_36, %c40], %33 {strides = array<i32>} : memref<64x72xbf16, #tpu.memory_space<vmem>>, vector<64x8xbf16>,
    %c2_37 = arith.constant 2 : index
    %c0_38 = arith.constant 0 : index
    %c0_39 = arith.constant 0 : index
    %35 = vector.load %arg7[%c2_37, %c0_38, %c0_39] : memref<10x10x8xbf16, #tpu.memory_space<vmem>>, vector<8x8x8xbf16>
    %36 = vector.shape_cast %35 : vector<8x8x8xbf16> to vector<64x8xbf16>
    %c0_40 = arith.constant 0 : index
    %c48 = arith.constant 48 : index
    %37 = vector.load %arg8[%c0_40, %c48] : memref<64x72xbf16, #tpu.memory_space<vmem>>, vector<64x8xbf16>
    tpu.vector_store %arg8[%c0_40, %c48], %36 {strides = array<i32>} : memref<64x72xbf16, #tpu.memory_space<vmem>>, vector<64x8xbf16>,
    %c2_41 = arith.constant 2 : index
    %c1_42 = arith.constant 1 : index
    %c0_43 = arith.constant 0 : index
    %38 = vector.load %arg7[%c2_41, %c1_42, %c0_43] : memref<10x10x8xbf16, #tpu.memory_space<vmem>>, vector<8x8x8xbf16>
    %39 = vector.shape_cast %38 : vector<8x8x8xbf16> to vector<64x8xbf16>
    %c0_44 = arith.constant 0 : index
    %c56 = arith.constant 56 : index
    %40 = vector.load %arg8[%c0_44, %c56] : memref<64x72xbf16, #tpu.memory_space<vmem>>, vector<64x8xbf16>
    tpu.vector_store %arg8[%c0_44, %c56], %39 {strides = array<i32>} : memref<64x72xbf16, #tpu.memory_space<vmem>>, vector<64x8xbf16>,
    %c2_45 = arith.constant 2 : index
    %c2_46 = arith.constant 2 : index
    %c0_47 = arith.constant 0 : index
    %41 = vector.load %arg7[%c2_45, %c2_46, %c0_47] : memref<10x10x8xbf16, #tpu.memory_space<vmem>>, vector<8x8x8xbf16>
    %42 = vector.shape_cast %41 : vector<8x8x8xbf16> to vector<64x8xbf16>
    %c0_48 = arith.constant 0 : index
    %c64 = arith.constant 64 : index
    %43 = vector.load %arg8[%c0_48, %c64] : memref<64x72xbf16, #tpu.memory_space<vmem>>, vector<64x8xbf16>
    tpu.vector_store %arg8[%c0_48, %c64], %42 {strides = array<i32>} : memref<64x72xbf16, #tpu.memory_space<vmem>>, vector<64x8xbf16>,
    %c0_49 = arith.constant 0 : index
    %c0_50 = arith.constant 0 : index
    %44 = vector.load %arg8[%c0_49, %c0_50] : memref<64x72xbf16, #tpu.memory_space<vmem>>, vector<64x72xbf16>
    %c0_51 = arith.constant 0 : index
    %c0_52 = arith.constant 0 : index
    %45 = vector.load %arg4[%c0_51, %c0_52] : memref<72x8xbf16, #tpu.memory_space<vmem>>, vector<72x8xbf16>
    %cst_53 = arith.constant dense<0.000000e+00> : vector<64x8xf32>
    %46 = tpu.matmul %44, %45, %cst_53 {dimension_numbers = #tpu.dot_dimension_numbers<[1], [0], [0], [1], [0, 0, 1, 1], [], []>} : vector<64x72xbf16>, vector<72x8xbf16>, vector<64x8xf32> -> vector<64x8xf32>
    %47 = arith.truncf %46 : vector<64x8xf32> to vector<64x8xbf16>
    %c0_54 = arith.constant 0 : index
    %c0_55 = arith.constant 0 : index
    %48 = vector.load %arg5[%c0_54, %c0_55] : memref<64x8xbf16, #tpu.memory_space<vmem>>, vector<64x8xbf16>
    tpu.vector_store %arg5[%c0_54, %c0_55], %47 {strides = array<i32>} : memref<64x8xbf16, #tpu.memory_space<vmem>>, vector<64x8xbf16>,
    %cst_56 = arith.constant dense<0.000000e+00> : vector<8xf32>
    %49 = vector.multi_reduction <add>, %46, %cst_56 [0] : vector<64x8xf32> to vector<8xf32>
    %50 = vector.shape_cast %49 : vector<8xf32> to vector<1x8xf32>
    %cst_57 = arith.constant 1.562500e-02 : f32
    %51 = vector.broadcast %cst_57 : f32 to vector<1x8xf32>
    %52 = arith.mulf %50, %51 : vector<1x8xf32>
    %53 = vector.broadcast %52 : vector<1x8xf32> to vector<64x8xf32>
    %54 = arith.subf %46, %53 : vector<64x8xf32>
    %55 = arith.mulf %54, %54 : vector<64x8xf32>
    %cst_58 = arith.constant dense<0.000000e+00> : vector<8xf32>
    %56 = vector.multi_reduction <add>, %55, %cst_58 [0] : vector<64x8xf32> to vector<8xf32>
    %57 = vector.shape_cast %56 : vector<8xf32> to vector<1x8xf32>
    %cst_59 = arith.constant 0.000000e+00 : f32
    %58 = vector.broadcast %cst_59 : f32 to vector<6x8xf32>
    %59 = tpu.concatenate %50, %57, %58 in 0 : vector<1x8xf32>, vector<1x8xf32>, vector<6x8xf32> -> vector<8x8xf32>
    %c0_60 = arith.constant 0 : index
    %c0_61 = arith.constant 0 : index
    %c0_62 = arith.constant 0 : index
    %60 = vector.load %arg6[%c0_60, %c0_61, %c0_62] : memref<1x8x8xf32, #tpu.memory_space<vmem>>, vector<1x8x8xf32>
    %61 = vector.shape_cast %60 : vector<1x8x8xf32> to vector<8x8xf32>
    %62 = vector.shape_cast %59 : vector<8x8xf32> to vector<1x8x8xf32>
    tpu.vector_store %arg6[%c0_60, %c0_61, %c0_62], %62 {strides = array<i32>} : memref<1x8x8xf32, #tpu.memory_space<vmem>>, vector<1x8x8xf32>,
    return
  }
  func.func @transform_0(%arg0: i32) -> (i32, i32, i32, i32) {
    %c0_i32 = arith.constant 0 : i32
    %c0_i32_0 = arith.constant 0 : i32
    %c0_i32_1 = arith.constant 0 : i32
    %c0_i32_2 = arith.constant 0 : i32
    return %arg0, %c0_i32, %c0_i32_0, %c0_i32_1 : i32, i32, i32, i32
  }
  func.func @transform_1(%arg0: i32) -> (i32, i32) {
    %c0_i32 = arith.constant 0 : i32
    %c0_i32_0 = arith.constant 0 : i32
    %c0_i32_1 = arith.constant 0 : i32
    return %c0_i32, %c0_i32_0 : i32, i32
  }
  func.func @transform_2(%arg0: i32) -> (i32, i32) {
    %c0_i32 = arith.constant 0 : i32
    %c0_i32_0 = arith.constant 0 : i32
    %c0_i32_1 = arith.constant 0 : i32
    return %c0_i32, %c0_i32_0 : i32, i32
  }
  func.func @transform_3(%arg0: i32) -> (i32, i32) {
    %c0_i32 = arith.constant 0 : i32
    %c0_i32_0 = arith.constant 0 : i32
    %c0_i32_1 = arith.constant 0 : i32
    return %c0_i32, %c0_i32_0 : i32, i32
  }
  func.func @transform_4(%arg0: i32) -> (i32, i32) {
    %c0_i32 = arith.constant 0 : i32
    %c0_i32_0 = arith.constant 0 : i32
    return %arg0, %c0_i32 : i32, i32
  }
  func.func @transform_5(%arg0: i32) -> (i32, i32, i32) {
    %c0_i32 = arith.constant 0 : i32
    %c0_i32_0 = arith.constant 0 : i32
    %c0_i32_1 = arith.constant 0 : i32
    return %arg0, %c0_i32, %c0_i32_0 : i32, i32, i32
  }
}

module attributes {stable_mosaic.version = 11 : i64} {
  func.func @_conv_pack_kernel(%arg0: i32, %arg1: memref<4x9x9x4xbf16, #tpu.memory_space<vmem>>, %arg2: memref<4x8xbf16, #tpu.memory_space<vmem>>, %arg3: memref<64x8xbf16, #tpu.memory_space<vmem>>, %arg4: memref<1x8x8xf32, #tpu.memory_space<vmem>>, %arg5: memref<64x4xbf16, #tpu.memory_space<vmem>>) attributes {dimension_semantics = [#tpu.dimension_semantics<parallel>], iteration_bounds = array<i64: 2>, scalar_prefetch = 0 : i64, scratch_operands = 1 : i64, tpu.core_type = #tpu.core_type<tc>, window_params = [{transform_indices = @transform_0, window_bounds = array<i64: 4, 9, 9, 4>}, {pipeline_mode = #tpu.pipeline_mode<synchronous>, transform_indices = @transform_1, window_bounds = array<i64: 4, 8>}, {transform_indices = @transform_2, window_bounds = array<i64: 64, 8>}, {transform_indices = @transform_3, window_bounds = array<i64: 1, 8, 8>}]} {
    %c3 = arith.constant 3 : index
    %c0 = arith.constant 0 : index
    %c0_0 = arith.constant 0 : index
    %c0_1 = arith.constant 0 : index
    %0 = vector.load %arg1[%c3, %c0, %c0_0, %c0_1] : memref<4x9x9x4xbf16, #tpu.memory_space<vmem>>, vector<1x8x8x4xbf16>
    %1 = vector.shape_cast %0 : vector<1x8x8x4xbf16> to vector<8x8x4xbf16>
    %2 = vector.shape_cast %1 : vector<8x8x4xbf16> to vector<64x4xbf16>
    %c0_2 = arith.constant 0 : index
    %c0_3 = arith.constant 0 : index
    %3 = vector.load %arg5[%c0_2, %c0_3] : memref<64x4xbf16, #tpu.memory_space<vmem>>, vector<64x4xbf16>
    tpu.vector_store %arg5[%c0_2, %c0_3], %2 {strides = array<i32>} : memref<64x4xbf16, #tpu.memory_space<vmem>>, vector<64x4xbf16>,
    %c0_4 = arith.constant 0 : index
    %c0_5 = arith.constant 0 : index
    %4 = vector.load %arg5[%c0_4, %c0_5] : memref<64x4xbf16, #tpu.memory_space<vmem>>, vector<64x4xbf16>
    %c0_6 = arith.constant 0 : index
    %c0_7 = arith.constant 0 : index
    %5 = vector.load %arg2[%c0_6, %c0_7] : memref<4x8xbf16, #tpu.memory_space<vmem>>, vector<4x8xbf16>
    %cst = arith.constant dense<0.000000e+00> : vector<64x8xf32>
    %6 = tpu.matmul %4, %5, %cst {dimension_numbers = #tpu.dot_dimension_numbers<[1], [0], [0], [1], [0, 0, 1, 1], [], []>} : vector<64x4xbf16>, vector<4x8xbf16>, vector<64x8xf32> -> vector<64x8xf32>
    %7 = arith.truncf %6 : vector<64x8xf32> to vector<64x8xbf16>
    %c0_8 = arith.constant 0 : index
    %c0_9 = arith.constant 0 : index
    %8 = vector.load %arg3[%c0_8, %c0_9] : memref<64x8xbf16, #tpu.memory_space<vmem>>, vector<64x8xbf16>
    tpu.vector_store %arg3[%c0_8, %c0_9], %7 {strides = array<i32>} : memref<64x8xbf16, #tpu.memory_space<vmem>>, vector<64x8xbf16>,
    %cst_10 = arith.constant dense<0.000000e+00> : vector<8xf32>
    %9 = vector.multi_reduction <add>, %6, %cst_10 [0] : vector<64x8xf32> to vector<8xf32>
    %10 = vector.shape_cast %9 : vector<8xf32> to vector<1x8xf32>
    %cst_11 = arith.constant 1.562500e-02 : f32
    %11 = vector.broadcast %cst_11 : f32 to vector<1x8xf32>
    %12 = arith.mulf %10, %11 : vector<1x8xf32>
    %13 = vector.broadcast %12 : vector<1x8xf32> to vector<64x8xf32>
    %14 = arith.subf %6, %13 : vector<64x8xf32>
    %15 = arith.mulf %14, %14 : vector<64x8xf32>
    %cst_12 = arith.constant dense<0.000000e+00> : vector<8xf32>
    %16 = vector.multi_reduction <add>, %15, %cst_12 [0] : vector<64x8xf32> to vector<8xf32>
    %17 = vector.shape_cast %16 : vector<8xf32> to vector<1x8xf32>
    %cst_13 = arith.constant 0.000000e+00 : f32
    %18 = vector.broadcast %cst_13 : f32 to vector<6x8xf32>
    %19 = tpu.concatenate %10, %17, %18 in 0 : vector<1x8xf32>, vector<1x8xf32>, vector<6x8xf32> -> vector<8x8xf32>
    %c0_14 = arith.constant 0 : index
    %c0_15 = arith.constant 0 : index
    %c0_16 = arith.constant 0 : index
    %20 = vector.load %arg4[%c0_14, %c0_15, %c0_16] : memref<1x8x8xf32, #tpu.memory_space<vmem>>, vector<1x8x8xf32>
    %21 = vector.shape_cast %20 : vector<1x8x8xf32> to vector<8x8xf32>
    %22 = vector.shape_cast %19 : vector<8x8xf32> to vector<1x8x8xf32>
    tpu.vector_store %arg4[%c0_14, %c0_15, %c0_16], %22 {strides = array<i32>} : memref<1x8x8xf32, #tpu.memory_space<vmem>>, vector<1x8x8xf32>,
    return
  }
  func.func @transform_0(%arg0: i32) -> (i32, i32, i32, i32) {
    %c0_i32 = arith.constant 0 : i32
    %c0_i32_0 = arith.constant 0 : i32
    %c0_i32_1 = arith.constant 0 : i32
    %c0_i32_2 = arith.constant 0 : i32
    return %arg0, %c0_i32, %c0_i32_0, %c0_i32_1 : i32, i32, i32, i32
  }
  func.func @transform_1(%arg0: i32) -> (i32, i32) {
    %c0_i32 = arith.constant 0 : i32
    %c0_i32_0 = arith.constant 0 : i32
    %c0_i32_1 = arith.constant 0 : i32
    return %c0_i32, %c0_i32_0 : i32, i32
  }
  func.func @transform_2(%arg0: i32) -> (i32, i32) {
    %c0_i32 = arith.constant 0 : i32
    %c0_i32_0 = arith.constant 0 : i32
    return %arg0, %c0_i32 : i32, i32
  }
  func.func @transform_3(%arg0: i32) -> (i32, i32, i32) {
    %c0_i32 = arith.constant 0 : i32
    %c0_i32_0 = arith.constant 0 : i32
    %c0_i32_1 = arith.constant 0 : i32
    return %arg0, %c0_i32, %c0_i32_0 : i32, i32, i32
  }
}

module attributes {stable_mosaic.version = 11 : i64} {
  func.func @_bn_add_relu_kernel(%arg0: i32, %arg1: memref<8x128xbf16, #tpu.memory_space<vmem>>, %arg2: memref<1x128xf32, #tpu.memory_space<vmem>>, %arg3: memref<1x128xf32, #tpu.memory_space<vmem>>, %arg4: memref<8x128xbf16, #tpu.memory_space<vmem>>, %arg5: memref<1x128xf32, #tpu.memory_space<vmem>>, %arg6: memref<1x128xf32, #tpu.memory_space<vmem>>, %arg7: memref<8x128xf32, #tpu.memory_space<vmem>>) attributes {dimension_semantics = [#tpu.dimension_semantics<parallel>], iteration_bounds = array<i64: 1>, scalar_prefetch = 0 : i64, scratch_operands = 0 : i64, tpu.core_type = #tpu.core_type<tc>, window_params = [{transform_indices = @transform_0, window_bounds = array<i64: 8, 128>}, {pipeline_mode = #tpu.pipeline_mode<synchronous>, transform_indices = @transform_1, window_bounds = array<i64: 1, 128>}, {pipeline_mode = #tpu.pipeline_mode<synchronous>, transform_indices = @transform_2, window_bounds = array<i64: 1, 128>}, {transform_indices = @transform_3, window_bounds = array<i64: 8, 128>}, {pipeline_mode = #tpu.pipeline_mode<synchronous>, transform_indices = @transform_4, window_bounds = array<i64: 1, 128>}, {pipeline_mode = #tpu.pipeline_mode<synchronous>, transform_indices = @transform_5, window_bounds = array<i64: 1, 128>}, {transform_indices = @transform_6, window_bounds = array<i64: 8, 128>}]} {
    %c0 = arith.constant 0 : index
    %c0_0 = arith.constant 0 : index
    %0 = vector.load %arg1[%c0, %c0_0] : memref<8x128xbf16, #tpu.memory_space<vmem>>, vector<8x128xbf16>
    %1 = arith.extf %0 : vector<8x128xbf16> to vector<8x128xf32>
    %c0_1 = arith.constant 0 : index
    %c0_2 = arith.constant 0 : index
    %2 = vector.load %arg2[%c0_1, %c0_2] : memref<1x128xf32, #tpu.memory_space<vmem>>, vector<1x128xf32>
    %3 = vector.broadcast %2 : vector<1x128xf32> to vector<8x128xf32>
    %4 = arith.mulf %1, %3 : vector<8x128xf32>
    %c0_3 = arith.constant 0 : index
    %c0_4 = arith.constant 0 : index
    %5 = vector.load %arg3[%c0_3, %c0_4] : memref<1x128xf32, #tpu.memory_space<vmem>>, vector<1x128xf32>
    %6 = vector.broadcast %5 : vector<1x128xf32> to vector<8x128xf32>
    %7 = arith.addf %4, %6 : vector<8x128xf32>
    %c0_5 = arith.constant 0 : index
    %c0_6 = arith.constant 0 : index
    %8 = vector.load %arg4[%c0_5, %c0_6] : memref<8x128xbf16, #tpu.memory_space<vmem>>, vector<8x128xbf16>
    %9 = arith.extf %8 : vector<8x128xbf16> to vector<8x128xf32>
    %c0_7 = arith.constant 0 : index
    %c0_8 = arith.constant 0 : index
    %10 = vector.load %arg5[%c0_7, %c0_8] : memref<1x128xf32, #tpu.memory_space<vmem>>, vector<1x128xf32>
    %11 = vector.broadcast %10 : vector<1x128xf32> to vector<8x128xf32>
    %12 = arith.mulf %9, %11 : vector<8x128xf32>
    %13 = arith.addf %7, %12 : vector<8x128xf32>
    %c0_9 = arith.constant 0 : index
    %c0_10 = arith.constant 0 : index
    %14 = vector.load %arg6[%c0_9, %c0_10] : memref<1x128xf32, #tpu.memory_space<vmem>>, vector<1x128xf32>
    %15 = vector.broadcast %14 : vector<1x128xf32> to vector<8x128xf32>
    %16 = arith.addf %13, %15 : vector<8x128xf32>
    %cst = arith.constant 0.000000e+00 : f32
    %17 = vector.broadcast %cst : f32 to vector<8x128xf32>
    %18 = arith.maximumf %16, %17 : vector<8x128xf32>
    %c0_11 = arith.constant 0 : index
    %c0_12 = arith.constant 0 : index
    %19 = vector.load %arg7[%c0_11, %c0_12] : memref<8x128xf32, #tpu.memory_space<vmem>>, vector<8x128xf32>
    tpu.vector_store %arg7[%c0_11, %c0_12], %18 {strides = array<i32>} : memref<8x128xf32, #tpu.memory_space<vmem>>, vector<8x128xf32>,
    return
  }
  func.func @transform_0(%arg0: i32) -> (i32, i32) {
    %c0_i32 = arith.constant 0 : i32
    %c0_i32_0 = arith.constant 0 : i32
    return %arg0, %c0_i32 : i32, i32
  }
  func.func @transform_1(%arg0: i32) -> (i32, i32) {
    %c0_i32 = arith.constant 0 : i32
    %c0_i32_0 = arith.constant 0 : i32
    %c0_i32_1 = arith.constant 0 : i32
    return %c0_i32, %c0_i32_0 : i32, i32
  }
  func.func @transform_2(%arg0: i32) -> (i32, i32) {
    %c0_i32 = arith.constant 0 : i32
    %c0_i32_0 = arith.constant 0 : i32
    %c0_i32_1 = arith.constant 0 : i32
    return %c0_i32, %c0_i32_0 : i32, i32
  }
  func.func @transform_3(%arg0: i32) -> (i32, i32) {
    %c0_i32 = arith.constant 0 : i32
    %c0_i32_0 = arith.constant 0 : i32
    return %arg0, %c0_i32 : i32, i32
  }
  func.func @transform_4(%arg0: i32) -> (i32, i32) {
    %c0_i32 = arith.constant 0 : i32
    %c0_i32_0 = arith.constant 0 : i32
    %c0_i32_1 = arith.constant 0 : i32
    return %c0_i32, %c0_i32_0 : i32, i32
  }
  func.func @transform_5(%arg0: i32) -> (i32, i32) {
    %c0_i32 = arith.constant 0 : i32
    %c0_i32_0 = arith.constant 0 : i32
    %c0_i32_1 = arith.constant 0 : i32
    return %c0_i32, %c0_i32_0 : i32, i32
  }
  func.func @transform_6(%arg0: i32) -> (i32, i32) {
    %c0_i32 = arith.constant 0 : i32
    %c0_i32_0 = arith.constant 0 : i32
    return %arg0, %c0_i32 : i32, i32
  }
}

</mosaic_0001>

<llo_original>
// kernel: tile.23
$region0: #{tile.23}
  #allocation0 [shape = 's32[1]{0}', space=sflag, size = 0x4, scoped, tag = 'scoped memory for tile.23']
  %s0 = inlined_call_operand.vmem [shape: f32[8], index: 0, kind: input, shape index: {}]
  %s1 = inlined_call_operand.vmem [shape: f32[16,8], index: 1, kind: output, shape index: {}]
  // Predicated region
  $region2: #{tile.23} parent=0 // pred_check
    _
  $region3: #{tile.23} parent=0 // pred_check_branch
    %3 = sbr.rel (0) target = $region5
  $region4: #{tile.23} parent=0 // pred_region
    _
  $region5: #{tile.23} parent=0 // pred_fallthru
    _
  %v4 = vld [vmem:[%s0] ss:$0 sm:$0xff]
  %5 = vst [vmem:[%s1] sm:$0xff] %v4
  %s6 = scalar_lea.vmem %s1, 8
  %7 = vst [vmem:[%s6] sm:$0xff] %v4

// kernel: tile.24
$region0: #{tile.24}
  %s0 = inlined_call_operand.vmem [shape: f32[16,8], index: 0, kind: input, shape index: {}]
  %s1 = inlined_call_operand.vmem [shape: f32[1,128], index: 1, kind: output, shape index: {}]
  $region1: #{tile.24} parent=0
    #allocation0 [shape = 'u8[4096]{0}', space=vmem, size = 0x1000, scoped, tag = 'scoped mem for output reshape']
    %v2 = vld [vmem:[%s0] sm:$0x1]
    %vm3 = vcmask 64512
    %4 = vst.msk [vmem:[#allocation0] sm:$0x1] %vm3, %v2
    %s5 = scalar_lea.vmem %s0, 15
    %v6 = vld [vmem:[%s5] sm:$0x1]
    %7 = vrot.lane.b32.xlu0 %v6, 120
    %v8 = vpop.permute.xlu0 %7
    %vm9 = vcmask 1048512
    %10 = vst.msk [vmem:[#allocation0] sm:$0x1] %vm9, %v8
    %s11 = scalar_lea.vmem %s0, 14
    %v12 = vld [vmem:[%s11] sm:$0x1]
    %13 = vrot.lane.b32.xlu0 %v12, 112
    %v14 = vpop.permute.xlu0 %13
    %vm15 = vcmask 982912
    %16 = vst.msk [vmem:[#allocation0] sm:$0x1] %vm15, %v14
    %s17 = scalar_lea.vmem %s0, 13
    %v18 = vld [vmem:[%s17] sm:$0x1]
    %19 = vrot.lane.b32.xlu0 %v18, 104
    %v20 = vpop.permute.xlu0 %19
    %vm21 = vcmask 917312
    %22 = vst.msk [vmem:[#allocation0] sm:$0x1] %vm21, %v20
    %s23 = scalar_lea.vmem %s0, 12
    %v24 = vld [vmem:[%s23] sm:$0x1]
    %25 = vrot.lane.b32.xlu0 %v24, 96
    %v26 = vpop.permute.xlu0 %25
    %vm27 = vcmask 851712
    %28 = vst.msk [vmem:[#allocation0] sm:$0x1] %vm27, %v26
    %s29 = scalar_lea.vmem %s0, 11
    %v30 = vld [vmem:[%s29] sm:$0x1]
    %31 = vrot.lane.b32.xlu0 %v30, 88
    %v32 = vpop.permute.xlu0 %31
    %vm33 = vcmask 786112
    %34 = vst.msk [vmem:[#allocation0] sm:$0x1] %vm33, %v32
    %s35 = scalar_lea.vmem %s0, 10
    %v36 = vld [vmem:[%s35] sm:$0x1]
    %37 = vrot.lane.b32.xlu0 %v36, 80
    %v38 = vpop.permute.xlu0 %37
    %vm39 = vcmask 720512
    %40 = vst.msk [vmem:[#allocation0] sm:$0x1] %vm39, %v38
    %s41 = scalar_lea.vmem %s0, 9
    %v42 = vld [vmem:[%s41] sm:$0x1]
    %43 = vrot.lane.b32.xlu0 %v42, 72
    %v44 = vpop.permute.xlu0 %43
    %vm45 = vcmask 654912
    %46 = vst.msk [vmem:[#allocation0] sm:$0x1] %vm45, %v44
    %s47 = scalar_lea.vmem %s0, 8
    %v48 = vld [vmem:[%s47] sm:$0x1]
    %49 = vrot.lane.b32.xlu0 %v48, 64
    %v50 = vpop.permute.xlu0 %49
    %vm51 = vcmask 589312
    %52 = vst.msk [vmem:[#allocation0] sm:$0x1] %vm51, %v50
    %s53 = scalar_lea.vmem %s0, 7
    %v54 = vld [vmem:[%s53] sm:$0x1]
    %55 = vrot.lane.b32.xlu0 %v54, 56
    %v56 = vpop.permute.xlu0 %55
    %vm57 = vcmask 523712
    %58 = vst.msk [vmem:[#allocation0] sm:$0x1] %vm57, %v56
    %s59 = scalar_lea.vmem %s0, 6
    %v60 = vld [vmem:[%s59] sm:$0x1]
    %61 = vrot.lane.b32.xlu0 %v60, 48
    %v62 = vpop.permute.xlu0 %61
    %vm63 = vcmask 458112
    %64 = vst.msk [vmem:[#allocation0] sm:$0x1] %vm63, %v62
    %s65 = scalar_lea.vmem %s0, 5
    %v66 = vld [vmem:[%s65] sm:$0x1]
    %67 = vrot.lane.b32.xlu0 %v66, 40
    %v68 = vpop.permute.xlu0 %67
    %vm69 = vcmask 392512
    %70 = vst.msk [vmem:[#allocation0] sm:$0x1] %vm69, %v68
    %s71 = scalar_lea.vmem %s0, 4
    %v72 = vld [vmem:[%s71] sm:$0x1]
    %73 = vrot.lane.b32.xlu0 %v72, 32
    %v74 = vpop.permute.xlu0 %73
    %vm75 = vcmask 326912
    %76 = vst.msk [vmem:[#allocation0] sm:$0x1] %vm75, %v74
    %s77 = scalar_lea.vmem %s0, 3
    %v78 = vld [vmem:[%s77] sm:$0x1]
    %79 = vrot.lane.b32.xlu0 %v78, 24
    %v80 = vpop.permute.xlu0 %79
    %vm81 = vcmask 261312
    %82 = vst.msk [vmem:[#allocation0] sm:$0x1] %vm81, %v80
    %s83 = scalar_lea.vmem %s0, 2
    %v84 = vld [vmem:[%s83] sm:$0x1]
    %85 = vrot.lane.b32.xlu0 %v84, 16
    %v86 = vpop.permute.xlu0 %85
    %vm87 = vcmask 195712
    %88 = vst.msk [vmem:[#allocation0] sm:$0x1] %vm87, %v86
    %s89 = scalar_lea.vmem %s0, 1
    %v90 = vld [vmem:[%s89] sm:$0x1]
    %91 = vrot.lane.b32.xlu0 %v90, 8
    %v92 = vpop.permute.xlu0 %91
    %vm93 = vcmask 130112
    %94 = vst.msk [vmem:[#allocation0] sm:$0x1] %vm93, %v92
    %s96 = ssub.s32 2, 1
    %v97 = vld [vmem:[#allocation0] sm:%s96]
    %s99 = ssub.s32 2, 1
    %100 = vst [vmem:[%s1] sm:%s99] %v97

// kernel: residual_block_forward.6
$region0: #{residual_block_forward.6}
  #allocation0 [shape = 'u32[]', space=smem, size = 0x4, offset = 0x4, fixed_abs, tag = 'smem constant byte address 0x4 - core index']
  #allocation1 [shape = 'u32[72,128]{1,0:T(1,128)}', space=vmem, size = 0x9000, scoped, tag = 'internal scratch']
  #allocation2 [shape = 'bf16[64,4]{1,0:T(8,128)(2,1)}', space=vmem, size = 0x4000, scoped, tag = 'scratch operand']
  %s0 = inlined_call_operand.vmem [shape: bf16[8,9,9,4], index: 0, kind: input, shape index: {}]
  %s1 = inlined_call_operand.vmem [shape: bf16[4,8], index: 1, kind: input, shape index: {}]
  %s2 = inlined_call_operand.vmem [shape: bf16[128,8], index: 2, kind: output, shape index: {0}]
  %s3 = inlined_call_operand.vmem [shape: f32[2,8,8], index: 3, kind: output, shape index: {1}]
  %4 = xla_tuple %s2, %s3
  %s5 = sld [smem:[#allocation0]]
  $region49: #{residual_block_forward.6} parent=0
    _
  %s7 = ssub.s32 1, %s5
  %s8 = scalar_select 0, %s7, %s5
  loop: start=0, step=1, limit=4
  $region2: #{residual_block_forward.6} parent=0 // loop_pre_header
    _
  $region3: #{residual_block_forward.6} parent=0 // loop_header
    %s10 = sphi 0, %s14
    %p11 = scmp.ge.s32.totalorder %s10, 4
    %s20 = sphi 0, %s22
    %s23 = sphi 0, %s20
    %s24 = sphi 0, %s23
    %s40 = sphi 0, %s24
    %s44 = sphi 0, %s44
    %s46 = sphi 0, %s44
    %s47 = sphi 0, %s46
    %s61 = sphi 0, %s47
    %s67 = sphi 0, %s69
    %s70 = sphi 0, %s67
    %s71 = sphi 0, %s70
    %s87 = sphi 0, %s71
    %s93 = sphi 0, %s95
    %s96 = sphi 0, %s93
    %s97 = sphi 0, %s96
    %s113 = sphi 0, %s97
  $region4: #{residual_block_forward.6} parent=0 // loop_header_branch
    %13 = sbr.rel (%p11) target = $region8
  $region5: #{residual_block_forward.6} parent=0 // loop_body
    %s15 = ssub.s32 %s10, 1
    %s16 = ssub.s32 %s10, 2
    %s17 = sadd.s32 %s10, 1
    %s18 = ssub.s32 %s10, %s17
    %p19 = scmp.eq.s32.totalorder %s18, 0
    %s21 = sadd.s32 %s20, 1
    %s22 = scalar_select %p19, %s20, %s21
    %p25 = pneg %p19
    %p26 = scmp.eq.s32.totalorder %s10, 1
    %p27 = por %p25, %p26
    %p28 = scmp.ne.s32.totalorder %s20, %s23
    %p29 = scmp.eq.s32.totalorder %s10, 0
    %p30 = por %p28, %p29
    %p31 = scmp.ne.s32.totalorder %s20, %s23
    %p32 = scmp.eq.s32.totalorder %s15, 1
    %p33 = por %p31, %p32
    %p34 = scmp.ne.s32.totalorder %s23, %s24
    %p35 = scmp.eq.s32.totalorder %s15, 0
    %p36 = por %p34, %p35
    %p37 = scmp.ne.s32.totalorder %s23, %s24
    %p38 = scmp.eq.s32.totalorder %s16, 1
    %p39 = por %p37, %p38
    %p41 = scmp.ne.s32.totalorder %s24, %s40
    %p42 = scmp.eq.s32.totalorder %s16, 0
    %p43 = por %p41, %p42
    %s45 = sadd.s32 %s44, 1
    %p48 = scmp.eq.s32.totalorder %s10, 1
    %p49 = scmp.ne.s32.totalorder %s44, %s46
    %p50 = scmp.eq.s32.totalorder %s10, 0
    %p51 = por %p49, %p50
    %p52 = scmp.ne.s32.totalorder %s44, %s46
    %p53 = scmp.eq.s32.totalorder %s15, 1
    %p54 = por %p52, %p53
    %p55 = scmp.ne.s32.totalorder %s46, %s47
    %p56 = scmp.eq.s32.totalorder %s15, 0
    %p57 = por %p55, %p56
    %p58 = scmp.ne.s32.totalorder %s46, %s47
    %p59 = scmp.eq.s32.totalorder %s16, 1
    %p60 = por %p58, %p59
    %p62 = scmp.ne.s32.totalorder %s47, %s61
    %p63 = scmp.eq.s32.totalorder %s16, 0
    %p64 = por %p62, %p63
    %s65 = ssub.s32 %s10, %s17
    %p66 = scmp.eq.s32.totalorder %s65, 0
    %s68 = sadd.s32 %s67, 1
    %s69 = scalar_select %p66, %s67, %s68
    %p72 = pneg %p66
    %p73 = scmp.eq.s32.totalorder %s10, 1
    %p74 = por %p72, %p73
    %p75 = scmp.ne.s32.totalorder %s67, %s70
    %p76 = scmp.eq.s32.totalorder %s10, 0
    %p77 = por %p75, %p76
    %p78 = scmp.ne.s32.totalorder %s67, %s70
    %p79 = scmp.eq.s32.totalorder %s15, 1
    %p80 = por %p78, %p79
    %p81 = scmp.ne.s32.totalorder %s70, %s71
    %p82 = scmp.eq.s32.totalorder %s15, 0
    %p83 = por %p81, %p82
    %p84 = scmp.ne.s32.totalorder %s70, %s71
    %p85 = scmp.eq.s32.totalorder %s16, 1
    %p86 = por %p84, %p85
    %p88 = scmp.ne.s32.totalorder %s71, %s87
    %p89 = scmp.eq.s32.totalorder %s16, 0
    %p90 = por %p88, %p89
    %s91 = ssub.s32 %s10, %s17
    %p92 = scmp.eq.s32.totalorder %s91, 0
    %s94 = sadd.s32 %s93, 1
    %s95 = scalar_select %p92, %s93, %s94
    %p98 = pneg %p92
    %p99 = scmp.eq.s32.totalorder %s10, 1
    %p100 = por %p98, %p99
    %p101 = scmp.ne.s32.totalorder %s93, %s96
    %p102 = scmp.eq.s32.totalorder %s10, 0
    %p103 = por %p101, %p102
    %p104 = scmp.ne.s32.totalorder %s93, %s96
    %p105 = scmp.eq.s32.totalorder %s15, 1
    %p106 = por %p104, %p105
    %p107 = scmp.ne.s32.totalorder %s96, %s97
    %p108 = scmp.eq.s32.totalorder %s15, 0
    %p109 = por %p107, %p108
    %p110 = scmp.ne.s32.totalorder %s96, %s97
    %p111 = scmp.eq.s32.totalorder %s16, 1
    %p112 = por %p110, %p111
    %p114 = scmp.ne.s32.totalorder %s97, %s113
    %p115 = scmp.eq.s32.totalorder %s16, 0
    %p116 = por %p114, %p115
    %p117 = scmp.le.s32.totalorder 1, %s10
    %p118 = scmp.lt.s32.totalorder %s10, 3
    %p119 = pnand %p117, %p118
    %p120 = pneg %p119
    // Predicated region
    $region9: #{residual_block_forward.6} parent=5 // pred_check
      _
    $region10: #{residual_block_forward.6} parent=5 // pred_check_branch
      %122 = sbr.rel (%p119) target = $region12
    $region11: #{residual_block_forward.6} parent=5 // pred_region
      %s123 = ssub.s32 %s10, 1
      // Predicated region
      $region13: #{residual_block_forward.6} parent=11 // pred_check
        %p124 = pneg %p57
      $region14: #{residual_block_forward.6} parent=11 // pred_check_branch
        %126 = sbr.rel (%p124) target = $region16
      $region15: #{residual_block_forward.6} parent=11 // pred_region
        _
      $region16: #{residual_block_forward.6} parent=11 // pred_fallthru
        _
    $region12: #{residual_block_forward.6} parent=5 // pred_fallthru
      _
    %p127 = scmp.lt.s32.totalorder %s10, 2
    // Predicated region
    $region17: #{residual_block_forward.6} parent=5 // pred_check
      %p128 = pneg %p127
    $region18: #{residual_block_forward.6} parent=5 // pred_check_branch
      %130 = sbr.rel (%p128) target = $region20
    $region19: #{residual_block_forward.6} parent=5 // pred_region
      // Predicated region
      $region21: #{residual_block_forward.6} parent=19 // pred_check
        %p131 = pneg %p30
      $region22: #{residual_block_forward.6} parent=19 // pred_check_branch
        %133 = sbr.rel (%p131) target = $region24
      $region23: #{residual_block_forward.6} parent=19 // pred_region
        %s134 = smul.u32 4, %s10
        %p135 = scmp.lt.s32.totalorder %s134, 7
        %s136 = scalar_select %p135, %s134, 7
        %s137 = smul.addr %s136, 18
        %s138 = smul.addr %s137, 4
        %s139 = scalar_lea.vmem %s0, %s138
        %s140 = smul.u32 4, %s10
      $region24: #{residual_block_forward.6} parent=19 // pred_fallthru
        _
    $region20: #{residual_block_forward.6} parent=5 // pred_fallthru
      _
    %p141 = scmp.le.s32.totalorder 1, %s10
    %p142 = scmp.lt.s32.totalorder %s10, 3
    %p143 = pnand %p141, %p142
    %p144 = pneg %p143
    // Predicated region
    $region25: #{residual_block_forward.6} parent=5 // pred_check
      _
    $region26: #{residual_block_forward.6} parent=5 // pred_check_branch
      %146 = sbr.rel (%p143) target = $region28
    $region27: #{residual_block_forward.6} parent=5 // pred_region
      %s147 = ssub.s32 %s10, 1
      %s148 = smul.u32 4, %s15
      %p149 = scmp.lt.s32.totalorder %s148, 7
      %s150 = scalar_select %p149, %s148, 7
      %s151 = smul.addr %s150, 18
      %s152 = smul.addr %s151, 4
      %s153 = scalar_lea.vmem %s0, %s152
      %p154 = pneg %p36
      %p155 = pneg %p33
      %p156 = pneg %p57
      %p157 = pneg %p54
      %p158 = pneg %p83
      %p159 = pneg %p80
      %s160 = smul.u32 8, %s15
      %p161 = scmp.lt.s32.totalorder %s160, 15
      %s162 = scalar_select %p161, %s160, 15
      %s163 = smul.addr %s162, 4
      %s164 = scalar_lea.vmem %s2, %s163
      %p165 = pneg %p109
      %p166 = pneg %p106
      %p167 = scmp.lt.s32.totalorder %s15, 1
      %s168 = scalar_select %p167, %s15, 1
      %s169 = smul.addr %s168, 8
      %s170 = scalar_lea.vmem %s3, %s169
      %s171 = smul.u32 4, %s15
      %p172 = scmp.lt.s32.totalorder %s171, 7
      %s173 = scalar_select %p172, %s171, 7
      %s174 = smul.addr %s173, 18
      %s175 = smul.addr %s174, 4
      %s176 = scalar_lea.vmem %s0, %s175
      %s177 = smul.u32 4, %s15
      %s178 = smul.u32 8, %s15
      %p179 = scmp.lt.s32.totalorder %s178, 15
      %s180 = scalar_select %p179, %s178, 15
      %s181 = smul.addr %s180, 4
      %s182 = scalar_lea.vmem %s2, %s181
      %s183 = smul.u32 8, %s15
      %p184 = scmp.lt.s32.totalorder %s15, 1
      %s185 = scalar_select %p184, %s15, 1
      %s186 = smul.addr %s185, 8
      %s187 = scalar_lea.vmem %s3, %s186
      %s189 = scalar_lea.vmem %s176, 216
      %v190 = vld [vmem:[%s189] sm:$0xf]
      %v191 = vld [vmem:[%s189 + $0x8] sm:$0xf]
      %v192 = vld [vmem:[%s189 + $0x10] sm:$0xf]
      %v193 = vld [vmem:[%s189 + $0x18] sm:$0xf]
      %v194 = vld [vmem:[%s189 + $0x20] sm:$0xf]
      %v195 = vld [vmem:[%s189 + $0x28] sm:$0xf]
      %v196 = vld [vmem:[%s189 + $0x30] sm:$0xf]
      %v197 = vld [vmem:[%s189 + $0x38] sm:$0xf]
      %vm198 = vcmask 27648
      %199 = vst.msk [vmem:[#allocation2] sm:$0xf] %vm198, %v190
      %200 = vst.msk [vmem:[#allocation2 + $0x4] sm:$0xf] %vm198, %v191
      %201 = vst.msk [vmem:[#allocation2 + $0x8] sm:$0xf] %vm198, %v192
      %202 = vst.msk [vmem:[#allocation2 + $0xc] sm:$0xf] %vm198, %v193
      %203 = vst.msk [vmem:[#allocation2 + $0x10] sm:$0xf] %vm198, %v194
      %204 = vst.msk [vmem:[#allocation2 + $0x14] sm:$0xf] %vm198, %v195
      %205 = vst.msk [vmem:[#allocation2 + $0x18] sm:$0xf] %vm198, %v196
      %206 = vst.msk [vmem:[#allocation2 + $0x1c] sm:$0xf] %vm198, %v197
      %v207 = vld [vmem:[#allocation2] sm:$0xf]
      %v208 = vld [vmem:[#allocation2 + $0x4] sm:$0xf]
      %v209 = vld [vmem:[#allocation2 + $0x8] sm:$0xf]
      %v210 = vld [vmem:[#allocation2 + $0xc] sm:$0xf]
      %v211 = vld [vmem:[#allocation2 + $0x10] sm:$0xf]
      %v212 = vld [vmem:[#allocation2 + $0x14] sm:$0xf]
      %v213 = vld [vmem:[#allocation2 + $0x18] sm:$0xf]
      %v214 = vld [vmem:[#allocation2 + $0x1c] sm:$0xf]
      %v215 = vld [vmem:[%s1] sm:$0x3]
      %v224 = vunpack.c.l.b16 %v207
      %v225 = vunpack.c.l.b16 %v208
      %v226 = vunpack.c.l.b16 %v209
      %v227 = vunpack.c.l.b16 %v210
      %v228 = vunpack.c.l.b16 %v211
      %v229 = vunpack.c.l.b16 %v212
      %v230 = vunpack.c.l.b16 %v213
      %v231 = vunpack.c.l.b16 %v214
      %v232 = vpack.c.b16 %v225, %v224
      %v233 = vpack.c.b16 %v227, %v226
      %v234 = vpack.c.b16 %v229, %v228
      %v235 = vpack.c.b16 %v231, %v230
      %vm236 = vcmask 31744
      %v238 = vsel %vm236, %v232, 0
      %v241 = vsel %vm236, %v233, 0
      %v244 = vsel %vm236, %v234, 0
      %v247 = vsel %vm236, %v235, 0
      %vm249 = vcmask 1041408
      %v251 = vsel %vm249, %v215, 0
      %253 = vmatpush.bf16.msra.mxu0 0
      %254 = vmatpush.bf16.msra.mxu0 0
      %255 = vmatpush.bf16.msra.mxu0 0
      %256 = vmatpush.bf16.msra.mxu0 0
      %257 = vmatpush.bf16.msra.mxu0 0
      %258 = vmatpush.bf16.msra.mxu0 0
      %259 = vmatpush.bf16.msra.mxu0 0
      %260 = vmatpush.bf16.msra.mxu0 %v251
      %261 = vmatmul.bf16.gmra.mxu0 %v238
      %v262 = vpop.f32.mrf.mxu0
      %v263 = vadd.f32 0.0, %v262
      %v264 = vpop.f32.mrf.mxu0
      %v265 = vadd.f32 0.0, %v264
      %266 = vmatmul.bf16.gmra.mxu0 %v241
      %v267 = vpop.f32.mrf.mxu0
      %v268 = vadd.f32 0.0, %v267
      %v269 = vpop.f32.mrf.mxu0
      %v270 = vadd.f32 0.0, %v269
      %271 = vmatmul.bf16.gmra.mxu0 %v244
      %v272 = vpop.f32.mrf.mxu0
      %v273 = vadd.f32 0.0, %v272
      %v274 = vpop.f32.mrf.mxu0
      %v275 = vadd.f32 0.0, %v274
      %276 = vmatmul.bf16.gmra.mxu0 %v247
      %v277 = vpop.f32.mrf.mxu0
      %v278 = vadd.f32 0.0, %v277
      %v279 = vpop.f32.mrf.mxu0
      %v280 = vadd.f32 0.0, %v279
      %281 = vdwg.mxu0
      %v282 = vpack.c.bf16 %v263, %v263
      %v283 = vpack.c.bf16 %v265, %v265
      %v284 = vpack.c.bf16 %v268, %v268
      %v285 = vpack.c.bf16 %v270, %v270
      %v286 = vpack.c.bf16 %v273, %v273
      %v287 = vpack.c.bf16 %v275, %v275
      %v288 = vpack.c.bf16 %v278, %v278
      %v289 = vpack.c.bf16 %v280, %v280
      %vm290 = vcmask 60416
      %291 = vst.msk [vmem:[%s182] sm:$0xf] %vm290, %v282
      %292 = vst.msk [vmem:[%s182 + $0x4] sm:$0xf] %vm290, %v283
      %293 = vst.msk [vmem:[%s182 + $0x8] sm:$0xf] %vm290, %v284
      %294 = vst.msk [vmem:[%s182 + $0xc] sm:$0xf] %vm290, %v285
      %295 = vst.msk [vmem:[%s182 + $0x10] sm:$0xf] %vm290, %v286
      %296 = vst.msk [vmem:[%s182 + $0x14] sm:$0xf] %vm290, %v287
      %297 = vst.msk [vmem:[%s182 + $0x18] sm:$0xf] %vm290, %v288
      %298 = vst.msk [vmem:[%s182 + $0x1c] sm:$0xf] %vm290, %v289
      %vm299 = vcmask 64512
      %v300 = vsel %vm299, %v263, 0.0
      %v301 = vsel %vm299, %v265, 0.0
      %v302 = vadd.f32 %v300, %v301
      %v303 = vsel %vm299, %v268, 0.0
      %v304 = vadd.f32 %v302, %v303
      %v305 = vsel %vm299, %v270, 0.0
      %v306 = vadd.f32 %v304, %v305
      %v307 = vsel %vm299, %v273, 0.0
      %v308 = vadd.f32 %v306, %v307
      %v309 = vsel %vm299, %v275, 0.0
      %v310 = vadd.f32 %v308, %v309
      %v311 = vsel %vm299, %v278, 0.0
      %v312 = vadd.f32 %v310, %v311
      %v313 = vsel %vm299, %v280, 0.0
      %v314 = vadd.f32 %v312, %v313
      %v315 = vrot.slane %v314, 4
      %v316 = vadd.f32 %v314, %v315
      %v317 = vrot.slane %v316, 2
      %v318 = vadd.f32 %v316, %v317
      %v319 = vrot.slane %v318, 1
      %v320 = vadd.f32 %v318, %v319
      %v321 = vmul.f32 %v320, 0.015625
      %v322 = vsub.f32 %v263, %v321
      %v323 = vsub.f32 %v265, %v321
      %v324 = vsub.f32 %v268, %v321
      %v325 = vsub.f32 %v270, %v321
      %v326 = vsub.f32 %v273, %v321
      %v327 = vsub.f32 %v275, %v321
      %v328 = vsub.f32 %v278, %v321
      %v329 = vsub.f32 %v280, %v321
      %v330 = vmul.f32 %v322, %v322
      %v331 = vmul.f32 %v323, %v323
      %v332 = vmul.f32 %v324, %v324
      %v333 = vmul.f32 %v325, %v325
      %v334 = vmul.f32 %v326, %v326
      %v335 = vmul.f32 %v327, %v327
      %v336 = vmul.f32 %v328, %v328
      %v337 = vmul.f32 %v329, %v329
      %v338 = vsel %vm299, %v330, 0.0
      %v339 = vsel %vm299, %v331, 0.0
      %v340 = vadd.f32 %v338, %v339
      %v341 = vsel %vm299, %v332, 0.0
      %v342 = vadd.f32 %v340, %v341
      %v343 = vsel %vm299, %v333, 0.0
      %v344 = vadd.f32 %v342, %v343
      %v345 = vsel %vm299, %v334, 0.0
      %v346 = vadd.f32 %v344, %v345
      %v347 = vsel %vm299, %v335, 0.0
      %v348 = vadd.f32 %v346, %v347
      %v349 = vsel %vm299, %v336, 0.0
      %v350 = vadd.f32 %v348, %v349
      %v351 = vsel %vm299, %v337, 0.0
      %v352 = vadd.f32 %v350, %v351
      %v353 = vrot.slane %v352, 4
      %v354 = vadd.f32 %v352, %v353
      %v355 = vrot.slane %v354, 2
      %v356 = vadd.f32 %v354, %v355
      %v357 = vrot.slane %v356, 1
      %v358 = vadd.f32 %v356, %v357
      %vm359 = vcmask 1040384
      %v360 = vsel %vm359, %v320, %v358
      %v361 = vsel %vm249, %v360, 0.0
      %362 = vst.msk [vmem:[%s187] sm:$0xff] %vm299, %v361
      %s363 = smul.u32 8, %s15
      %p364 = scmp.lt.s32.totalorder %s363, 15
      %s365 = scalar_select %p364, %s363, 15
      %s366 = smul.addr %s365, 4
      %s367 = scalar_lea.vmem %s2, %s366
      %p368 = scmp.lt.s32.totalorder %s15, 1
      %s369 = scalar_select %p368, %s15, 1
      %s370 = smul.addr %s369, 8
      %s371 = scalar_lea.vmem %s3, %s370
      // Predicated region
      $region29: #{residual_block_forward.6} parent=27 // pred_check
        %p372 = pneg %p80
      $region30: #{residual_block_forward.6} parent=27 // pred_check_branch
        %374 = sbr.rel (%p372) target = $region32
      $region31: #{residual_block_forward.6} parent=27 // pred_region
        %s375 = smul.u32 8, %s15
      $region32: #{residual_block_forward.6} parent=27 // pred_fallthru
        _
      // Predicated region
      $region33: #{residual_block_forward.6} parent=27 // pred_check
        %p376 = pneg %p106
      $region34: #{residual_block_forward.6} parent=27 // pred_check_branch
        %378 = sbr.rel (%p376) target = $region36
      $region35: #{residual_block_forward.6} parent=27 // pred_region
        _
      $region36: #{residual_block_forward.6} parent=27 // pred_fallthru
        _
    $region28: #{residual_block_forward.6} parent=5 // pred_fallthru
      _
    %p379 = scmp.le.s32.totalorder 2, %s10
    // Predicated region
    $region37: #{residual_block_forward.6} parent=5 // pred_check
      %p380 = pneg %p379
    $region38: #{residual_block_forward.6} parent=5 // pred_check_branch
      %382 = sbr.rel (%p380) target = $region40
    $region39: #{residual_block_forward.6} parent=5 // pred_region
      %s383 = ssub.s32 %s10, 2
      // Predicated region
      $region41: #{residual_block_forward.6} parent=39 // pred_check
        %p384 = pneg %p86
      $region42: #{residual_block_forward.6} parent=39 // pred_check_branch
        %386 = sbr.rel (%p384) target = $region44
      $region43: #{residual_block_forward.6} parent=39 // pred_region
        %s387 = smul.u32 8, %s16
        %p388 = scmp.lt.s32.totalorder %s387, 15
        %s389 = scalar_select %p388, %s387, 15
        %s390 = smul.addr %s389, 4
        %s391 = scalar_lea.vmem %s2, %s390
      $region44: #{residual_block_forward.6} parent=39 // pred_fallthru
        _
      // Predicated region
      $region45: #{residual_block_forward.6} parent=39 // pred_check
        %p392 = pneg %p112
      $region46: #{residual_block_forward.6} parent=39 // pred_check_branch
        %394 = sbr.rel (%p392) target = $region48
      $region47: #{residual_block_forward.6} parent=39 // pred_region
        %p395 = scmp.lt.s32.totalorder %s16, 1
        %s396 = scalar_select %p395, %s16, 1
        %s397 = smul.addr %s396, 8
        %s398 = scalar_lea.vmem %s3, %s397
      $region48: #{residual_block_forward.6} parent=39 // pred_fallthru
        _
    $region40: #{residual_block_forward.6} parent=5 // pred_fallthru
      _
  $region6: #{residual_block_forward.6} parent=0 // loop_footer
    %s14 = sadd.s32 1, %s10
  $region7: #{residual_block_forward.6} parent=0 // loop_footer_branch
    %9 = sbr.rel target = $region3
  $region8: #{residual_block_forward.6} parent=0 // loop_exit
    _

// kernel: residual_block_forward.7
$region0: #{residual_block_forward.7}
  #allocation0 [shape = 'u32[]', space=smem, size = 0x4, offset = 0x4, fixed_abs, tag = 'smem constant byte address 0x4 - core index']
  #allocation1 [shape = 'u32[72,128]{1,0:T(1,128)}', space=vmem, size = 0x9000, scoped, tag = 'internal scratch']
  %s0 = inlined_call_operand.vmem [shape: bf16[8,128], index: 0, kind: input, shape index: {}]
  %s1 = inlined_call_operand.vmem [shape: f32[1,128], index: 1, kind: input, shape index: {}]
  %s2 = inlined_call_operand.vmem [shape: f32[1,128], index: 2, kind: input, shape index: {}]
  %s3 = inlined_call_operand.vmem [shape: bf16[8,128], index: 3, kind: input, shape index: {}]
  %s4 = inlined_call_operand.vmem [shape: f32[1,128], index: 4, kind: input, shape index: {}]
  %s5 = inlined_call_operand.vmem [shape: f32[1,128], index: 5, kind: input, shape index: {}]
  %s6 = inlined_call_operand.vmem [shape: f32[8,128], index: 6, kind: output, shape index: {}]
  %s7 = sld [smem:[#allocation0]]
  $region34: #{residual_block_forward.7} parent=0
    _
  %s9 = ssub.s32 1, %s7
  %s10 = scalar_select 0, %s9, %s7
  // Predicated region
  $region2: #{residual_block_forward.7} parent=0 // pred_check
    _
  $region3: #{residual_block_forward.7} parent=0 // pred_check_branch
    %12 = sbr.rel (0) target = $region5
  $region4: #{residual_block_forward.7} parent=0 // pred_region
    _
  $region5: #{residual_block_forward.7} parent=0 // pred_fallthru
    _
  // Predicated region
  $region6: #{residual_block_forward.7} parent=0 // pred_check
    _
  $region7: #{residual_block_forward.7} parent=0 // pred_check_branch
    %14 = sbr.rel (0) target = $region9
  $region8: #{residual_block_forward.7} parent=0 // pred_region
    _
  $region9: #{residual_block_forward.7} parent=0 // pred_fallthru
    _
  // Predicated region
  $region10: #{residual_block_forward.7} parent=0 // pred_check
    _
  $region11: #{residual_block_forward.7} parent=0 // pred_check_branch
    %16 = sbr.rel (0) target = $region13
  $region12: #{residual_block_forward.7} parent=0 // pred_region
    _
  $region13: #{residual_block_forward.7} parent=0 // pred_fallthru
    _
  // Predicated region
  $region14: #{residual_block_forward.7} parent=0 // pred_check
    _
  $region15: #{residual_block_forward.7} parent=0 // pred_check_branch
    %18 = sbr.rel (0) target = $region17
  $region16: #{residual_block_forward.7} parent=0 // pred_region
    _
  $region17: #{residual_block_forward.7} parent=0 // pred_fallthru
    _
  // Predicated region
  $region18: #{residual_block_forward.7} parent=0 // pred_check
    _
  $region19: #{residual_block_forward.7} parent=0 // pred_check_branch
    %20 = sbr.rel (0) target = $region21
  $region20: #{residual_block_forward.7} parent=0 // pred_region
    _
  $region21: #{residual_block_forward.7} parent=0 // pred_fallthru
    _
  // Predicated region
  $region22: #{residual_block_forward.7} parent=0 // pred_check
    _
  $region23: #{residual_block_forward.7} parent=0 // pred_check_branch
    %22 = sbr.rel (0) target = $region25
  $region24: #{residual_block_forward.7} parent=0 // pred_region
    _
  $region25: #{residual_block_forward.7} parent=0 // pred_fallthru
    _
  %v23 = vld [vmem:[%s0] sm:$0xf]
  %v24 = vunpack.c.l.bf16 %v23
  %v25 = vld [vmem:[%s1] sm:$0x1]
  %v27 = vperm.slane %v25, 0
  %v29 = vmul.f32 %v24, %v27
  %v30 = vld [vmem:[%s2] sm:$0x1]
  %v32 = vperm.slane %v30, 0
  %v34 = vadd.f32 %v29, %v32
  %v35 = vld [vmem:[%s3] sm:$0xf]
  %v36 = vunpack.c.l.bf16 %v35
  %v37 = vld [vmem:[%s4] sm:$0x1]
  %v39 = vperm.slane %v37, 0
  %v41 = vmul.f32 %v36, %v39
  %v42 = vadd.f32 %v34, %v41
  %v43 = vld [vmem:[%s5] sm:$0x1]
  %v45 = vperm.slane %v43, 0
  %v47 = vadd.f32 %v42, %v45
  %v48 = vmax.f32 %v47, 0.0
  %49 = vst [vmem:[%s6] sm:$0xff] %v48
  // Predicated region
  $region26: #{residual_block_forward.7} parent=0 // pred_check
    _
  $region27: #{residual_block_forward.7} parent=0 // pred_check_branch
    %51 = sbr.rel (0) target = $region29
  $region28: #{residual_block_forward.7} parent=0 // pred_region
    _
  $region29: #{residual_block_forward.7} parent=0 // pred_fallthru
    _
  // Predicated region
  $region30: #{residual_block_forward.7} parent=0 // pred_check
    _
  $region31: #{residual_block_forward.7} parent=0 // pred_check_branch
    %53 = sbr.rel (0) target = $region33
  $region32: #{residual_block_forward.7} parent=0 // pred_region
    _
  $region33: #{residual_block_forward.7} parent=0 // pred_fallthru
    _

// kernel: residual_block_forward.4
$region0: #{residual_block_forward.4}
  #allocation0 [shape = 'u32[]', space=smem, size = 0x4, offset = 0x4, fixed_abs, tag = 'smem constant byte address 0x4 - core index']
  #allocation1 [shape = 'u32[72,128]{1,0:T(1,128)}', space=vmem, size = 0x9000, scoped, tag = 'internal scratch']
  #allocation2 [shape = 'bf16[64,36]{1,0:T(8,128)(2,1)}', space=vmem, size = 0x4000, scoped, tag = 'scratch operand']
  %s0 = inlined_call_operand.vmem [shape: bf16[8,9,9,4], index: 0, kind: input, shape index: {}]
  %s1 = inlined_call_operand.vmem [shape: bf16[36,8], index: 1, kind: input, shape index: {}]
  %s2 = inlined_call_operand.vmem [shape: bf16[128,8], index: 2, kind: output, shape index: {0}]
  %s3 = inlined_call_operand.vmem [shape: f32[2,8,8], index: 3, kind: output, shape index: {1}]
  %4 = xla_tuple %s2, %s3
  %s5 = sld [smem:[#allocation0]]
  $region49: #{residual_block_forward.4} parent=0
    _
  %s7 = ssub.s32 1, %s5
  %s8 = scalar_select 0, %s7, %s5
  loop: start=0, step=1, limit=4
  $region2: #{residual_block_forward.4} parent=0 // loop_pre_header
    _
  $region3: #{residual_block_forward.4} parent=0 // loop_header
    %s10 = sphi 0, %s14
    %p11 = scmp.ge.s32.totalorder %s10, 4
    %s20 = sphi 0, %s22
    %s23 = sphi 0, %s20
    %s24 = sphi 0, %s23
    %s40 = sphi 0, %s24
    %s44 = sphi 0, %s44
    %s46 = sphi 0, %s44
    %s47 = sphi 0, %s46
    %s61 = sphi 0, %s47
    %s67 = sphi 0, %s69
    %s70 = sphi 0, %s67
    %s71 = sphi 0, %s70
    %s87 = sphi 0, %s71
    %s93 = sphi 0, %s95
    %s96 = sphi 0, %s93
    %s97 = sphi 0, %s96
    %s113 = sphi 0, %s97
  $region4: #{residual_block_forward.4} parent=0 // loop_header_branch
    %13 = sbr.rel (%p11) target = $region8
  $region5: #{residual_block_forward.4} parent=0 // loop_body
    %s15 = ssub.s32 %s10, 1
    %s16 = ssub.s32 %s10, 2
    %s17 = sadd.s32 %s10, 1
    %s18 = ssub.s32 %s10, %s17
    %p19 = scmp.eq.s32.totalorder %s18, 0
    %s21 = sadd.s32 %s20, 1
    %s22 = scalar_select %p19, %s20, %s21
    %p25 = pneg %p19
    %p26 = scmp.eq.s32.totalorder %s10, 1
    %p27 = por %p25, %p26
    %p28 = scmp.ne.s32.totalorder %s20, %s23
    %p29 = scmp.eq.s32.totalorder %s10, 0
    %p30 = por %p28, %p29
    %p31 = scmp.ne.s32.totalorder %s20, %s23
    %p32 = scmp.eq.s32.totalorder %s15, 1
    %p33 = por %p31, %p32
    %p34 = scmp.ne.s32.totalorder %s23, %s24
    %p35 = scmp.eq.s32.totalorder %s15, 0
    %p36 = por %p34, %p35
    %p37 = scmp.ne.s32.totalorder %s23, %s24
    %p38 = scmp.eq.s32.totalorder %s16, 1
    %p39 = por %p37, %p38
    %p41 = scmp.ne.s32.totalorder %s24, %s40
    %p42 = scmp.eq.s32.totalorder %s16, 0
    %p43 = por %p41, %p42
    %s45 = sadd.s32 %s44, 1
    %p48 = scmp.eq.s32.totalorder %s10, 1
    %p49 = scmp.ne.s32.totalorder %s44, %s46
    %p50 = scmp.eq.s32.totalorder %s10, 0
    %p51 = por %p49, %p50
    %p52 = scmp.ne.s32.totalorder %s44, %s46
    %p53 = scmp.eq.s32.totalorder %s15, 1
    %p54 = por %p52, %p53
    %p55 = scmp.ne.s32.totalorder %s46, %s47
    %p56 = scmp.eq.s32.totalorder %s15, 0
    %p57 = por %p55, %p56
    %p58 = scmp.ne.s32.totalorder %s46, %s47
    %p59 = scmp.eq.s32.totalorder %s16, 1
    %p60 = por %p58, %p59
    %p62 = scmp.ne.s32.totalorder %s47, %s61
    %p63 = scmp.eq.s32.totalorder %s16, 0
    %p64 = por %p62, %p63
    %s65 = ssub.s32 %s10, %s17
    %p66 = scmp.eq.s32.totalorder %s65, 0
    %s68 = sadd.s32 %s67, 1
    %s69 = scalar_select %p66, %s67, %s68
    %p72 = pneg %p66
    %p73 = scmp.eq.s32.totalorder %s10, 1
    %p74 = por %p72, %p73
    %p75 = scmp.ne.s32.totalorder %s67, %s70
    %p76 = scmp.eq.s32.totalorder %s10, 0
    %p77 = por %p75, %p76
    %p78 = scmp.ne.s32.totalorder %s67, %s70
    %p79 = scmp.eq.s32.totalorder %s15, 1
    %p80 = por %p78, %p79
    %p81 = scmp.ne.s32.totalorder %s70, %s71
    %p82 = scmp.eq.s32.totalorder %s15, 0
    %p83 = por %p81, %p82
    %p84 = scmp.ne.s32.totalorder %s70, %s71
    %p85 = scmp.eq.s32.totalorder %s16, 1
    %p86 = por %p84, %p85
    %p88 = scmp.ne.s32.totalorder %s71, %s87
    %p89 = scmp.eq.s32.totalorder %s16, 0
    %p90 = por %p88, %p89
    %s91 = ssub.s32 %s10, %s17
    %p92 = scmp.eq.s32.totalorder %s91, 0
    %s94 = sadd.s32 %s93, 1
    %s95 = scalar_select %p92, %s93, %s94
    %p98 = pneg %p92
    %p99 = scmp.eq.s32.totalorder %s10, 1
    %p100 = por %p98, %p99
    %p101 = scmp.ne.s32.totalorder %s93, %s96
    %p102 = scmp.eq.s32.totalorder %s10, 0
    %p103 = por %p101, %p102
    %p104 = scmp.ne.s32.totalorder %s93, %s96
    %p105 = scmp.eq.s32.totalorder %s15, 1
    %p106 = por %p104, %p105
    %p107 = scmp.ne.s32.totalorder %s96, %s97
    %p108 = scmp.eq.s32.totalorder %s15, 0
    %p109 = por %p107, %p108
    %p110 = scmp.ne.s32.totalorder %s96, %s97
    %p111 = scmp.eq.s32.totalorder %s16, 1
    %p112 = por %p110, %p111
    %p114 = scmp.ne.s32.totalorder %s97, %s113
    %p115 = scmp.eq.s32.totalorder %s16, 0
    %p116 = por %p114, %p115
    %p117 = scmp.le.s32.totalorder 1, %s10
    %p118 = scmp.lt.s32.totalorder %s10, 3
    %p119 = pnand %p117, %p118
    %p120 = pneg %p119
    // Predicated region
    $region9: #{residual_block_forward.4} parent=5 // pred_check
      _
    $region10: #{residual_block_forward.4} parent=5 // pred_check_branch
      %122 = sbr.rel (%p119) target = $region12
    $region11: #{residual_block_forward.4} parent=5 // pred_region
      %s123 = ssub.s32 %s10, 1
      // Predicated region
      $region13: #{residual_block_forward.4} parent=11 // pred_check
        %p124 = pneg %p57
      $region14: #{residual_block_forward.4} parent=11 // pred_check_branch
        %126 = sbr.rel (%p124) target = $region16
      $region15: #{residual_block_forward.4} parent=11 // pred_region
        _
      $region16: #{residual_block_forward.4} parent=11 // pred_fallthru
        _
    $region12: #{residual_block_forward.4} parent=5 // pred_fallthru
      _
    %p127 = scmp.lt.s32.totalorder %s10, 2
    // Predicated region
    $region17: #{residual_block_forward.4} parent=5 // pred_check
      %p128 = pneg %p127
    $region18: #{residual_block_forward.4} parent=5 // pred_check_branch
      %130 = sbr.rel (%p128) target = $region20
    $region19: #{residual_block_forward.4} parent=5 // pred_region
      // Predicated region
      $region21: #{residual_block_forward.4} parent=19 // pred_check
        %p131 = pneg %p30
      $region22: #{residual_block_forward.4} parent=19 // pred_check_branch
        %133 = sbr.rel (%p131) target = $region24
      $region23: #{residual_block_forward.4} parent=19 // pred_region
        %s134 = smul.u32 4, %s10
        %p135 = scmp.lt.s32.totalorder %s134, 7
        %s136 = scalar_select %p135, %s134, 7
        %s137 = smul.addr %s136, 18
        %s138 = smul.addr %s137, 4
        %s139 = scalar_lea.vmem %s0, %s138
        %s140 = smul.u32 4, %s10
      $region24: #{residual_block_forward.4} parent=19 // pred_fallthru
        _
    $region20: #{residual_block_forward.4} parent=5 // pred_fallthru
      _
    %p141 = scmp.le.s32.totalorder 1, %s10
    %p142 = scmp.lt.s32.totalorder %s10, 3
    %p143 = pnand %p141, %p142
    %p144 = pneg %p143
    // Predicated region
    $region25: #{residual_block_forward.4} parent=5 // pred_check
      _
    $region26: #{residual_block_forward.4} parent=5 // pred_check_branch
      %146 = sbr.rel (%p143) target = $region28
    $region27: #{residual_block_forward.4} parent=5 // pred_region
      %s147 = ssub.s32 %s10, 1
      %s148 = smul.u32 4, %s15
      %p149 = scmp.lt.s32.totalorder %s148, 7
      %s150 = scalar_select %p149, %s148, 7
      %s151 = smul.addr %s150, 18
      %s152 = smul.addr %s151, 4
      %s153 = scalar_lea.vmem %s0, %s152
      %p154 = pneg %p36
      %p155 = pneg %p33
      %p156 = pneg %p57
      %p157 = pneg %p54
      %p158 = pneg %p83
      %p159 = pneg %p80
      %s160 = smul.u32 8, %s15
      %p161 = scmp.lt.s32.totalorder %s160, 15
      %s162 = scalar_select %p161, %s160, 15
      %s163 = smul.addr %s162, 4
      %s164 = scalar_lea.vmem %s2, %s163
      %p165 = pneg %p109
      %p166 = pneg %p106
      %p167 = scmp.lt.s32.totalorder %s15, 1
      %s168 = scalar_select %p167, %s15, 1
      %s169 = smul.addr %s168, 8
      %s170 = scalar_lea.vmem %s3, %s169
      %s171 = smul.u32 4, %s15
      %p172 = scmp.lt.s32.totalorder %s171, 7
      %s173 = scalar_select %p172, %s171, 7
      %s174 = smul.addr %s173, 18
      %s175 = smul.addr %s174, 4
      %s176 = scalar_lea.vmem %s0, %s175
      %s177 = smul.u32 4, %s15
      %s178 = smul.u32 8, %s15
      %p179 = scmp.lt.s32.totalorder %s178, 15
      %s180 = scalar_select %p179, %s178, 15
      %s181 = smul.addr %s180, 4
      %s182 = scalar_lea.vmem %s2, %s181
      %s183 = smul.u32 8, %s15
      %p184 = scmp.lt.s32.totalorder %s15, 1
      %s185 = scalar_select %p184, %s15, 1
      %s186 = smul.addr %s185, 8
      %s187 = scalar_lea.vmem %s3, %s186
      %v189 = vld [vmem:[%s176] sm:$0xf]
      %v190 = vld [vmem:[%s176 + $0x8] sm:$0xf]
      %v191 = vld [vmem:[%s176 + $0x10] sm:$0xf]
      %v192 = vld [vmem:[%s176 + $0x18] sm:$0xf]
      %v193 = vld [vmem:[%s176 + $0x20] sm:$0xf]
      %v194 = vld [vmem:[%s176 + $0x28] sm:$0xf]
      %v195 = vld [vmem:[%s176 + $0x30] sm:$0xf]
      %v196 = vld [vmem:[%s176 + $0x38] sm:$0xf]
      %vm197 = vcmask 27648
      %198 = vst.msk [vmem:[#allocation2] sm:$0xf] %vm197, %v189
      %199 = vst.msk [vmem:[#allocation2 + $0x4] sm:$0xf] %vm197, %v190
      %200 = vst.msk [vmem:[#allocation2 + $0x8] sm:$0xf] %vm197, %v191
      %201 = vst.msk [vmem:[#allocation2 + $0xc] sm:$0xf] %vm197, %v192
      %202 = vst.msk [vmem:[#allocation2 + $0x10] sm:$0xf] %vm197, %v193
      %203 = vst.msk [vmem:[#allocation2 + $0x14] sm:$0xf] %vm197, %v194
      %204 = vst.msk [vmem:[#allocation2 + $0x18] sm:$0xf] %vm197, %v195
      %205 = vst.msk [vmem:[#allocation2 + $0x1c] sm:$0xf] %vm197, %v196
      %s206 = scalar_lea.vmem %s176, 72
      %v207 = vld [vmem:[%s206] sm:$0xf]
      %v208 = vld [vmem:[%s206 + $0x8] sm:$0xf]
      %v209 = vld [vmem:[%s206 + $0x10] sm:$0xf]
      %v210 = vld [vmem:[%s206 + $0x18] sm:$0xf]
      %v211 = vld [vmem:[%s206 + $0x20] sm:$0xf]
      %v212 = vld [vmem:[%s206 + $0x28] sm:$0xf]
      %v213 = vld [vmem:[%s206 + $0x30] sm:$0xf]
      %v214 = vld [vmem:[%s206 + $0x38] sm:$0xf]
      %223 = vrot.lane.b32.xlu0 %v207, 4
      %v224 = vpop.permute.xlu0 %223
      %225 = vrot.lane.b32.xlu0 %v208, 4
      %v226 = vpop.permute.xlu0 %225
      %227 = vrot.lane.b32.xlu0 %v209, 4
      %v228 = vpop.permute.xlu0 %227
      %229 = vrot.lane.b32.xlu0 %v210, 4
      %v230 = vpop.permute.xlu0 %229
      %231 = vrot.lane.b32.xlu0 %v211, 4
      %v232 = vpop.permute.xlu0 %231
      %233 = vrot.lane.b32.xlu0 %v212, 4
      %v234 = vpop.permute.xlu0 %233
      %235 = vrot.lane.b32.xlu0 %v213, 4
      %v236 = vpop.permute.xlu0 %235
      %237 = vrot.lane.b32.xlu0 %v214, 4
      %v238 = vpop.permute.xlu0 %237
      %vm247 = vcmask 60448
      %248 = vst.msk [vmem:[#allocation2] sm:$0xf] %vm247, %v224
      %249 = vst.msk [vmem:[#allocation2 + $0x4] sm:$0xf] %vm247, %v226
      %250 = vst.msk [vmem:[#allocation2 + $0x8] sm:$0xf] %vm247, %v228
      %251 = vst.msk [vmem:[#allocation2 + $0xc] sm:$0xf] %vm247, %v230
      %252 = vst.msk [vmem:[#allocation2 + $0x10] sm:$0xf] %vm247, %v232
      %253 = vst.msk [vmem:[#allocation2 + $0x14] sm:$0xf] %vm247, %v234
      %254 = vst.msk [vmem:[#allocation2 + $0x18] sm:$0xf] %vm247, %v236
      %255 = vst.msk [vmem:[#allocation2 + $0x1c] sm:$0xf] %vm247, %v238
      %v256 = vld [vmem:[%s176] sm:$0xf]
      %v257 = vld [vmem:[%s176 + $0x4] sm:$0x1]
      %v258 = vld [vmem:[%s176 + $0x8] sm:$0xf]
      %v259 = vld [vmem:[%s176 + $0xc] sm:$0x1]
      %v260 = vld [vmem:[%s176 + $0x10] sm:$0xf]
      %v261 = vld [vmem:[%s176 + $0x14] sm:$0x1]
      %v262 = vld [vmem:[%s176 + $0x18] sm:$0xf]
      %v263 = vld [vmem:[%s176 + $0x1c] sm:$0x1]
      %v264 = vld [vmem:[%s176 + $0x20] sm:$0xf]
      %v265 = vld [vmem:[%s176 + $0x24] sm:$0x1]
      %v266 = vld [vmem:[%s176 + $0x28] sm:$0xf]
      %v267 = vld [vmem:[%s176 + $0x2c] sm:$0x1]
      %v268 = vld [vmem:[%s176 + $0x30] sm:$0xf]
      %v269 = vld [vmem:[%s176 + $0x34] sm:$0x1]
      %v270 = vld [vmem:[%s176 + $0x38] sm:$0xf]
      %v271 = vld [vmem:[%s176 + $0x3c] sm:$0x1]
      %vm272 = vsmask.f32 3328
      %vm273 = vsmask.f32 7440
      %vm274 = vmor %vm272, %vm273
      %v276 = vshrl.u32 %v256, 16
      %v278 = vrot.slane %v276, 4
      %v279 = vshll.u32 %v256, 16
      %v281 = vrot.slane %v279, 5
      %v282 = vor.u32 %v278, %v281
      %v283 = vrot.slane %v282, 4
      %v285 = vshll.u32 %v257, 16
      %v287 = vrot.slane %v285, 5
      %v288 = vsel %vm274, %v283, %v287
      %v290 = vshrl.u32 %v258, 16
      %v292 = vrot.slane %v290, 4
      %v293 = vshll.u32 %v258, 16
      %v295 = vrot.slane %v293, 5
      %v296 = vor.u32 %v292, %v295
      %v297 = vrot.slane %v296, 4
      %v299 = vshll.u32 %v259, 16
      %v301 = vrot.slane %v299, 5
      %v302 = vsel %vm274, %v297, %v301
      %v304 = vshrl.u32 %v260, 16
      %v306 = vrot.slane %v304, 4
      %v307 = vshll.u32 %v260, 16
      %v309 = vrot.slane %v307, 5
      %v310 = vor.u32 %v306, %v309
      %v311 = vrot.slane %v310, 4
      %v313 = vshll.u32 %v261, 16
      %v315 = vrot.slane %v313, 5
      %v316 = vsel %vm274, %v311, %v315
      %v318 = vshrl.u32 %v262, 16
      %v320 = vrot.slane %v318, 4
      %v321 = vshll.u32 %v262, 16
      %v323 = vrot.slane %v321, 5
      %v324 = vor.u32 %v320, %v323
      %v325 = vrot.slane %v324, 4
      %v327 = vshll.u32 %v263, 16
      %v329 = vrot.slane %v327, 5
      %v330 = vsel %vm274, %v325, %v329
      %v332 = vshrl.u32 %v264, 16
      %v334 = vrot.slane %v332, 4
      %v335 = vshll.u32 %v264, 16
      %v337 = vrot.slane %v335, 5
      %v338 = vor.u32 %v334, %v337
      %v339 = vrot.slane %v338, 4
      %v341 = vshll.u32 %v265, 16
      %v343 = vrot.slane %v341, 5
      %v344 = vsel %vm274, %v339, %v343
      %v346 = vshrl.u32 %v266, 16
      %v348 = vrot.slane %v346, 4
      %v349 = vshll.u32 %v266, 16
      %v351 = vrot.slane %v349, 5
      %v352 = vor.u32 %v348, %v351
      %v353 = vrot.slane %v352, 4
      %v355 = vshll.u32 %v267, 16
      %v357 = vrot.slane %v355, 5
      %v358 = vsel %vm274, %v353, %v357
      %v360 = vshrl.u32 %v268, 16
      %v362 = vrot.slane %v360, 4
      %v363 = vshll.u32 %v268, 16
      %v365 = vrot.slane %v363, 5
      %v366 = vor.u32 %v362, %v365
      %v367 = vrot.slane %v366, 4
      %v369 = vshll.u32 %v269, 16
      %v371 = vrot.slane %v369, 5
      %v372 = vsel %vm274, %v367, %v371
      %v374 = vshrl.u32 %v270, 16
      %v376 = vrot.slane %v374, 4
      %v377 = vshll.u32 %v270, 16
      %v379 = vrot.slane %v377, 5
      %v380 = vor.u32 %v376, %v379
      %v381 = vrot.slane %v380, 4
      %v383 = vshll.u32 %v271, 16
      %v385 = vrot.slane %v383, 5
      %v386 = vsel %vm274, %v381, %v385
      %387 = vrot.lane.b32.xlu0 %v288, 8
      %v388 = vpop.permute.xlu0 %387
      %389 = vrot.lane.b32.xlu0 %v302, 8
      %v390 = vpop.permute.xlu0 %389
      %391 = vrot.lane.b32.xlu0 %v316, 8
      %v392 = vpop.permute.xlu0 %391
      %393 = vrot.lane.b32.xlu0 %v330, 8
      %v394 = vpop.permute.xlu0 %393
      %395 = vrot.lane.b32.xlu0 %v344, 8
      %v396 = vpop.permute.xlu0 %395
      %397 = vrot.lane.b32.xlu0 %v358, 8
      %v398 = vpop.permute.xlu0 %397
      %399 = vrot.lane.b32.xlu0 %v372, 8
      %v400 = vpop.permute.xlu0 %399
      %401 = vrot.lane.b32.xlu0 %v386, 8
      %v402 = vpop.permute.xlu0 %401
      %vm411 = vcmask 93248
      %412 = vst.msk [vmem:[#allocation2] sm:$0xf] %vm411, %v388
      %413 = vst.msk [vmem:[#allocation2 + $0x4] sm:$0xf] %vm411, %v390
      %414 = vst.msk [vmem:[#allocation2 + $0x8] sm:$0xf] %vm411, %v392
      %415 = vst.msk [vmem:[#allocation2 + $0xc] sm:$0xf] %vm411, %v394
      %416 = vst.msk [vmem:[#allocation2 + $0x10] sm:$0xf] %vm411, %v396
      %417 = vst.msk [vmem:[#allocation2 + $0x14] sm:$0xf] %vm411, %v398
      %418 = vst.msk [vmem:[#allocation2 + $0x18] sm:$0xf] %vm411, %v400
      %419 = vst.msk [vmem:[#allocation2 + $0x1c] sm:$0xf] %vm411, %v402
      %s420 = scalar_lea.vmem %s176, 144
      %v421 = vld [vmem:[%s420] sm:$0xf]
      %v422 = vld [vmem:[%s420 + $0x8] sm:$0xf]
      %v423 = vld [vmem:[%s420 + $0x10] sm:$0xf]
      %v424 = vld [vmem:[%s420 + $0x18] sm:$0xf]
      %v425 = vld [vmem:[%s420 + $0x20] sm:$0xf]
      %v426 = vld [vmem:[%s420 + $0x28] sm:$0xf]
      %v427 = vld [vmem:[%s420 + $0x30] sm:$0xf]
      %v428 = vld [vmem:[%s420 + $0x38] sm:$0xf]
      %437 = vrot.lane.b32.xlu0 %v421, 12
      %v438 = vpop.permute.xlu0 %437
      %439 = vrot.lane.b32.xlu0 %v422, 12
      %v440 = vpop.permute.xlu0 %439
      %441 = vrot.lane.b32.xlu0 %v423, 12
      %v442 = vpop.permute.xlu0 %441
      %443 = vrot.lane.b32.xlu0 %v424, 12
      %v444 = vpop.permute.xlu0 %443
      %445 = vrot.lane.b32.xlu0 %v425, 12
      %v446 = vpop.permute.xlu0 %445
      %447 = vrot.lane.b32.xlu0 %v426, 12
      %v448 = vpop.permute.xlu0 %447
      %449 = vrot.lane.b32.xlu0 %v427, 12
      %v450 = vpop.permute.xlu0 %449
      %451 = vrot.lane.b32.xlu0 %v428, 12
      %v452 = vpop.permute.xlu0 %451
      %vm461 = vcmask 126048
      %462 = vst.msk [vmem:[#allocation2] sm:$0xf] %vm461, %v438
      %463 = vst.msk [vmem:[#allocation2 + $0x4] sm:$0xf] %vm461, %v440
      %464 = vst.msk [vmem:[#allocation2 + $0x8] sm:$0xf] %vm461, %v442
      %465 = vst.msk [vmem:[#allocation2 + $0xc] sm:$0xf] %vm461, %v444
      %466 = vst.msk [vmem:[#allocation2 + $0x10] sm:$0xf] %vm461, %v446
      %467 = vst.msk [vmem:[#allocation2 + $0x14] sm:$0xf] %vm461, %v448
      %468 = vst.msk [vmem:[#allocation2 + $0x18] sm:$0xf] %vm461, %v450
      %469 = vst.msk [vmem:[#allocation2 + $0x1c] sm:$0xf] %vm461, %v452
      %s470 = scalar_lea.vmem %s176, 216
      %v471 = vld [vmem:[%s470] sm:$0xf]
      %v472 = vld [vmem:[%s470 + $0x8] sm:$0xf]
      %v473 = vld [vmem:[%s470 + $0x10] sm:$0xf]
      %v474 = vld [vmem:[%s470 + $0x18] sm:$0xf]
      %v475 = vld [vmem:[%s470 + $0x20] sm:$0xf]
      %v476 = vld [vmem:[%s470 + $0x28] sm:$0xf]
      %v477 = vld [vmem:[%s470 + $0x30] sm:$0xf]
      %v478 = vld [vmem:[%s470 + $0x38] sm:$0xf]
      %487 = vrot.lane.b32.xlu0 %v471, 16
      %v488 = vpop.permute.xlu0 %487
      %489 = vrot.lane.b32.xlu0 %v472, 16
      %v490 = vpop.permute.xlu0 %489
      %491 = vrot.lane.b32.xlu0 %v473, 16
      %v492 = vpop.permute.xlu0 %491
      %493 = vrot.lane.b32.xlu0 %v474, 16
      %v494 = vpop.permute.xlu0 %493
      %495 = vrot.lane.b32.xlu0 %v475, 16
      %v496 = vpop.permute.xlu0 %495
      %497 = vrot.lane.b32.xlu0 %v476, 16
      %v498 = vpop.permute.xlu0 %497
      %499 = vrot.lane.b32.xlu0 %v477, 16
      %v500 = vpop.permute.xlu0 %499
      %501 = vrot.lane.b32.xlu0 %v478, 16
      %v502 = vpop.permute.xlu0 %501
      %vm511 = vcmask 158848
      %512 = vst.msk [vmem:[#allocation2] sm:$0xf] %vm511, %v488
      %513 = vst.msk [vmem:[#allocation2 + $0x4] sm:$0xf] %vm511, %v490
      %514 = vst.msk [vmem:[#allocation2 + $0x8] sm:$0xf] %vm511, %v492
      %515 = vst.msk [vmem:[#allocation2 + $0xc] sm:$0xf] %vm511, %v494
      %516 = vst.msk [vmem:[#allocation2 + $0x10] sm:$0xf] %vm511, %v496
      %517 = vst.msk [vmem:[#allocation2 + $0x14] sm:$0xf] %vm511, %v498
      %518 = vst.msk [vmem:[#allocation2 + $0x18] sm:$0xf] %vm511, %v500
      %519 = vst.msk [vmem:[#allocation2 + $0x1c] sm:$0xf] %vm511, %v502
      %v520 = vld [vmem:[%s420] sm:$0xf]
      %v521 = vld [vmem:[%s420 + $0x4] sm:$0x1]
      %v522 = vld [vmem:[%s420 + $0x8] sm:$0xf]
      %v523 = vld [vmem:[%s420 + $0xc] sm:$0x1]
      %v524 = vld [vmem:[%s420 + $0x10] sm:$0xf]
      %v525 = vld [vmem:[%s420 + $0x14] sm:$0x1]
      %v526 = vld [vmem:[%s420 + $0x18] sm:$0xf]
      %v527 = vld [vmem:[%s420 + $0x1c] sm:$0x1]
      %v528 = vld [vmem:[%s420 + $0x20] sm:$0xf]
      %v529 = vld [vmem:[%s420 + $0x24] sm:$0x1]
      %v530 = vld [vmem:[%s420 + $0x28] sm:$0xf]
      %v531 = vld [vmem:[%s420 + $0x2c] sm:$0x1]
      %v532 = vld [vmem:[%s420 + $0x30] sm:$0xf]
      %v533 = vld [vmem:[%s420 + $0x34] sm:$0x1]
      %v534 = vld [vmem:[%s420 + $0x38] sm:$0xf]
      %v535 = vld [vmem:[%s420 + $0x3c] sm:$0x1]
      %v537 = vshrl.u32 %v520, 16
      %v539 = vrot.slane %v537, 4
      %v540 = vshll.u32 %v520, 16
      %v542 = vrot.slane %v540, 5
      %v543 = vor.u32 %v539, %v542
      %v544 = vrot.slane %v543, 4
      %v546 = vshll.u32 %v521, 16
      %v548 = vrot.slane %v546, 5
      %v549 = vsel %vm274, %v544, %v548
      %v551 = vshrl.u32 %v522, 16
      %v553 = vrot.slane %v551, 4
      %v554 = vshll.u32 %v522, 16
      %v556 = vrot.slane %v554, 5
      %v557 = vor.u32 %v553, %v556
      %v558 = vrot.slane %v557, 4
      %v560 = vshll.u32 %v523, 16
      %v562 = vrot.slane %v560, 5
      %v563 = vsel %vm274, %v558, %v562
      %v565 = vshrl.u32 %v524, 16
      %v567 = vrot.slane %v565, 4
      %v568 = vshll.u32 %v524, 16
      %v570 = vrot.slane %v568, 5
      %v571 = vor.u32 %v567, %v570
      %v572 = vrot.slane %v571, 4
      %v574 = vshll.u32 %v525, 16
      %v576 = vrot.slane %v574, 5
      %v577 = vsel %vm274, %v572, %v576
      %v579 = vshrl.u32 %v526, 16
      %v581 = vrot.slane %v579, 4
      %v582 = vshll.u32 %v526, 16
      %v584 = vrot.slane %v582, 5
      %v585 = vor.u32 %v581, %v584
      %v586 = vrot.slane %v585, 4
      %v588 = vshll.u32 %v527, 16
      %v590 = vrot.slane %v588, 5
      %v591 = vsel %vm274, %v586, %v590
      %v593 = vshrl.u32 %v528, 16
      %v595 = vrot.slane %v593, 4
      %v596 = vshll.u32 %v528, 16
      %v598 = vrot.slane %v596, 5
      %v599 = vor.u32 %v595, %v598
      %v600 = vrot.slane %v599, 4
      %v602 = vshll.u32 %v529, 16
      %v604 = vrot.slane %v602, 5
      %v605 = vsel %vm274, %v600, %v604
      %v607 = vshrl.u32 %v530, 16
      %v609 = vrot.slane %v607, 4
      %v610 = vshll.u32 %v530, 16
      %v612 = vrot.slane %v610, 5
      %v613 = vor.u32 %v609, %v612
      %v614 = vrot.slane %v613, 4
      %v616 = vshll.u32 %v531, 16
      %v618 = vrot.slane %v616, 5
      %v619 = vsel %vm274, %v614, %v618
      %v621 = vshrl.u32 %v532, 16
      %v623 = vrot.slane %v621, 4
      %v624 = vshll.u32 %v532, 16
      %v626 = vrot.slane %v624, 5
      %v627 = vor.u32 %v623, %v626
      %v628 = vrot.slane %v627, 4
      %v630 = vshll.u32 %v533, 16
      %v632 = vrot.slane %v630, 5
      %v633 = vsel %vm274, %v628, %v632
      %v635 = vshrl.u32 %v534, 16
      %v637 = vrot.slane %v635, 4
      %v638 = vshll.u32 %v534, 16
      %v640 = vrot.slane %v638, 5
      %v641 = vor.u32 %v637, %v640
      %v642 = vrot.slane %v641, 4
      %v644 = vshll.u32 %v535, 16
      %v646 = vrot.slane %v644, 5
      %v647 = vsel %vm274, %v642, %v646
      %648 = vrot.lane.b32.xlu0 %v549, 20
      %v649 = vpop.permute.xlu0 %648
      %650 = vrot.lane.b32.xlu0 %v563, 20
      %v651 = vpop.permute.xlu0 %650
      %652 = vrot.lane.b32.xlu0 %v577, 20
      %v653 = vpop.permute.xlu0 %652
      %654 = vrot.lane.b32.xlu0 %v591, 20
      %v655 = vpop.permute.xlu0 %654
      %656 = vrot.lane.b32.xlu0 %v605, 20
      %v657 = vpop.permute.xlu0 %656
      %658 = vrot.lane.b32.xlu0 %v619, 20
      %v659 = vpop.permute.xlu0 %658
      %660 = vrot.lane.b32.xlu0 %v633, 20
      %v661 = vpop.permute.xlu0 %660
      %662 = vrot.lane.b32.xlu0 %v647, 20
      %v663 = vpop.permute.xlu0 %662
      %vm672 = vcmask 191648
      %673 = vst.msk [vmem:[#allocation2] sm:$0xf] %vm672, %v649
      %674 = vst.msk [vmem:[#allocation2 + $0x4] sm:$0xf] %vm672, %v651
      %675 = vst.msk [vmem:[#allocation2 + $0x8] sm:$0xf] %vm672, %v653
      %676 = vst.msk [vmem:[#allocation2 + $0xc] sm:$0xf] %vm672, %v655
      %677 = vst.msk [vmem:[#allocation2 + $0x10] sm:$0xf] %vm672, %v657
      %678 = vst.msk [vmem:[#allocation2 + $0x14] sm:$0xf] %vm672, %v659
      %679 = vst.msk [vmem:[#allocation2 + $0x18] sm:$0xf] %vm672, %v661
      %680 = vst.msk [vmem:[#allocation2 + $0x1c] sm:$0xf] %vm672, %v663
      %s681 = scalar_lea.vmem %s176, 8
      %v682 = vld [vmem:[%s681] sm:$0xf]
      %v683 = vld [vmem:[%s681 + $0x8] sm:$0xf]
      %v684 = vld [vmem:[%s681 + $0x10] sm:$0xf]
      %v685 = vld [vmem:[%s681 + $0x18] sm:$0xf]
      %v686 = vld [vmem:[%s681 + $0x20] sm:$0xf]
      %v687 = vld [vmem:[%s681 + $0x28] sm:$0xf]
      %v688 = vld [vmem:[%s681 + $0x30] sm:$0xf]
      %v689 = vld [vmem:[%s681 + $0x38] sm:$0xf]
      %698 = vrot.lane.b32.xlu0 %v682, 24
      %v699 = vpop.permute.xlu0 %698
      %700 = vrot.lane.b32.xlu0 %v683, 24
      %v701 = vpop.permute.xlu0 %700
      %702 = vrot.lane.b32.xlu0 %v684, 24
      %v703 = vpop.permute.xlu0 %702
      %704 = vrot.lane.b32.xlu0 %v685, 24
      %v705 = vpop.permute.xlu0 %704
      %706 = vrot.lane.b32.xlu0 %v686, 24
      %v707 = vpop.permute.xlu0 %706
      %708 = vrot.lane.b32.xlu0 %v687, 24
      %v709 = vpop.permute.xlu0 %708
      %710 = vrot.lane.b32.xlu0 %v688, 24
      %v711 = vpop.permute.xlu0 %710
      %712 = vrot.lane.b32.xlu0 %v689, 24
      %v713 = vpop.permute.xlu0 %712
      %vm722 = vcmask 224448
      %723 = vst.msk [vmem:[#allocation2] sm:$0xf] %vm722, %v699
      %724 = vst.msk [vmem:[#allocation2 + $0x4] sm:$0xf] %vm722, %v701
      %725 = vst.msk [vmem:[#allocation2 + $0x8] sm:$0xf] %vm722, %v703
      %726 = vst.msk [vmem:[#allocation2 + $0xc] sm:$0xf] %vm722, %v705
      %727 = vst.msk [vmem:[#allocation2 + $0x10] sm:$0xf] %vm722, %v707
      %728 = vst.msk [vmem:[#allocation2 + $0x14] sm:$0xf] %vm722, %v709
      %729 = vst.msk [vmem:[#allocation2 + $0x18] sm:$0xf] %vm722, %v711
      %730 = vst.msk [vmem:[#allocation2 + $0x1c] sm:$0xf] %vm722, %v713
      %s731 = scalar_lea.vmem %s176, 80
      %v732 = vld [vmem:[%s731] sm:$0xf]
      %v733 = vld [vmem:[%s731 + $0x8] sm:$0xf]
      %v734 = vld [vmem:[%s731 + $0x10] sm:$0xf]
      %v735 = vld [vmem:[%s731 + $0x18] sm:$0xf]
      %v736 = vld [vmem:[%s731 + $0x20] sm:$0xf]
      %v737 = vld [vmem:[%s731 + $0x28] sm:$0xf]
      %v738 = vld [vmem:[%s731 + $0x30] sm:$0xf]
      %v739 = vld [vmem:[%s731 + $0x38] sm:$0xf]
      %748 = vrot.lane.b32.xlu0 %v732, 28
      %v749 = vpop.permute.xlu0 %748
      %750 = vrot.lane.b32.xlu0 %v733, 28
      %v751 = vpop.permute.xlu0 %750
      %752 = vrot.lane.b32.xlu0 %v734, 28
      %v753 = vpop.permute.xlu0 %752
      %754 = vrot.lane.b32.xlu0 %v735, 28
      %v755 = vpop.permute.xlu0 %754
      %756 = vrot.lane.b32.xlu0 %v736, 28
      %v757 = vpop.permute.xlu0 %756
      %758 = vrot.lane.b32.xlu0 %v737, 28
      %v759 = vpop.permute.xlu0 %758
      %760 = vrot.lane.b32.xlu0 %v738, 28
      %v761 = vpop.permute.xlu0 %760
      %762 = vrot.lane.b32.xlu0 %v739, 28
      %v763 = vpop.permute.xlu0 %762
      %vm772 = vcmask 257248
      %773 = vst.msk [vmem:[#allocation2] sm:$0xf] %vm772, %v749
      %774 = vst.msk [vmem:[#allocation2 + $0x4] sm:$0xf] %vm772, %v751
      %775 = vst.msk [vmem:[#allocation2 + $0x8] sm:$0xf] %vm772, %v753
      %776 = vst.msk [vmem:[#allocation2 + $0xc] sm:$0xf] %vm772, %v755
      %777 = vst.msk [vmem:[#allocation2 + $0x10] sm:$0xf] %vm772, %v757
      %778 = vst.msk [vmem:[#allocation2 + $0x14] sm:$0xf] %vm772, %v759
      %779 = vst.msk [vmem:[#allocation2 + $0x18] sm:$0xf] %vm772, %v761
      %780 = vst.msk [vmem:[#allocation2 + $0x1c] sm:$0xf] %vm772, %v763
      %v781 = vld [vmem:[%s681] sm:$0xf]
      %v782 = vld [vmem:[%s681 + $0x4] sm:$0x1]
      %v783 = vld [vmem:[%s681 + $0x8] sm:$0xf]
      %v784 = vld [vmem:[%s681 + $0xc] sm:$0x1]
      %v785 = vld [vmem:[%s681 + $0x10] sm:$0xf]
      %v786 = vld [vmem:[%s681 + $0x14] sm:$0x1]
      %v787 = vld [vmem:[%s681 + $0x18] sm:$0xf]
      %v788 = vld [vmem:[%s681 + $0x1c] sm:$0x1]
      %v789 = vld [vmem:[%s681 + $0x20] sm:$0xf]
      %v790 = vld [vmem:[%s681 + $0x24] sm:$0x1]
      %v791 = vld [vmem:[%s681 + $0x28] sm:$0xf]
      %v792 = vld [vmem:[%s681 + $0x2c] sm:$0x1]
      %v793 = vld [vmem:[%s681 + $0x30] sm:$0xf]
      %v794 = vld [vmem:[%s681 + $0x34] sm:$0x1]
      %v795 = vld [vmem:[%s681 + $0x38] sm:$0xf]
      %v796 = vld [vmem:[%s681 + $0x3c] sm:$0x1]
      %v798 = vshrl.u32 %v781, 16
      %v800 = vrot.slane %v798, 4
      %v801 = vshll.u32 %v781, 16
      %v803 = vrot.slane %v801, 5
      %v804 = vor.u32 %v800, %v803
      %v805 = vrot.slane %v804, 4
      %v807 = vshll.u32 %v782, 16
      %v809 = vrot.slane %v807, 5
      %v810 = vsel %vm274, %v805, %v809
      %v812 = vshrl.u32 %v783, 16
      %v814 = vrot.slane %v812, 4
      %v815 = vshll.u32 %v783, 16
      %v817 = vrot.slane %v815, 5
      %v818 = vor.u32 %v814, %v817
      %v819 = vrot.slane %v818, 4
      %v821 = vshll.u32 %v784, 16
      %v823 = vrot.slane %v821, 5
      %v824 = vsel %vm274, %v819, %v823
      %v826 = vshrl.u32 %v785, 16
      %v828 = vrot.slane %v826, 4
      %v829 = vshll.u32 %v785, 16
      %v831 = vrot.slane %v829, 5
      %v832 = vor.u32 %v828, %v831
      %v833 = vrot.slane %v832, 4
      %v835 = vshll.u32 %v786, 16
      %v837 = vrot.slane %v835, 5
      %v838 = vsel %vm274, %v833, %v837
      %v840 = vshrl.u32 %v787, 16
      %v842 = vrot.slane %v840, 4
      %v843 = vshll.u32 %v787, 16
      %v845 = vrot.slane %v843, 5
      %v846 = vor.u32 %v842, %v845
      %v847 = vrot.slane %v846, 4
      %v849 = vshll.u32 %v788, 16
      %v851 = vrot.slane %v849, 5
      %v852 = vsel %vm274, %v847, %v851
      %v854 = vshrl.u32 %v789, 16
      %v856 = vrot.slane %v854, 4
      %v857 = vshll.u32 %v789, 16
      %v859 = vrot.slane %v857, 5
      %v860 = vor.u32 %v856, %v859
      %v861 = vrot.slane %v860, 4
      %v863 = vshll.u32 %v790, 16
      %v865 = vrot.slane %v863, 5
      %v866 = vsel %vm274, %v861, %v865
      %v868 = vshrl.u32 %v791, 16
      %v870 = vrot.slane %v868, 4
      %v871 = vshll.u32 %v791, 16
      %v873 = vrot.slane %v871, 5
      %v874 = vor.u32 %v870, %v873
      %v875 = vrot.slane %v874, 4
      %v877 = vshll.u32 %v792, 16
      %v879 = vrot.slane %v877, 5
      %v880 = vsel %vm274, %v875, %v879
      %v882 = vshrl.u32 %v793, 16
      %v884 = vrot.slane %v882, 4
      %v885 = vshll.u32 %v793, 16
      %v887 = vrot.slane %v885, 5
      %v888 = vor.u32 %v884, %v887
      %v889 = vrot.slane %v888, 4
      %v891 = vshll.u32 %v794, 16
      %v893 = vrot.slane %v891, 5
      %v894 = vsel %vm274, %v889, %v893
      %v896 = vshrl.u32 %v795, 16
      %v898 = vrot.slane %v896, 4
      %v899 = vshll.u32 %v795, 16
      %v901 = vrot.slane %v899, 5
      %v902 = vor.u32 %v898, %v901
      %v903 = vrot.slane %v902, 4
      %v905 = vshll.u32 %v796, 16
      %v907 = vrot.slane %v905, 5
      %v908 = vsel %vm274, %v903, %v907
      %909 = vrot.lane.b32.xlu0 %v810, 32
      %v910 = vpop.permute.xlu0 %909
      %911 = vrot.lane.b32.xlu0 %v824, 32
      %v912 = vpop.permute.xlu0 %911
      %913 = vrot.lane.b32.xlu0 %v838, 32
      %v914 = vpop.permute.xlu0 %913
      %915 = vrot.lane.b32.xlu0 %v852, 32
      %v916 = vpop.permute.xlu0 %915
      %917 = vrot.lane.b32.xlu0 %v866, 32
      %v918 = vpop.permute.xlu0 %917
      %919 = vrot.lane.b32.xlu0 %v880, 32
      %v920 = vpop.permute.xlu0 %919
      %921 = vrot.lane.b32.xlu0 %v894, 32
      %v922 = vpop.permute.xlu0 %921
      %923 = vrot.lane.b32.xlu0 %v908, 32
      %v924 = vpop.permute.xlu0 %923
      %vm933 = vcmask 290048
      %934 = vst.msk [vmem:[#allocation2] sm:$0xf] %vm933, %v910
      %935 = vst.msk [vmem:[#allocation2 + $0x4] sm:$0xf] %vm933, %v912
      %936 = vst.msk [vmem:[#allocation2 + $0x8] sm:$0xf] %vm933, %v914
      %937 = vst.msk [vmem:[#allocation2 + $0xc] sm:$0xf] %vm933, %v916
      %938 = vst.msk [vmem:[#allocation2 + $0x10] sm:$0xf] %vm933, %v918
      %939 = vst.msk [vmem:[#allocation2 + $0x14] sm:$0xf] %vm933, %v920
      %940 = vst.msk [vmem:[#allocation2 + $0x18] sm:$0xf] %vm933, %v922
      %941 = vst.msk [vmem:[#allocation2 + $0x1c] sm:$0xf] %vm933, %v924
      %v942 = vld [vmem:[#allocation2] sm:$0xf]
      %v943 = vld [vmem:[#allocation2 + $0x4] sm:$0xf]
      %v944 = vld [vmem:[#allocation2 + $0x8] sm:$0xf]
      %v945 = vld [vmem:[#allocation2 + $0xc] sm:$0xf]
      %v946 = vld [vmem:[#allocation2 + $0x10] sm:$0xf]
      %v947 = vld [vmem:[#allocation2 + $0x14] sm:$0xf]
      %v948 = vld [vmem:[#allocation2 + $0x18] sm:$0xf]
      %v949 = vld [vmem:[#allocation2 + $0x1c] sm:$0xf]
      %v950 = vld [vmem:[%s1] sm:$0xf]
      %v951 = vld [vmem:[%s1 + $0x4] sm:$0xf]
      %v952 = vld [vmem:[%s1 + $0x8] sm:$0xf]
      %v953 = vld [vmem:[%s1 + $0xc] sm:$0xf]
      %v954 = vld [vmem:[%s1 + $0x10] sm:$0x3]
      %v963 = vunpack.c.l.b16 %v942
      %v964 = vunpack.c.l.b16 %v943
      %v965 = vunpack.c.l.b16 %v944
      %v966 = vunpack.c.l.b16 %v945
      %v967 = vunpack.c.l.b16 %v946
      %v968 = vunpack.c.l.b16 %v947
      %v969 = vunpack.c.l.b16 %v948
      %v970 = vunpack.c.l.b16 %v949
      %v971 = vpack.c.b16 %v964, %v963
      %v972 = vpack.c.b16 %v966, %v965
      %v973 = vpack.c.b16 %v968, %v967
      %v974 = vpack.c.b16 %v970, %v969
      %v980 = vunpack.c.l.b16 %v950
      %v981 = vunpack.c.l.b16 %v951
      %v982 = vunpack.c.l.b16 %v952
      %v983 = vunpack.c.l.b16 %v953
      %v984 = vunpack.c.l.b16 %v954
      %v985 = vpack.c.b16 %v981, %v980
      %v986 = vpack.c.b16 %v983, %v982
      %v987 = vpack.c.b16 %v984, %v984
      %vm990 = vcmask 293888
      %v992 = vsel %vm990, %v971, 0
      %v995 = vsel %vm990, %v972, 0
      %v998 = vsel %vm990, %v973, 0
      %v1001 = vsel %vm990, %v974, 0
      %vm1003 = vcmask 1041408
      %v1005 = vsel %vm1003, %v987, 0
      %1007 = vmatpush.bf16.msra.mxu0 0
      %1008 = vmatpush.bf16.msra.mxu0 0
      %1009 = vmatpush.bf16.msra.mxu0 0
      %1010 = vmatpush.bf16.msra.mxu0 0
      %1011 = vmatpush.bf16.msra.mxu0 0
      %1012 = vmatpush.bf16.msra.mxu0 %v1005
      %1013 = vmatpush.bf16.msra.mxu0 %v986
      %1014 = vmatpush.bf16.msra.mxu0 %v985
      %1015 = vmatmul.bf16.gmra.mxu0 %v992
      %v1016 = vpop.f32.mrf.mxu0
      %v1017 = vadd.f32 0.0, %v1016
      %v1018 = vpop.f32.mrf.mxu0
      %v1019 = vadd.f32 0.0, %v1018
      %1020 = vmatmul.bf16.gmra.mxu0 %v995
      %v1021 = vpop.f32.mrf.mxu0
      %v1022 = vadd.f32 0.0, %v1021
      %v1023 = vpop.f32.mrf.mxu0
      %v1024 = vadd.f32 0.0, %v1023
      %1025 = vmatmul.bf16.gmra.mxu0 %v998
      %v1026 = vpop.f32.mrf.mxu0
      %v1027 = vadd.f32 0.0, %v1026
      %v1028 = vpop.f32.mrf.mxu0
      %v1029 = vadd.f32 0.0, %v1028
      %1030 = vmatmul.bf16.gmra.mxu0 %v1001
      %v1031 = vpop.f32.mrf.mxu0
      %v1032 = vadd.f32 0.0, %v1031
      %v1033 = vpop.f32.mrf.mxu0
      %v1034 = vadd.f32 0.0, %v1033
      %1035 = vdwg.mxu0
      %v1036 = vpack.c.bf16 %v1017, %v1017
      %v1037 = vpack.c.bf16 %v1019, %v1019
      %v1038 = vpack.c.bf16 %v1022, %v1022
      %v1039 = vpack.c.bf16 %v1024, %v1024
      %v1040 = vpack.c.bf16 %v1027, %v1027
      %v1041 = vpack.c.bf16 %v1029, %v1029
      %v1042 = vpack.c.bf16 %v1032, %v1032
      %v1043 = vpack.c.bf16 %v1034, %v1034
      %vm1044 = vcmask 60416
      %1045 = vst.msk [vmem:[%s182] sm:$0xf] %vm1044, %v1036
      %1046 = vst.msk [vmem:[%s182 + $0x4] sm:$0xf] %vm1044, %v1037
      %1047 = vst.msk [vmem:[%s182 + $0x8] sm:$0xf] %vm1044, %v1038
      %1048 = vst.msk [vmem:[%s182 + $0xc] sm:$0xf] %vm1044, %v1039
      %1049 = vst.msk [vmem:[%s182 + $0x10] sm:$0xf] %vm1044, %v1040
      %1050 = vst.msk [vmem:[%s182 + $0x14] sm:$0xf] %vm1044, %v1041
      %1051 = vst.msk [vmem:[%s182 + $0x18] sm:$0xf] %vm1044, %v1042
      %1052 = vst.msk [vmem:[%s182 + $0x1c] sm:$0xf] %vm1044, %v1043
      %vm1053 = vcmask 64512
      %v1054 = vsel %vm1053, %v1017, 0.0
      %v1055 = vsel %vm1053, %v1019, 0.0
      %v1056 = vadd.f32 %v1054, %v1055
      %v1057 = vsel %vm1053, %v1022, 0.0
      %v1058 = vadd.f32 %v1056, %v1057
      %v1059 = vsel %vm1053, %v1024, 0.0
      %v1060 = vadd.f32 %v1058, %v1059
      %v1061 = vsel %vm1053, %v1027, 0.0
      %v1062 = vadd.f32 %v1060, %v1061
      %v1063 = vsel %vm1053, %v1029, 0.0
      %v1064 = vadd.f32 %v1062, %v1063
      %v1065 = vsel %vm1053, %v1032, 0.0
      %v1066 = vadd.f32 %v1064, %v1065
      %v1067 = vsel %vm1053, %v1034, 0.0
      %v1068 = vadd.f32 %v1066, %v1067
      %v1069 = vrot.slane %v1068, 4
      %v1070 = vadd.f32 %v1068, %v1069
      %v1071 = vrot.slane %v1070, 2
      %v1072 = vadd.f32 %v1070, %v1071
      %v1073 = vrot.slane %v1072, 1
      %v1074 = vadd.f32 %v1072, %v1073
      %v1075 = vmul.f32 %v1074, 0.015625
      %v1076 = vsub.f32 %v1017, %v1075
      %v1077 = vsub.f32 %v1019, %v1075
      %v1078 = vsub.f32 %v1022, %v1075
      %v1079 = vsub.f32 %v1024, %v1075
      %v1080 = vsub.f32 %v1027, %v1075
      %v1081 = vsub.f32 %v1029, %v1075
      %v1082 = vsub.f32 %v1032, %v1075
      %v1083 = vsub.f32 %v1034, %v1075
      %v1084 = vmul.f32 %v1076, %v1076
      %v1085 = vmul.f32 %v1077, %v1077
      %v1086 = vmul.f32 %v1078, %v1078
      %v1087 = vmul.f32 %v1079, %v1079
      %v1088 = vmul.f32 %v1080, %v1080
      %v1089 = vmul.f32 %v1081, %v1081
      %v1090 = vmul.f32 %v1082, %v1082
      %v1091 = vmul.f32 %v1083, %v1083
      %v1092 = vsel %vm1053, %v1084, 0.0
      %v1093 = vsel %vm1053, %v1085, 0.0
      %v1094 = vadd.f32 %v1092, %v1093
      %v1095 = vsel %vm1053, %v1086, 0.0
      %v1096 = vadd.f32 %v1094, %v1095
      %v1097 = vsel %vm1053, %v1087, 0.0
      %v1098 = vadd.f32 %v1096, %v1097
      %v1099 = vsel %vm1053, %v1088, 0.0
      %v1100 = vadd.f32 %v1098, %v1099
      %v1101 = vsel %vm1053, %v1089, 0.0
      %v1102 = vadd.f32 %v1100, %v1101
      %v1103 = vsel %vm1053, %v1090, 0.0
      %v1104 = vadd.f32 %v1102, %v1103
      %v1105 = vsel %vm1053, %v1091, 0.0
      %v1106 = vadd.f32 %v1104, %v1105
      %v1107 = vrot.slane %v1106, 4
      %v1108 = vadd.f32 %v1106, %v1107
      %v1109 = vrot.slane %v1108, 2
      %v1110 = vadd.f32 %v1108, %v1109
      %v1111 = vrot.slane %v1110, 1
      %v1112 = vadd.f32 %v1110, %v1111
      %vm1113 = vcmask 1040384
      %v1114 = vsel %vm1113, %v1074, %v1112
      %v1115 = vsel %vm1003, %v1114, 0.0
      %1116 = vst.msk [vmem:[%s187] sm:$0xff] %vm1053, %v1115
      %s1117 = smul.u32 8, %s15
      %p1118 = scmp.lt.s32.totalorder %s1117, 15
      %s1119 = scalar_select %p1118, %s1117, 15
      %s1120 = smul.addr %s1119, 4
      %s1121 = scalar_lea.vmem %s2, %s1120
      %p1122 = scmp.lt.s32.totalorder %s15, 1
      %s1123 = scalar_select %p1122, %s15, 1
      %s1124 = smul.addr %s1123, 8
      %s1125 = scalar_lea.vmem %s3, %s1124
      // Predicated region
      $region29: #{residual_block_forward.4} parent=27 // pred_check
        %p1126 = pneg %p80
      $region30: #{residual_block_forward.4} parent=27 // pred_check_branch
        %1128 = sbr.rel (%p1126) target = $region32
      $region31: #{residual_block_forward.4} parent=27 // pred_region
        %s1129 = smul.u32 8, %s15
      $region32: #{residual_block_forward.4} parent=27 // pred_fallthru
        _
      // Predicated region
      $region33: #{residual_block_forward.4} parent=27 // pred_check
        %p1130 = pneg %p106
      $region34: #{residual_block_forward.4} parent=27 // pred_check_branch
        %1132 = sbr.rel (%p1130) target = $region36
      $region35: #{residual_block_forward.4} parent=27 // pred_region
        _
      $region36: #{residual_block_forward.4} parent=27 // pred_fallthru
        _
    $region28: #{residual_block_forward.4} parent=5 // pred_fallthru
      _
    %p1133 = scmp.le.s32.totalorder 2, %s10
    // Predicated region
    $region37: #{residual_block_forward.4} parent=5 // pred_check
      %p1134 = pneg %p1133
    $region38: #{residual_block_forward.4} parent=5 // pred_check_branch
      %1136 = sbr.rel (%p1134) target = $region40
    $region39: #{residual_block_forward.4} parent=5 // pred_region
      %s1137 = ssub.s32 %s10, 2
      // Predicated region
      $region41: #{residual_block_forward.4} parent=39 // pred_check
        %p1138 = pneg %p86
      $region42: #{residual_block_forward.4} parent=39 // pred_check_branch
        %1140 = sbr.rel (%p1138) target = $region44
      $region43: #{residual_block_forward.4} parent=39 // pred_region
        %s1141 = smul.u32 8, %s16
        %p1142 = scmp.lt.s32.totalorder %s1141, 15
        %s1143 = scalar_select %p1142, %s1141, 15
        %s1144 = smul.addr %s1143, 4
        %s1145 = scalar_lea.vmem %s2, %s1144
      $region44: #{residual_block_forward.4} parent=39 // pred_fallthru
        _
      // Predicated region
      $region45: #{residual_block_forward.4} parent=39 // pred_check
        %p1146 = pneg %p112
      $region46: #{residual_block_forward.4} parent=39 // pred_check_branch
        %1148 = sbr.rel (%p1146) target = $region48
      $region47: #{residual_block_forward.4} parent=39 // pred_region
        %p1149 = scmp.lt.s32.totalorder %s16, 1
        %s1150 = scalar_select %p1149, %s16, 1
        %s1151 = smul.addr %s1150, 8
        %s1152 = scalar_lea.vmem %s3, %s1151
      $region48: #{residual_block_forward.4} parent=39 // pred_fallthru
        _
    $region40: #{residual_block_forward.4} parent=5 // pred_fallthru
      _
  $region6: #{residual_block_forward.4} parent=0 // loop_footer
    %s14 = sadd.s32 1, %s10
  $region7: #{residual_block_forward.4} parent=0 // loop_footer_branch
    %9 = sbr.rel target = $region3
  $region8: #{residual_block_forward.4} parent=0 // loop_exit
    _

// kernel: residual_block_forward.5
$region0: #{residual_block_forward.5}
  #allocation0 [shape = 'u32[]', space=smem, size = 0x4, offset = 0x4, fixed_abs, tag = 'smem constant byte address 0x4 - core index']
  #allocation1 [shape = 'u32[72,128]{1,0:T(1,128)}', space=vmem, size = 0x9000, scoped, tag = 'internal scratch']
  #allocation2 [shape = 'bf16[10,10,8]{2,1,0:T(8,128)(2,1)}', space=vmem, size = 0xa000, scoped, tag = 'scratch operand']
  #allocation3 [shape = 'bf16[64,72]{1,0:T(8,128)(2,1)}', space=vmem, size = 0x4000, scoped, tag = 'scratch operand']
  %s0 = inlined_call_operand.vmem [shape: bf16[2,8,8,8], index: 0, kind: input, shape index: {}]
  %s1 = inlined_call_operand.vmem [shape: f32[1,8], index: 1, kind: input, shape index: {}]
  %s2 = inlined_call_operand.vmem [shape: f32[1,8], index: 2, kind: input, shape index: {}]
  %s3 = inlined_call_operand.vmem [shape: bf16[72,8], index: 3, kind: input, shape index: {}]
  %s4 = inlined_call_operand.vmem [shape: bf16[128,8], index: 4, kind: output, shape index: {0}]
  %s5 = inlined_call_operand.vmem [shape: f32[2,8,8], index: 5, kind: output, shape index: {1}]
  %6 = xla_tuple %s4, %s5
  %s7 = sld [smem:[#allocation0]]
  $region57: #{residual_block_forward.5} parent=0
    _
  %s9 = ssub.s32 1, %s7
  %s10 = scalar_select 0, %s9, %s7
  loop: start=0, step=1, limit=4
  $region2: #{residual_block_forward.5} parent=0 // loop_pre_header
    _
  $region3: #{residual_block_forward.5} parent=0 // loop_header
    %s12 = sphi 0, %s16
    %p13 = scmp.ge.s32.totalorder %s12, 4
    %s22 = sphi 0, %s24
    %s25 = sphi 0, %s22
    %s26 = sphi 0, %s25
    %s42 = sphi 0, %s26
    %s46 = sphi 0, %s46
    %s48 = sphi 0, %s46
    %s49 = sphi 0, %s48
    %s63 = sphi 0, %s49
    %s67 = sphi 0, %s67
    %s69 = sphi 0, %s67
    %s70 = sphi 0, %s69
    %s84 = sphi 0, %s70
    %s88 = sphi 0, %s88
    %s90 = sphi 0, %s88
    %s91 = sphi 0, %s90
    %s105 = sphi 0, %s91
    %s111 = sphi 0, %s113
    %s114 = sphi 0, %s111
    %s115 = sphi 0, %s114
    %s131 = sphi 0, %s115
    %s137 = sphi 0, %s139
    %s140 = sphi 0, %s137
    %s141 = sphi 0, %s140
    %s157 = sphi 0, %s141
  $region4: #{residual_block_forward.5} parent=0 // loop_header_branch
    %15 = sbr.rel (%p13) target = $region8
  $region5: #{residual_block_forward.5} parent=0 // loop_body
    %s17 = ssub.s32 %s12, 1
    %s18 = ssub.s32 %s12, 2
    %s19 = sadd.s32 %s12, 1
    %s20 = ssub.s32 %s12, %s19
    %p21 = scmp.eq.s32.totalorder %s20, 0
    %s23 = sadd.s32 %s22, 1
    %s24 = scalar_select %p21, %s22, %s23
    %p27 = pneg %p21
    %p28 = scmp.eq.s32.totalorder %s12, 1
    %p29 = por %p27, %p28
    %p30 = scmp.ne.s32.totalorder %s22, %s25
    %p31 = scmp.eq.s32.totalorder %s12, 0
    %p32 = por %p30, %p31
    %p33 = scmp.ne.s32.totalorder %s22, %s25
    %p34 = scmp.eq.s32.totalorder %s17, 1
    %p35 = por %p33, %p34
    %p36 = scmp.ne.s32.totalorder %s25, %s26
    %p37 = scmp.eq.s32.totalorder %s17, 0
    %p38 = por %p36, %p37
    %p39 = scmp.ne.s32.totalorder %s25, %s26
    %p40 = scmp.eq.s32.totalorder %s18, 1
    %p41 = por %p39, %p40
    %p43 = scmp.ne.s32.totalorder %s26, %s42
    %p44 = scmp.eq.s32.totalorder %s18, 0
    %p45 = por %p43, %p44
    %s47 = sadd.s32 %s46, 1
    %p50 = scmp.eq.s32.totalorder %s12, 1
    %p51 = scmp.ne.s32.totalorder %s46, %s48
    %p52 = scmp.eq.s32.totalorder %s12, 0
    %p53 = por %p51, %p52
    %p54 = scmp.ne.s32.totalorder %s46, %s48
    %p55 = scmp.eq.s32.totalorder %s17, 1
    %p56 = por %p54, %p55
    %p57 = scmp.ne.s32.totalorder %s48, %s49
    %p58 = scmp.eq.s32.totalorder %s17, 0
    %p59 = por %p57, %p58
    %p60 = scmp.ne.s32.totalorder %s48, %s49
    %p61 = scmp.eq.s32.totalorder %s18, 1
    %p62 = por %p60, %p61
    %p64 = scmp.ne.s32.totalorder %s49, %s63
    %p65 = scmp.eq.s32.totalorder %s18, 0
    %p66 = por %p64, %p65
    %s68 = sadd.s32 %s67, 1
    %p71 = scmp.eq.s32.totalorder %s12, 1
    %p72 = scmp.ne.s32.totalorder %s67, %s69
    %p73 = scmp.eq.s32.totalorder %s12, 0
    %p74 = por %p72, %p73
    %p75 = scmp.ne.s32.totalorder %s67, %s69
    %p76 = scmp.eq.s32.totalorder %s17, 1
    %p77 = por %p75, %p76
    %p78 = scmp.ne.s32.totalorder %s69, %s70
    %p79 = scmp.eq.s32.totalorder %s17, 0
    %p80 = por %p78, %p79
    %p81 = scmp.ne.s32.totalorder %s69, %s70
    %p82 = scmp.eq.s32.totalorder %s18, 1
    %p83 = por %p81, %p82
    %p85 = scmp.ne.s32.totalorder %s70, %s84
    %p86 = scmp.eq.s32.totalorder %s18, 0
    %p87 = por %p85, %p86
    %s89 = sadd.s32 %s88, 1
    %p92 = scmp.eq.s32.totalorder %s12, 1
    %p93 = scmp.ne.s32.totalorder %s88, %s90
    %p94 = scmp.eq.s32.totalorder %s12, 0
    %p95 = por %p93, %p94
    %p96 = scmp.ne.s32.totalorder %s88, %s90
    %p97 = scmp.eq.s32.totalorder %s17, 1
    %p98 = por %p96, %p97
    %p99 = scmp.ne.s32.totalorder %s90, %s91
    %p100 = scmp.eq.s32.totalorder %s17, 0
    %p101 = por %p99, %p100
    %p102 = scmp.ne.s32.totalorder %s90, %s91
    %p103 = scmp.eq.s32.totalorder %s18, 1
    %p104 = por %p102, %p103
    %p106 = scmp.ne.s32.totalorder %s91, %s105
    %p107 = scmp.eq.s32.totalorder %s18, 0
    %p108 = por %p106, %p107
    %s109 = ssub.s32 %s12, %s19
    %p110 = scmp.eq.s32.totalorder %s109, 0
    %s112 = sadd.s32 %s111, 1
    %s113 = scalar_select %p110, %s111, %s112
    %p116 = pneg %p110
    %p117 = scmp.eq.s32.totalorder %s12, 1
    %p118 = por %p116, %p117
    %p119 = scmp.ne.s32.totalorder %s111, %s114
    %p120 = scmp.eq.s32.totalorder %s12, 0
    %p121 = por %p119, %p120
    %p122 = scmp.ne.s32.totalorder %s111, %s114
    %p123 = scmp.eq.s32.totalorder %s17, 1
    %p124 = por %p122, %p123
    %p125 = scmp.ne.s32.totalorder %s114, %s115
    %p126 = scmp.eq.s32.totalorder %s17, 0
    %p127 = por %p125, %p126
    %p128 = scmp.ne.s32.totalorder %s114, %s115
    %p129 = scmp.eq.s32.totalorder %s18, 1
    %p130 = por %p128, %p129
    %p132 = scmp.ne.s32.totalorder %s115, %s131
    %p133 = scmp.eq.s32.totalorder %s18, 0
    %p134 = por %p132, %p133
    %s135 = ssub.s32 %s12, %s19
    %p136 = scmp.eq.s32.totalorder %s135, 0
    %s138 = sadd.s32 %s137, 1
    %s139 = scalar_select %p136, %s137, %s138
    %p142 = pneg %p136
    %p143 = scmp.eq.s32.totalorder %s12, 1
    %p144 = por %p142, %p143
    %p145 = scmp.ne.s32.totalorder %s137, %s140
    %p146 = scmp.eq.s32.totalorder %s12, 0
    %p147 = por %p145, %p146
    %p148 = scmp.ne.s32.totalorder %s137, %s140
    %p149 = scmp.eq.s32.totalorder %s17, 1
    %p150 = por %p148, %p149
    %p151 = scmp.ne.s32.totalorder %s140, %s141
    %p152 = scmp.eq.s32.totalorder %s17, 0
    %p153 = por %p151, %p152
    %p154 = scmp.ne.s32.totalorder %s140, %s141
    %p155 = scmp.eq.s32.totalorder %s18, 1
    %p156 = por %p154, %p155
    %p158 = scmp.ne.s32.totalorder %s141, %s157
    %p159 = scmp.eq.s32.totalorder %s18, 0
    %p160 = por %p158, %p159
    %p161 = scmp.le.s32.totalorder 1, %s12
    %p162 = scmp.lt.s32.totalorder %s12, 3
    %p163 = pnand %p161, %p162
    %p164 = pneg %p163
    // Predicated region
    $region9: #{residual_block_forward.5} parent=5 // pred_check
      _
    $region10: #{residual_block_forward.5} parent=5 // pred_check_branch
      %166 = sbr.rel (%p163) target = $region12
    $region11: #{residual_block_forward.5} parent=5 // pred_region
      %s167 = ssub.s32 %s12, 1
      // Predicated region
      $region13: #{residual_block_forward.5} parent=11 // pred_check
        %p168 = pneg %p59
      $region14: #{residual_block_forward.5} parent=11 // pred_check_branch
        %170 = sbr.rel (%p168) target = $region16
      $region15: #{residual_block_forward.5} parent=11 // pred_region
        _
      $region16: #{residual_block_forward.5} parent=11 // pred_fallthru
        _
      // Predicated region
      $region17: #{residual_block_forward.5} parent=11 // pred_check
        %p171 = pneg %p80
      $region18: #{residual_block_forward.5} parent=11 // pred_check_branch
        %173 = sbr.rel (%p171) target = $region20
      $region19: #{residual_block_forward.5} parent=11 // pred_region
        _
      $region20: #{residual_block_forward.5} parent=11 // pred_fallthru
        _
      // Predicated region
      $region21: #{residual_block_forward.5} parent=11 // pred_check
        %p174 = pneg %p101
      $region22: #{residual_block_forward.5} parent=11 // pred_check_branch
        %176 = sbr.rel (%p174) target = $region24
      $region23: #{residual_block_forward.5} parent=11 // pred_region
        _
      $region24: #{residual_block_forward.5} parent=11 // pred_fallthru
        _
    $region12: #{residual_block_forward.5} parent=5 // pred_fallthru
      _
    %p177 = scmp.lt.s32.totalorder %s12, 2
    // Predicated region
    $region25: #{residual_block_forward.5} parent=5 // pred_check
      %p178 = pneg %p177
    $region26: #{residual_block_forward.5} parent=5 // pred_check_branch
      %180 = sbr.rel (%p178) target = $region28
    $region27: #{residual_block_forward.5} parent=5 // pred_region
      // Predicated region
      $region29: #{residual_block_forward.5} parent=27 // pred_check
        %p181 = pneg %p32
      $region30: #{residual_block_forward.5} parent=27 // pred_check_branch
        %183 = sbr.rel (%p181) target = $region32
      $region31: #{residual_block_forward.5} parent=27 // pred_region
        %p184 = scmp.lt.s32.totalorder %s12, 1
        %s185 = scalar_select %p184, %s12, 1
        %s186 = smul.addr %s185, 8
        %s187 = smul.addr %s186, 4
        %s188 = scalar_lea.vmem %s0, %s187
      $region32: #{residual_block_forward.5} parent=27 // pred_fallthru
        _
    $region28: #{residual_block_forward.5} parent=5 // pred_fallthru
      _
    %p189 = scmp.le.s32.totalorder 1, %s12
    %p190 = scmp.lt.s32.totalorder %s12, 3
    %p191 = pnand %p189, %p190
    %p192 = pneg %p191
    // Predicated region
    $region33: #{residual_block_forward.5} parent=5 // pred_check
      _
    $region34: #{residual_block_forward.5} parent=5 // pred_check_branch
      %194 = sbr.rel (%p191) target = $region36
    $region35: #{residual_block_forward.5} parent=5 // pred_region
      %s195 = ssub.s32 %s12, 1
      %p196 = scmp.lt.s32.totalorder %s17, 1
      %s197 = scalar_select %p196, %s17, 1
      %s198 = smul.addr %s197, 8
      %s199 = smul.addr %s198, 4
      %s200 = scalar_lea.vmem %s0, %s199
      %p201 = pneg %p38
      %p202 = pneg %p35
      %p203 = pneg %p59
      %p204 = pneg %p56
      %p205 = pneg %p80
      %p206 = pneg %p77
      %p207 = pneg %p101
      %p208 = pneg %p98
      %p209 = pneg %p127
      %p210 = pneg %p124
      %s211 = smul.u32 8, %s17
      %p212 = scmp.lt.s32.totalorder %s211, 15
      %s213 = scalar_select %p212, %s211, 15
      %s214 = smul.addr %s213, 4
      %s215 = scalar_lea.vmem %s4, %s214
      %p216 = pneg %p153
      %p217 = pneg %p150
      %p218 = scmp.lt.s32.totalorder %s17, 1
      %s219 = scalar_select %p218, %s17, 1
      %s220 = smul.addr %s219, 8
      %s221 = scalar_lea.vmem %s5, %s220
      %p222 = scmp.lt.s32.totalorder %s17, 1
      %s223 = scalar_select %p222, %s17, 1
      %s224 = smul.addr %s223, 8
      %s225 = smul.addr %s224, 4
      %s226 = scalar_lea.vmem %s0, %s225
      %s227 = smul.u32 8, %s17
      %p228 = scmp.lt.s32.totalorder %s227, 15
      %s229 = scalar_select %p228, %s227, 15
      %s230 = smul.addr %s229, 4
      %s231 = scalar_lea.vmem %s4, %s230
      %s232 = smul.u32 8, %s17
      %p233 = scmp.lt.s32.totalorder %s17, 1
      %s234 = scalar_select %p233, %s17, 1
      %s235 = smul.addr %s234, 8
      %s236 = scalar_lea.vmem %s5, %s235
      %v238 = vld [vmem:[%s226] sm:$0xf]
      %v239 = vld [vmem:[%s226 + $0x4] sm:$0xf]
      %v240 = vld [vmem:[%s226 + $0x8] sm:$0xf]
      %v241 = vld [vmem:[%s226 + $0xc] sm:$0xf]
      %v242 = vld [vmem:[%s226 + $0x10] sm:$0xf]
      %v243 = vld [vmem:[%s226 + $0x14] sm:$0xf]
      %v244 = vld [vmem:[%s226 + $0x18] sm:$0xf]
      %v245 = vld [vmem:[%s226 + $0x1c] sm:$0xf]
      %v246 = vunpack.c.l.bf16 %v238
      %v247 = vunpack.c.l.bf16 %v239
      %v248 = vunpack.c.l.bf16 %v240
      %v249 = vunpack.c.l.bf16 %v241
      %v250 = vunpack.c.l.bf16 %v242
      %v251 = vunpack.c.l.bf16 %v243
      %v252 = vunpack.c.l.bf16 %v244
      %v253 = vunpack.c.l.bf16 %v245
      %v254 = vld [vmem:[%s1] sm:$0x1]
      %v256 = vperm.slane %v254, 0
      %v258 = vmul.f32 %v246, %v256
      %v259 = vmul.f32 %v247, %v256
      %v260 = vmul.f32 %v248, %v256
      %v261 = vmul.f32 %v249, %v256
      %v262 = vmul.f32 %v250, %v256
      %v263 = vmul.f32 %v251, %v256
      %v264 = vmul.f32 %v252, %v256
      %v265 = vmul.f32 %v253, %v256
      %v266 = vld [vmem:[%s2] sm:$0x1]
      %v268 = vperm.slane %v266, 0
      %v270 = vadd.f32 %v258, %v268
      %v271 = vadd.f32 %v259, %v268
      %v272 = vadd.f32 %v260, %v268
      %v273 = vadd.f32 %v261, %v268
      %v274 = vadd.f32 %v262, %v268
      %v275 = vadd.f32 %v263, %v268
      %v276 = vadd.f32 %v264, %v268
      %v277 = vadd.f32 %v265, %v268
      %v278 = vmax.f32 %v270, 0.0
      %v279 = vmax.f32 %v271, 0.0
      %v280 = vmax.f32 %v272, 0.0
      %v281 = vmax.f32 %v273, 0.0
      %v282 = vmax.f32 %v274, 0.0
      %v283 = vmax.f32 %v275, 0.0
      %v284 = vmax.f32 %v276, 0.0
      %v285 = vmax.f32 %v277, 0.0
      %vm286 = vcmask 60416
      %287 = vst.msk [vmem:[#allocation2] sm:$0xf] %vm286, 0
      %vm288 = vcmask 57344
      %289 = vst.msk [vmem:[#allocation2 + $0x4] sm:$0x1] %vm288, 0
      %290 = vst.msk [vmem:[#allocation2 + $0x8] sm:$0xf] %vm286, 0
      %291 = vst.msk [vmem:[#allocation2 + $0xc] sm:$0x1] %vm288, 0
      %292 = vst.msk [vmem:[#allocation2 + $0x10] sm:$0xf] %vm286, 0
      %293 = vst.msk [vmem:[#allocation2 + $0x14] sm:$0x1] %vm288, 0
      %294 = vst.msk [vmem:[#allocation2 + $0x18] sm:$0xf] %vm286, 0
      %295 = vst.msk [vmem:[#allocation2 + $0x1c] sm:$0x1] %vm288, 0
      %296 = vst.msk [vmem:[#allocation2 + $0x20] sm:$0xf] %vm286, 0
      %297 = vst.msk [vmem:[#allocation2 + $0x24] sm:$0x1] %vm288, 0
      %298 = vst.msk [vmem:[#allocation2 + $0x28] sm:$0xf] %vm286, 0
      %299 = vst.msk [vmem:[#allocation2 + $0x2c] sm:$0x1] %vm288, 0
      %300 = vst.msk [vmem:[#allocation2 + $0x30] sm:$0xf] %vm286, 0
      %301 = vst.msk [vmem:[#allocation2 + $0x34] sm:$0x1] %vm288, 0
      %302 = vst.msk [vmem:[#allocation2 + $0x38] sm:$0xf] %vm286, 0
      %303 = vst.msk [vmem:[#allocation2 + $0x3c] sm:$0x1] %vm288, 0
      %304 = vst.msk [vmem:[#allocation2 + $0x40] sm:$0xf] %vm286, 0
      %305 = vst.msk [vmem:[#allocation2 + $0x44] sm:$0x1] %vm288, 0
      %306 = vst.msk [vmem:[#allocation2 + $0x48] sm:$0xf] %vm286, 0
      %307 = vst.msk [vmem:[#allocation2 + $0x4c] sm:$0x1] %vm288, 0
      %v308 = vpack.c.bf16 %v278, %v278
      %v309 = vpack.c.bf16 %v279, %v279
      %v310 = vpack.c.bf16 %v280, %v280
      %v311 = vpack.c.bf16 %v281, %v281
      %v312 = vpack.c.bf16 %v282, %v282
      %v313 = vpack.c.bf16 %v283, %v283
      %v314 = vpack.c.bf16 %v284, %v284
      %v315 = vpack.c.bf16 %v285, %v285
      %v317 = vshrl.u32 %v308, 16
      %v319 = vrot.slane %v317, 7
      %v320 = vshll.u32 %v308, 16
      %v322 = vor.u32 %v319, %v320
      %v323 = vrot.slane %v319, 4
      %v325 = vshrl.u32 %v309, 16
      %v327 = vrot.slane %v325, 7
      %v328 = vshll.u32 %v309, 16
      %v330 = vor.u32 %v327, %v328
      %v331 = vrot.slane %v327, 4
      %v333 = vshrl.u32 %v310, 16
      %v335 = vrot.slane %v333, 7
      %v336 = vshll.u32 %v310, 16
      %v338 = vor.u32 %v335, %v336
      %v339 = vrot.slane %v335, 4
      %v341 = vshrl.u32 %v311, 16
      %v343 = vrot.slane %v341, 7
      %v344 = vshll.u32 %v311, 16
      %v346 = vor.u32 %v343, %v344
      %v347 = vrot.slane %v343, 4
      %v349 = vshrl.u32 %v312, 16
      %v351 = vrot.slane %v349, 7
      %v352 = vshll.u32 %v312, 16
      %v354 = vor.u32 %v351, %v352
      %v355 = vrot.slane %v351, 4
      %v357 = vshrl.u32 %v313, 16
      %v359 = vrot.slane %v357, 7
      %v360 = vshll.u32 %v313, 16
      %v362 = vor.u32 %v359, %v360
      %v363 = vrot.slane %v359, 4
      %v365 = vshrl.u32 %v314, 16
      %v367 = vrot.slane %v365, 7
      %v368 = vshll.u32 %v314, 16
      %v370 = vor.u32 %v367, %v368
      %v371 = vrot.slane %v367, 4
      %v373 = vshrl.u32 %v315, 16
      %v375 = vrot.slane %v373, 7
      %v376 = vshll.u32 %v315, 16
      %v378 = vor.u32 %v375, %v376
      %v379 = vrot.slane %v375, 4
      %s396 = scalar_lea.vmem [#allocation2], 8
      %vm397 = vcmask 60416
      %vm398 = vsmask.f32 7938
      %vm399 = vmand %vm397, %vm398
      %v400 = vld [vmem:[%s396] sm:$0xf]
      %v401 = vsel %vm399, %v322, %v400
      %402 = vst [vmem:[%s396] sm:$0xf] %v401
      %vm403 = vcmask 57344
      %vm404 = vsmask.f32 256
      %vm405 = vmand %vm403, %vm404
      %v406 = vld [vmem:[%s396 + $0x4] sm:$0x1]
      %v407 = vsel %vm405, %v323, %v406
      %408 = vst [vmem:[%s396 + $0x4] sm:$0x1] %v407
      %v409 = vld [vmem:[%s396 + $0x8] sm:$0xf]
      %v410 = vsel %vm399, %v330, %v409
      %411 = vst [vmem:[%s396 + $0x8] sm:$0xf] %v410
      %v412 = vld [vmem:[%s396 + $0xc] sm:$0x1]
      %v413 = vsel %vm405, %v331, %v412
      %414 = vst [vmem:[%s396 + $0xc] sm:$0x1] %v413
      %v415 = vld [vmem:[%s396 + $0x10] sm:$0xf]
      %v416 = vsel %vm399, %v338, %v415
      %417 = vst [vmem:[%s396 + $0x10] sm:$0xf] %v416
      %v418 = vld [vmem:[%s396 + $0x14] sm:$0x1]
      %v419 = vsel %vm405, %v339, %v418
      %420 = vst [vmem:[%s396 + $0x14] sm:$0x1] %v419
      %v421 = vld [vmem:[%s396 + $0x18] sm:$0xf]
      %v422 = vsel %vm399, %v346, %v421
      %423 = vst [vmem:[%s396 + $0x18] sm:$0xf] %v422
      %v424 = vld [vmem:[%s396 + $0x1c] sm:$0x1]
      %v425 = vsel %vm405, %v347, %v424
      %426 = vst [vmem:[%s396 + $0x1c] sm:$0x1] %v425
      %v427 = vld [vmem:[%s396 + $0x20] sm:$0xf]
      %v428 = vsel %vm399, %v354, %v427
      %429 = vst [vmem:[%s396 + $0x20] sm:$0xf] %v428
      %v430 = vld [vmem:[%s396 + $0x24] sm:$0x1]
      %v431 = vsel %vm405, %v355, %v430
      %432 = vst [vmem:[%s396 + $0x24] sm:$0x1] %v431
      %v433 = vld [vmem:[%s396 + $0x28] sm:$0xf]
      %v434 = vsel %vm399, %v362, %v433
      %435 = vst [vmem:[%s396 + $0x28] sm:$0xf] %v434
      %v436 = vld [vmem:[%s396 + $0x2c] sm:$0x1]
      %v437 = vsel %vm405, %v363, %v436
      %438 = vst [vmem:[%s396 + $0x2c] sm:$0x1] %v437
      %v439 = vld [vmem:[%s396 + $0x30] sm:$0xf]
      %v440 = vsel %vm399, %v370, %v439
      %441 = vst [vmem:[%s396 + $0x30] sm:$0xf] %v440
      %v442 = vld [vmem:[%s396 + $0x34] sm:$0x1]
      %v443 = vsel %vm405, %v371, %v442
      %444 = vst [vmem:[%s396 + $0x34] sm:$0x1] %v443
      %v445 = vld [vmem:[%s396 + $0x38] sm:$0xf]
      %v446 = vsel %vm399, %v378, %v445
      %447 = vst [vmem:[%s396 + $0x38] sm:$0xf] %v446
      %v448 = vld [vmem:[%s396 + $0x3c] sm:$0x1]
      %v449 = vsel %vm405, %v379, %v448
      %450 = vst [vmem:[%s396 + $0x3c] sm:$0x1] %v449
      %v451 = vld [vmem:[#allocation2] sm:$0xf]
      %v452 = vld [vmem:[#allocation2 + $0x8] sm:$0xf]
      %v453 = vld [vmem:[#allocation2 + $0x10] sm:$0xf]
      %v454 = vld [vmem:[#allocation2 + $0x18] sm:$0xf]
      %v455 = vld [vmem:[#allocation2 + $0x20] sm:$0xf]
      %v456 = vld [vmem:[#allocation2 + $0x28] sm:$0xf]
      %v457 = vld [vmem:[#allocation2 + $0x30] sm:$0xf]
      %v458 = vld [vmem:[#allocation2 + $0x38] sm:$0xf]
      %459 = vst.msk [vmem:[#allocation3] sm:$0xf] %vm286, %v451
      %460 = vst.msk [vmem:[#allocation3 + $0x4] sm:$0xf] %vm286, %v452
      %461 = vst.msk [vmem:[#allocation3 + $0x8] sm:$0xf] %vm286, %v453
      %462 = vst.msk [vmem:[#allocation3 + $0xc] sm:$0xf] %vm286, %v454
      %463 = vst.msk [vmem:[#allocation3 + $0x10] sm:$0xf] %vm286, %v455
      %464 = vst.msk [vmem:[#allocation3 + $0x14] sm:$0xf] %vm286, %v456
      %465 = vst.msk [vmem:[#allocation3 + $0x18] sm:$0xf] %vm286, %v457
      %466 = vst.msk [vmem:[#allocation3 + $0x1c] sm:$0xf] %vm286, %v458
      %v467 = vld [vmem:[#allocation2] sm:$0xf]
      %v468 = vld [vmem:[#allocation2 + $0x4] sm:$0x1]
      %v469 = vld [vmem:[#allocation2 + $0x8] sm:$0xf]
      %v470 = vld [vmem:[#allocation2 + $0xc] sm:$0x1]
      %v471 = vld [vmem:[#allocation2 + $0x10] sm:$0xf]
      %v472 = vld [vmem:[#allocation2 + $0x14] sm:$0x1]
      %v473 = vld [vmem:[#allocation2 + $0x18] sm:$0xf]
      %v474 = vld [vmem:[#allocation2 + $0x1c] sm:$0x1]
      %v475 = vld [vmem:[#allocation2 + $0x20] sm:$0xf]
      %v476 = vld [vmem:[#allocation2 + $0x24] sm:$0x1]
      %v477 = vld [vmem:[#allocation2 + $0x28] sm:$0xf]
      %v478 = vld [vmem:[#allocation2 + $0x2c] sm:$0x1]
      %v479 = vld [vmem:[#allocation2 + $0x30] sm:$0xf]
      %v480 = vld [vmem:[#allocation2 + $0x34] sm:$0x1]
      %v481 = vld [vmem:[#allocation2 + $0x38] sm:$0xf]
      %v482 = vld [vmem:[#allocation2 + $0x3c] sm:$0x1]
      %vm483 = vsmask.f32 3328
      %vm484 = vsmask.f32 7440
      %vm485 = vmor %vm483, %vm484
      %v487 = vshrl.u32 %v467, 16
      %v489 = vrot.slane %v487, 4
      %v490 = vshll.u32 %v467, 16
      %v492 = vrot.slane %v490, 5
      %v493 = vor.u32 %v489, %v492
      %v494 = vrot.slane %v493, 4
      %v496 = vshll.u32 %v468, 16
      %v498 = vrot.slane %v496, 5
      %v499 = vsel %vm485, %v494, %v498
      %v501 = vshrl.u32 %v469, 16
      %v503 = vrot.slane %v501, 4
      %v504 = vshll.u32 %v469, 16
      %v506 = vrot.slane %v504, 5
      %v507 = vor.u32 %v503, %v506
      %v508 = vrot.slane %v507, 4
      %v510 = vshll.u32 %v470, 16
      %v512 = vrot.slane %v510, 5
      %v513 = vsel %vm485, %v508, %v512
      %v515 = vshrl.u32 %v471, 16
      %v517 = vrot.slane %v515, 4
      %v518 = vshll.u32 %v471, 16
      %v520 = vrot.slane %v518, 5
      %v521 = vor.u32 %v517, %v520
      %v522 = vrot.slane %v521, 4
      %v524 = vshll.u32 %v472, 16
      %v526 = vrot.slane %v524, 5
      %v527 = vsel %vm485, %v522, %v526
      %v529 = vshrl.u32 %v473, 16
      %v531 = vrot.slane %v529, 4
      %v532 = vshll.u32 %v473, 16
      %v534 = vrot.slane %v532, 5
      %v535 = vor.u32 %v531, %v534
      %v536 = vrot.slane %v535, 4
      %v538 = vshll.u32 %v474, 16
      %v540 = vrot.slane %v538, 5
      %v541 = vsel %vm485, %v536, %v540
      %v543 = vshrl.u32 %v475, 16
      %v545 = vrot.slane %v543, 4
      %v546 = vshll.u32 %v475, 16
      %v548 = vrot.slane %v546, 5
      %v549 = vor.u32 %v545, %v548
      %v550 = vrot.slane %v549, 4
      %v552 = vshll.u32 %v476, 16
      %v554 = vrot.slane %v552, 5
      %v555 = vsel %vm485, %v550, %v554
      %v557 = vshrl.u32 %v477, 16
      %v559 = vrot.slane %v557, 4
      %v560 = vshll.u32 %v477, 16
      %v562 = vrot.slane %v560, 5
      %v563 = vor.u32 %v559, %v562
      %v564 = vrot.slane %v563, 4
      %v566 = vshll.u32 %v478, 16
      %v568 = vrot.slane %v566, 5
      %v569 = vsel %vm485, %v564, %v568
      %v571 = vshrl.u32 %v479, 16
      %v573 = vrot.slane %v571, 4
      %v574 = vshll.u32 %v479, 16
      %v576 = vrot.slane %v574, 5
      %v577 = vor.u32 %v573, %v576
      %v578 = vrot.slane %v577, 4
      %v580 = vshll.u32 %v480, 16
      %v582 = vrot.slane %v580, 5
      %v583 = vsel %vm485, %v578, %v582
      %v585 = vshrl.u32 %v481, 16
      %v587 = vrot.slane %v585, 4
      %v588 = vshll.u32 %v481, 16
      %v590 = vrot.slane %v588, 5
      %v591 = vor.u32 %v587, %v590
      %v592 = vrot.slane %v591, 4
      %v594 = vshll.u32 %v482, 16
      %v596 = vrot.slane %v594, 5
      %v597 = vsel %vm485, %v592, %v596
      %598 = vrot.lane.b32.xlu0 %v499, 8
      %v599 = vpop.permute.xlu0 %598
      %600 = vrot.lane.b32.xlu0 %v513, 8
      %v601 = vpop.permute.xlu0 %600
      %602 = vrot.lane.b32.xlu0 %v527, 8
      %v603 = vpop.permute.xlu0 %602
      %604 = vrot.lane.b32.xlu0 %v541, 8
      %v605 = vpop.permute.xlu0 %604
      %606 = vrot.lane.b32.xlu0 %v555, 8
      %v607 = vpop.permute.xlu0 %606
      %608 = vrot.lane.b32.xlu0 %v569, 8
      %v609 = vpop.permute.xlu0 %608
      %610 = vrot.lane.b32.xlu0 %v583, 8
      %v611 = vpop.permute.xlu0 %610
      %612 = vrot.lane.b32.xlu0 %v597, 8
      %v613 = vpop.permute.xlu0 %612
      %vm622 = vcmask 126016
      %623 = vst.msk [vmem:[#allocation3] sm:$0xf] %vm622, %v599
      %624 = vst.msk [vmem:[#allocation3 + $0x4] sm:$0xf] %vm622, %v601
      %625 = vst.msk [vmem:[#allocation3 + $0x8] sm:$0xf] %vm622, %v603
      %626 = vst.msk [vmem:[#allocation3 + $0xc] sm:$0xf] %vm622, %v605
      %627 = vst.msk [vmem:[#allocation3 + $0x10] sm:$0xf] %vm622, %v607
      %628 = vst.msk [vmem:[#allocation3 + $0x14] sm:$0xf] %vm622, %v609
      %629 = vst.msk [vmem:[#allocation3 + $0x18] sm:$0xf] %vm622, %v611
      %630 = vst.msk [vmem:[#allocation3 + $0x1c] sm:$0xf] %vm622, %v613
      %v631 = vld [vmem:[#allocation2] sm:$0xe]
      %v632 = vld [vmem:[#allocation2 + $0x4] sm:$0x1]
      %v633 = vld [vmem:[#allocation2 + $0x8] sm:$0xe]
      %v634 = vld [vmem:[#allocation2 + $0xc] sm:$0x1]
      %v635 = vld [vmem:[#allocation2 + $0x10] sm:$0xe]
      %v636 = vld [vmem:[#allocation2 + $0x14] sm:$0x1]
      %v637 = vld [vmem:[#allocation2 + $0x18] sm:$0xe]
      %v638 = vld [vmem:[#allocation2 + $0x1c] sm:$0x1]
      %v639 = vld [vmem:[#allocation2 + $0x20] sm:$0xe]
      %v640 = vld [vmem:[#allocation2 + $0x24] sm:$0x1]
      %v641 = vld [vmem:[#allocation2 + $0x28] sm:$0xe]
      %v642 = vld [vmem:[#allocation2 + $0x2c] sm:$0x1]
      %v643 = vld [vmem:[#allocation2 + $0x30] sm:$0xe]
      %v644 = vld [vmem:[#allocation2 + $0x34] sm:$0x1]
      %v645 = vld [vmem:[#allocation2 + $0x38] sm:$0xe]
      %v646 = vld [vmem:[#allocation2 + $0x3c] sm:$0x1]
      %vm663 = vcmask 1042432
      %vm664 = vcmask 1046532
      %vm665 = vmor %vm663, %vm664
      %v666 = vrot.slane %v631, 5
      %v667 = vrot.slane %v666, 4
      %v668 = vrot.slane %v632, 5
      %v669 = vsel %vm665, %v667, %v668
      %v670 = vrot.slane %v633, 5
      %v671 = vrot.slane %v670, 4
      %v672 = vrot.slane %v634, 5
      %v673 = vsel %vm665, %v671, %v672
      %v674 = vrot.slane %v635, 5
      %v675 = vrot.slane %v674, 4
      %v676 = vrot.slane %v636, 5
      %v677 = vsel %vm665, %v675, %v676
      %v678 = vrot.slane %v637, 5
      %v679 = vrot.slane %v678, 4
      %v680 = vrot.slane %v638, 5
      %v681 = vsel %vm665, %v679, %v680
      %v682 = vrot.slane %v639, 5
      %v683 = vrot.slane %v682, 4
      %v684 = vrot.slane %v640, 5
      %v685 = vsel %vm665, %v683, %v684
      %v686 = vrot.slane %v641, 5
      %v687 = vrot.slane %v686, 4
      %v688 = vrot.slane %v642, 5
      %v689 = vsel %vm665, %v687, %v688
      %v690 = vrot.slane %v643, 5
      %v691 = vrot.slane %v690, 4
      %v692 = vrot.slane %v644, 5
      %v693 = vsel %vm665, %v691, %v692
      %v694 = vrot.slane %v645, 5
      %v695 = vrot.slane %v694, 4
      %v696 = vrot.slane %v646, 5
      %v697 = vsel %vm665, %v695, %v696
      %698 = vrot.lane.b32.xlu0 %v669, 16
      %v699 = vpop.permute.xlu0 %698
      %700 = vrot.lane.b32.xlu0 %v673, 16
      %v701 = vpop.permute.xlu0 %700
      %702 = vrot.lane.b32.xlu0 %v677, 16
      %v703 = vpop.permute.xlu0 %702
      %704 = vrot.lane.b32.xlu0 %v681, 16
      %v705 = vpop.permute.xlu0 %704
      %706 = vrot.lane.b32.xlu0 %v685, 16
      %v707 = vpop.permute.xlu0 %706
      %708 = vrot.lane.b32.xlu0 %v689, 16
      %v709 = vpop.permute.xlu0 %708
      %710 = vrot.lane.b32.xlu0 %v693, 16
      %v711 = vpop.permute.xlu0 %710
      %712 = vrot.lane.b32.xlu0 %v697, 16
      %v713 = vpop.permute.xlu0 %712
      %vm722 = vcmask 191616
      %723 = vst.msk [vmem:[#allocation3] sm:$0xf] %vm722, %v699
      %724 = vst.msk [vmem:[#allocation3 + $0x4] sm:$0xf] %vm722, %v701
      %725 = vst.msk [vmem:[#allocation3 + $0x8] sm:$0xf] %vm722, %v703
      %726 = vst.msk [vmem:[#allocation3 + $0xc] sm:$0xf] %vm722, %v705
      %727 = vst.msk [vmem:[#allocation3 + $0x10] sm:$0xf] %vm722, %v707
      %728 = vst.msk [vmem:[#allocation3 + $0x14] sm:$0xf] %vm722, %v709
      %729 = vst.msk [vmem:[#allocation3 + $0x18] sm:$0xf] %vm722, %v711
      %730 = vst.msk [vmem:[#allocation3 + $0x1c] sm:$0xf] %vm722, %v713
      %v731 = vld [vmem:[%s396] sm:$0xf]
      %v732 = vld [vmem:[%s396 + $0x8] sm:$0xf]
      %v733 = vld [vmem:[%s396 + $0x10] sm:$0xf]
      %v734 = vld [vmem:[%s396 + $0x18] sm:$0xf]
      %v735 = vld [vmem:[%s396 + $0x20] sm:$0xf]
      %v736 = vld [vmem:[%s396 + $0x28] sm:$0xf]
      %v737 = vld [vmem:[%s396 + $0x30] sm:$0xf]
      %v738 = vld [vmem:[%s396 + $0x38] sm:$0xf]
      %747 = vrot.lane.b32.xlu0 %v731, 24
      %v748 = vpop.permute.xlu0 %747
      %749 = vrot.lane.b32.xlu0 %v732, 24
      %v750 = vpop.permute.xlu0 %749
      %751 = vrot.lane.b32.xlu0 %v733, 24
      %v752 = vpop.permute.xlu0 %751
      %753 = vrot.lane.b32.xlu0 %v734, 24
      %v754 = vpop.permute.xlu0 %753
      %755 = vrot.lane.b32.xlu0 %v735, 24
      %v756 = vpop.permute.xlu0 %755
      %757 = vrot.lane.b32.xlu0 %v736, 24
      %v758 = vpop.permute.xlu0 %757
      %759 = vrot.lane.b32.xlu0 %v737, 24
      %v760 = vpop.permute.xlu0 %759
      %761 = vrot.lane.b32.xlu0 %v738, 24
      %v762 = vpop.permute.xlu0 %761
      %vm771 = vcmask 257216
      %772 = vst.msk [vmem:[#allocation3] sm:$0xf] %vm771, %v748
      %773 = vst.msk [vmem:[#allocation3 + $0x4] sm:$0xf] %vm771, %v750
      %774 = vst.msk [vmem:[#allocation3 + $0x8] sm:$0xf] %vm771, %v752
      %775 = vst.msk [vmem:[#allocation3 + $0xc] sm:$0xf] %vm771, %v754
      %776 = vst.msk [vmem:[#allocation3 + $0x10] sm:$0xf] %vm771, %v756
      %777 = vst.msk [vmem:[#allocation3 + $0x14] sm:$0xf] %vm771, %v758
      %778 = vst.msk [vmem:[#allocation3 + $0x18] sm:$0xf] %vm771, %v760
      %779 = vst.msk [vmem:[#allocation3 + $0x1c] sm:$0xf] %vm771, %v762
      %v780 = vld [vmem:[%s396] sm:$0xf]
      %v781 = vld [vmem:[%s396 + $0x4] sm:$0x1]
      %v782 = vld [vmem:[%s396 + $0x8] sm:$0xf]
      %v783 = vld [vmem:[%s396 + $0xc] sm:$0x1]
      %v784 = vld [vmem:[%s396 + $0x10] sm:$0xf]
      %v785 = vld [vmem:[%s396 + $0x14] sm:$0x1]
      %v786 = vld [vmem:[%s396 + $0x18] sm:$0xf]
      %v787 = vld [vmem:[%s396 + $0x1c] sm:$0x1]
      %v788 = vld [vmem:[%s396 + $0x20] sm:$0xf]
      %v789 = vld [vmem:[%s396 + $0x24] sm:$0x1]
      %v790 = vld [vmem:[%s396 + $0x28] sm:$0xf]
      %v791 = vld [vmem:[%s396 + $0x2c] sm:$0x1]
      %v792 = vld [vmem:[%s396 + $0x30] sm:$0xf]
      %v793 = vld [vmem:[%s396 + $0x34] sm:$0x1]
      %v794 = vld [vmem:[%s396 + $0x38] sm:$0xf]
      %v795 = vld [vmem:[%s396 + $0x3c] sm:$0x1]
      %v797 = vshrl.u32 %v780, 16
      %v799 = vrot.slane %v797, 4
      %v800 = vshll.u32 %v780, 16
      %v802 = vrot.slane %v800, 5
      %v803 = vor.u32 %v799, %v802
      %v804 = vrot.slane %v803, 4
      %v806 = vshll.u32 %v781, 16
      %v808 = vrot.slane %v806, 5
      %v809 = vsel %vm485, %v804, %v808
      %v811 = vshrl.u32 %v782, 16
      %v813 = vrot.slane %v811, 4
      %v814 = vshll.u32 %v782, 16
      %v816 = vrot.slane %v814, 5
      %v817 = vor.u32 %v813, %v816
      %v818 = vrot.slane %v817, 4
      %v820 = vshll.u32 %v783, 16
      %v822 = vrot.slane %v820, 5
      %v823 = vsel %vm485, %v818, %v822
      %v825 = vshrl.u32 %v784, 16
      %v827 = vrot.slane %v825, 4
      %v828 = vshll.u32 %v784, 16
      %v830 = vrot.slane %v828, 5
      %v831 = vor.u32 %v827, %v830
      %v832 = vrot.slane %v831, 4
      %v834 = vshll.u32 %v785, 16
      %v836 = vrot.slane %v834, 5
      %v837 = vsel %vm485, %v832, %v836
      %v839 = vshrl.u32 %v786, 16
      %v841 = vrot.slane %v839, 4
      %v842 = vshll.u32 %v786, 16
      %v844 = vrot.slane %v842, 5
      %v845 = vor.u32 %v841, %v844
      %v846 = vrot.slane %v845, 4
      %v848 = vshll.u32 %v787, 16
      %v850 = vrot.slane %v848, 5
      %v851 = vsel %vm485, %v846, %v850
      %v853 = vshrl.u32 %v788, 16
      %v855 = vrot.slane %v853, 4
      %v856 = vshll.u32 %v788, 16
      %v858 = vrot.slane %v856, 5
      %v859 = vor.u32 %v855, %v858
      %v860 = vrot.slane %v859, 4
      %v862 = vshll.u32 %v789, 16
      %v864 = vrot.slane %v862, 5
      %v865 = vsel %vm485, %v860, %v864
      %v867 = vshrl.u32 %v790, 16
      %v869 = vrot.slane %v867, 4
      %v870 = vshll.u32 %v790, 16
      %v872 = vrot.slane %v870, 5
      %v873 = vor.u32 %v869, %v872
      %v874 = vrot.slane %v873, 4
      %v876 = vshll.u32 %v791, 16
      %v878 = vrot.slane %v876, 5
      %v879 = vsel %vm485, %v874, %v878
      %v881 = vshrl.u32 %v792, 16
      %v883 = vrot.slane %v881, 4
      %v884 = vshll.u32 %v792, 16
      %v886 = vrot.slane %v884, 5
      %v887 = vor.u32 %v883, %v886
      %v888 = vrot.slane %v887, 4
      %v890 = vshll.u32 %v793, 16
      %v892 = vrot.slane %v890, 5
      %v893 = vsel %vm485, %v888, %v892
      %v895 = vshrl.u32 %v794, 16
      %v897 = vrot.slane %v895, 4
      %v898 = vshll.u32 %v794, 16
      %v900 = vrot.slane %v898, 5
      %v901 = vor.u32 %v897, %v900
      %v902 = vrot.slane %v901, 4
      %v904 = vshll.u32 %v795, 16
      %v906 = vrot.slane %v904, 5
      %v907 = vsel %vm485, %v902, %v906
      %908 = vrot.lane.b32.xlu0 %v809, 32
      %v909 = vpop.permute.xlu0 %908
      %910 = vrot.lane.b32.xlu0 %v823, 32
      %v911 = vpop.permute.xlu0 %910
      %912 = vrot.lane.b32.xlu0 %v837, 32
      %v913 = vpop.permute.xlu0 %912
      %914 = vrot.lane.b32.xlu0 %v851, 32
      %v915 = vpop.permute.xlu0 %914
      %916 = vrot.lane.b32.xlu0 %v865, 32
      %v917 = vpop.permute.xlu0 %916
      %918 = vrot.lane.b32.xlu0 %v879, 32
      %v919 = vpop.permute.xlu0 %918
      %920 = vrot.lane.b32.xlu0 %v893, 32
      %v921 = vpop.permute.xlu0 %920
      %922 = vrot.lane.b32.xlu0 %v907, 32
      %v923 = vpop.permute.xlu0 %922
      %vm932 = vcmask 322816
      %933 = vst.msk [vmem:[#allocation3] sm:$0xf] %vm932, %v909
      %934 = vst.msk [vmem:[#allocation3 + $0x4] sm:$0xf] %vm932, %v911
      %935 = vst.msk [vmem:[#allocation3 + $0x8] sm:$0xf] %vm932, %v913
      %936 = vst.msk [vmem:[#allocation3 + $0xc] sm:$0xf] %vm932, %v915
      %937 = vst.msk [vmem:[#allocation3 + $0x10] sm:$0xf] %vm932, %v917
      %938 = vst.msk [vmem:[#allocation3 + $0x14] sm:$0xf] %vm932, %v919
      %939 = vst.msk [vmem:[#allocation3 + $0x18] sm:$0xf] %vm932, %v921
      %940 = vst.msk [vmem:[#allocation3 + $0x1c] sm:$0xf] %vm932, %v923
      %v941 = vld [vmem:[%s396] sm:$0xe]
      %v942 = vld [vmem:[%s396 + $0x4] sm:$0x1]
      %v943 = vld [vmem:[%s396 + $0x8] sm:$0xe]
      %v944 = vld [vmem:[%s396 + $0xc] sm:$0x1]
      %v945 = vld [vmem:[%s396 + $0x10] sm:$0xe]
      %v946 = vld [vmem:[%s396 + $0x14] sm:$0x1]
      %v947 = vld [vmem:[%s396 + $0x18] sm:$0xe]
      %v948 = vld [vmem:[%s396 + $0x1c] sm:$0x1]
      %v949 = vld [vmem:[%s396 + $0x20] sm:$0xe]
      %v950 = vld [vmem:[%s396 + $0x24] sm:$0x1]
      %v951 = vld [vmem:[%s396 + $0x28] sm:$0xe]
      %v952 = vld [vmem:[%s396 + $0x2c] sm:$0x1]
      %v953 = vld [vmem:[%s396 + $0x30] sm:$0xe]
      %v954 = vld [vmem:[%s396 + $0x34] sm:$0x1]
      %v955 = vld [vmem:[%s396 + $0x38] sm:$0xe]
      %v956 = vld [vmem:[%s396 + $0x3c] sm:$0x1]
      %v973 = vrot.slane %v941, 5
      %v974 = vrot.slane %v973, 4
      %v975 = vrot.slane %v942, 5
      %v976 = vsel %vm665, %v974, %v975
      %v977 = vrot.slane %v943, 5
      %v978 = vrot.slane %v977, 4
      %v979 = vrot.slane %v944, 5
      %v980 = vsel %vm665, %v978, %v979
      %v981 = vrot.slane %v945, 5
      %v982 = vrot.slane %v981, 4
      %v983 = vrot.slane %v946, 5
      %v984 = vsel %vm665, %v982, %v983
      %v985 = vrot.slane %v947, 5
      %v986 = vrot.slane %v985, 4
      %v987 = vrot.slane %v948, 5
      %v988 = vsel %vm665, %v986, %v987
      %v989 = vrot.slane %v949, 5
      %v990 = vrot.slane %v989, 4
      %v991 = vrot.slane %v950, 5
      %v992 = vsel %vm665, %v990, %v991
      %v993 = vrot.slane %v951, 5
      %v994 = vrot.slane %v993, 4
      %v995 = vrot.slane %v952, 5
      %v996 = vsel %vm665, %v994, %v995
      %v997 = vrot.slane %v953, 5
      %v998 = vrot.slane %v997, 4
      %v999 = vrot.slane %v954, 5
      %v1000 = vsel %vm665, %v998, %v999
      %v1001 = vrot.slane %v955, 5
      %v1002 = vrot.slane %v1001, 4
      %v1003 = vrot.slane %v956, 5
      %v1004 = vsel %vm665, %v1002, %v1003
      %1005 = vrot.lane.b32.xlu0 %v976, 40
      %v1006 = vpop.permute.xlu0 %1005
      %1007 = vrot.lane.b32.xlu0 %v980, 40
      %v1008 = vpop.permute.xlu0 %1007
      %1009 = vrot.lane.b32.xlu0 %v984, 40
      %v1010 = vpop.permute.xlu0 %1009
      %1011 = vrot.lane.b32.xlu0 %v988, 40
      %v1012 = vpop.permute.xlu0 %1011
      %1013 = vrot.lane.b32.xlu0 %v992, 40
      %v1014 = vpop.permute.xlu0 %1013
      %1015 = vrot.lane.b32.xlu0 %v996, 40
      %v1016 = vpop.permute.xlu0 %1015
      %1017 = vrot.lane.b32.xlu0 %v1000, 40
      %v1018 = vpop.permute.xlu0 %1017
      %1019 = vrot.lane.b32.xlu0 %v1004, 40
      %v1020 = vpop.permute.xlu0 %1019
      %vm1029 = vcmask 388416
      %1030 = vst.msk [vmem:[#allocation3] sm:$0xf] %vm1029, %v1006
      %1031 = vst.msk [vmem:[#allocation3 + $0x4] sm:$0xf] %vm1029, %v1008
      %1032 = vst.msk [vmem:[#allocation3 + $0x8] sm:$0xf] %vm1029, %v1010
      %1033 = vst.msk [vmem:[#allocation3 + $0xc] sm:$0xf] %vm1029, %v1012
      %1034 = vst.msk [vmem:[#allocation3 + $0x10] sm:$0xf] %vm1029, %v1014
      %1035 = vst.msk [vmem:[#allocation3 + $0x14] sm:$0xf] %vm1029, %v1016
      %1036 = vst.msk [vmem:[#allocation3 + $0x18] sm:$0xf] %vm1029, %v1018
      %1037 = vst.msk [vmem:[#allocation3 + $0x1c] sm:$0xf] %vm1029, %v1020
      %s1038 = scalar_lea.vmem [#allocation2], 16
      %v1039 = vld [vmem:[%s1038] sm:$0xf]
      %v1040 = vld [vmem:[%s1038 + $0x8] sm:$0xf]
      %v1041 = vld [vmem:[%s1038 + $0x10] sm:$0xf]
      %v1042 = vld [vmem:[%s1038 + $0x18] sm:$0xf]
      %v1043 = vld [vmem:[%s1038 + $0x20] sm:$0xf]
      %v1044 = vld [vmem:[%s1038 + $0x28] sm:$0xf]
      %v1045 = vld [vmem:[%s1038 + $0x30] sm:$0xf]
      %v1046 = vld [vmem:[%s1038 + $0x38] sm:$0xf]
      %1055 = vrot.lane.b32.xlu0 %v1039, 48
      %v1056 = vpop.permute.xlu0 %1055
      %1057 = vrot.lane.b32.xlu0 %v1040, 48
      %v1058 = vpop.permute.xlu0 %1057
      %1059 = vrot.lane.b32.xlu0 %v1041, 48
      %v1060 = vpop.permute.xlu0 %1059
      %1061 = vrot.lane.b32.xlu0 %v1042, 48
      %v1062 = vpop.permute.xlu0 %1061
      %1063 = vrot.lane.b32.xlu0 %v1043, 48
      %v1064 = vpop.permute.xlu0 %1063
      %1065 = vrot.lane.b32.xlu0 %v1044, 48
      %v1066 = vpop.permute.xlu0 %1065
      %1067 = vrot.lane.b32.xlu0 %v1045, 48
      %v1068 = vpop.permute.xlu0 %1067
      %1069 = vrot.lane.b32.xlu0 %v1046, 48
      %v1070 = vpop.permute.xlu0 %1069
      %vm1079 = vcmask 454016
      %1080 = vst.msk [vmem:[#allocation3] sm:$0xf] %vm1079, %v1056
      %1081 = vst.msk [vmem:[#allocation3 + $0x4] sm:$0xf] %vm1079, %v1058
      %1082 = vst.msk [vmem:[#allocation3 + $0x8] sm:$0xf] %vm1079, %v1060
      %1083 = vst.msk [vmem:[#allocation3 + $0xc] sm:$0xf] %vm1079, %v1062
      %1084 = vst.msk [vmem:[#allocation3 + $0x10] sm:$0xf] %vm1079, %v1064
      %1085 = vst.msk [vmem:[#allocation3 + $0x14] sm:$0xf] %vm1079, %v1066
      %1086 = vst.msk [vmem:[#allocation3 + $0x18] sm:$0xf] %vm1079, %v1068
      %1087 = vst.msk [vmem:[#allocation3 + $0x1c] sm:$0xf] %vm1079, %v1070
      %v1088 = vld [vmem:[%s1038] sm:$0xf]
      %v1089 = vld [vmem:[%s1038 + $0x4] sm:$0x1]
      %v1090 = vld [vmem:[%s1038 + $0x8] sm:$0xf]
      %v1091 = vld [vmem:[%s1038 + $0xc] sm:$0x1]
      %v1092 = vld [vmem:[%s1038 + $0x10] sm:$0xf]
      %v1093 = vld [vmem:[%s1038 + $0x14] sm:$0x1]
      %v1094 = vld [vmem:[%s1038 + $0x18] sm:$0xf]
      %v1095 = vld [vmem:[%s1038 + $0x1c] sm:$0x1]
      %v1096 = vld [vmem:[%s1038 + $0x20] sm:$0xf]
      %v1097 = vld [vmem:[%s1038 + $0x24] sm:$0x1]
      %v1098 = vld [vmem:[%s1038 + $0x28] sm:$0xf]
      %v1099 = vld [vmem:[%s1038 + $0x2c] sm:$0x1]
      %v1100 = vld [vmem:[%s1038 + $0x30] sm:$0xf]
      %v1101 = vld [vmem:[%s1038 + $0x34] sm:$0x1]
      %v1102 = vld [vmem:[%s1038 + $0x38] sm:$0xf]
      %v1103 = vld [vmem:[%s1038 + $0x3c] sm:$0x1]
      %v1105 = vshrl.u32 %v1088, 16
      %v1107 = vrot.slane %v1105, 4
      %v1108 = vshll.u32 %v1088, 16
      %v1110 = vrot.slane %v1108, 5
      %v1111 = vor.u32 %v1107, %v1110
      %v1112 = vrot.slane %v1111, 4
      %v1114 = vshll.u32 %v1089, 16
      %v1116 = vrot.slane %v1114, 5
      %v1117 = vsel %vm485, %v1112, %v1116
      %v1119 = vshrl.u32 %v1090, 16
      %v1121 = vrot.slane %v1119, 4
      %v1122 = vshll.u32 %v1090, 16
      %v1124 = vrot.slane %v1122, 5
      %v1125 = vor.u32 %v1121, %v1124
      %v1126 = vrot.slane %v1125, 4
      %v1128 = vshll.u32 %v1091, 16
      %v1130 = vrot.slane %v1128, 5
      %v1131 = vsel %vm485, %v1126, %v1130
      %v1133 = vshrl.u32 %v1092, 16
      %v1135 = vrot.slane %v1133, 4
      %v1136 = vshll.u32 %v1092, 16
      %v1138 = vrot.slane %v1136, 5
      %v1139 = vor.u32 %v1135, %v1138
      %v1140 = vrot.slane %v1139, 4
      %v1142 = vshll.u32 %v1093, 16
      %v1144 = vrot.slane %v1142, 5
      %v1145 = vsel %vm485, %v1140, %v1144
      %v1147 = vshrl.u32 %v1094, 16
      %v1149 = vrot.slane %v1147, 4
      %v1150 = vshll.u32 %v1094, 16
      %v1152 = vrot.slane %v1150, 5
      %v1153 = vor.u32 %v1149, %v1152
      %v1154 = vrot.slane %v1153, 4
      %v1156 = vshll.u32 %v1095, 16
      %v1158 = vrot.slane %v1156, 5
      %v1159 = vsel %vm485, %v1154, %v1158
      %v1161 = vshrl.u32 %v1096, 16
      %v1163 = vrot.slane %v1161, 4
      %v1164 = vshll.u32 %v1096, 16
      %v1166 = vrot.slane %v1164, 5
      %v1167 = vor.u32 %v1163, %v1166
      %v1168 = vrot.slane %v1167, 4
      %v1170 = vshll.u32 %v1097, 16
      %v1172 = vrot.slane %v1170, 5
      %v1173 = vsel %vm485, %v1168, %v1172
      %v1175 = vshrl.u32 %v1098, 16
      %v1177 = vrot.slane %v1175, 4
      %v1178 = vshll.u32 %v1098, 16
      %v1180 = vrot.slane %v1178, 5
      %v1181 = vor.u32 %v1177, %v1180
      %v1182 = vrot.slane %v1181, 4
      %v1184 = vshll.u32 %v1099, 16
      %v1186 = vrot.slane %v1184, 5
      %v1187 = vsel %vm485, %v1182, %v1186
      %v1189 = vshrl.u32 %v1100, 16
      %v1191 = vrot.slane %v1189, 4
      %v1192 = vshll.u32 %v1100, 16
      %v1194 = vrot.slane %v1192, 5
      %v1195 = vor.u32 %v1191, %v1194
      %v1196 = vrot.slane %v1195, 4
      %v1198 = vshll.u32 %v1101, 16
      %v1200 = vrot.slane %v1198, 5
      %v1201 = vsel %vm485, %v1196, %v1200
      %v1203 = vshrl.u32 %v1102, 16
      %v1205 = vrot.slane %v1203, 4
      %v1206 = vshll.u32 %v1102, 16
      %v1208 = vrot.slane %v1206, 5
      %v1209 = vor.u32 %v1205, %v1208
      %v1210 = vrot.slane %v1209, 4
      %v1212 = vshll.u32 %v1103, 16
      %v1214 = vrot.slane %v1212, 5
      %v1215 = vsel %vm485, %v1210, %v1214
      %1216 = vrot.lane.b32.xlu0 %v1117, 56
      %v1217 = vpop.permute.xlu0 %1216
      %1218 = vrot.lane.b32.xlu0 %v1131, 56
      %v1219 = vpop.permute.xlu0 %1218
      %1220 = vrot.lane.b32.xlu0 %v1145, 56
      %v1221 = vpop.permute.xlu0 %1220
      %1222 = vrot.lane.b32.xlu0 %v1159, 56
      %v1223 = vpop.permute.xlu0 %1222
      %1224 = vrot.lane.b32.xlu0 %v1173, 56
      %v1225 = vpop.permute.xlu0 %1224
      %1226 = vrot.lane.b32.xlu0 %v1187, 56
      %v1227 = vpop.permute.xlu0 %1226
      %1228 = vrot.lane.b32.xlu0 %v1201, 56
      %v1229 = vpop.permute.xlu0 %1228
      %1230 = vrot.lane.b32.xlu0 %v1215, 56
      %v1231 = vpop.permute.xlu0 %1230
      %vm1240 = vcmask 519616
      %1241 = vst.msk [vmem:[#allocation3] sm:$0xf] %vm1240, %v1217
      %1242 = vst.msk [vmem:[#allocation3 + $0x4] sm:$0xf] %vm1240, %v1219
      %1243 = vst.msk [vmem:[#allocation3 + $0x8] sm:$0xf] %vm1240, %v1221
      %1244 = vst.msk [vmem:[#allocation3 + $0xc] sm:$0xf] %vm1240, %v1223
      %1245 = vst.msk [vmem:[#allocation3 + $0x10] sm:$0xf] %vm1240, %v1225
      %1246 = vst.msk [vmem:[#allocation3 + $0x14] sm:$0xf] %vm1240, %v1227
      %1247 = vst.msk [vmem:[#allocation3 + $0x18] sm:$0xf] %vm1240, %v1229
      %1248 = vst.msk [vmem:[#allocation3 + $0x1c] sm:$0xf] %vm1240, %v1231
      %v1249 = vld [vmem:[%s1038] sm:$0xe]
      %v1250 = vld [vmem:[%s1038 + $0x4] sm:$0x1]
      %v1251 = vld [vmem:[%s1038 + $0x8] sm:$0xe]
      %v1252 = vld [vmem:[%s1038 + $0xc] sm:$0x1]
      %v1253 = vld [vmem:[%s1038 + $0x10] sm:$0xe]
      %v1254 = vld [vmem:[%s1038 + $0x14] sm:$0x1]
      %v1255 = vld [vmem:[%s1038 + $0x18] sm:$0xe]
      %v1256 = vld [vmem:[%s1038 + $0x1c] sm:$0x1]
      %v1257 = vld [vmem:[%s1038 + $0x20] sm:$0xe]
      %v1258 = vld [vmem:[%s1038 + $0x24] sm:$0x1]
      %v1259 = vld [vmem:[%s1038 + $0x28] sm:$0xe]
      %v1260 = vld [vmem:[%s1038 + $0x2c] sm:$0x1]
      %v1261 = vld [vmem:[%s1038 + $0x30] sm:$0xe]
      %v1262 = vld [vmem:[%s1038 + $0x34] sm:$0x1]
      %v1263 = vld [vmem:[%s1038 + $0x38] sm:$0xe]
      %v1264 = vld [vmem:[%s1038 + $0x3c] sm:$0x1]
      %v1281 = vrot.slane %v1249, 5
      %v1282 = vrot.slane %v1281, 4
      %v1283 = vrot.slane %v1250, 5
      %v1284 = vsel %vm665, %v1282, %v1283
      %v1285 = vrot.slane %v1251, 5
      %v1286 = vrot.slane %v1285, 4
      %v1287 = vrot.slane %v1252, 5
      %v1288 = vsel %vm665, %v1286, %v1287
      %v1289 = vrot.slane %v1253, 5
      %v1290 = vrot.slane %v1289, 4
      %v1291 = vrot.slane %v1254, 5
      %v1292 = vsel %vm665, %v1290, %v1291
      %v1293 = vrot.slane %v1255, 5
      %v1294 = vrot.slane %v1293, 4
      %v1295 = vrot.slane %v1256, 5
      %v1296 = vsel %vm665, %v1294, %v1295
      %v1297 = vrot.slane %v1257, 5
      %v1298 = vrot.slane %v1297, 4
      %v1299 = vrot.slane %v1258, 5
      %v1300 = vsel %vm665, %v1298, %v1299
      %v1301 = vrot.slane %v1259, 5
      %v1302 = vrot.slane %v1301, 4
      %v1303 = vrot.slane %v1260, 5
      %v1304 = vsel %vm665, %v1302, %v1303
      %v1305 = vrot.slane %v1261, 5
      %v1306 = vrot.slane %v1305, 4
      %v1307 = vrot.slane %v1262, 5
      %v1308 = vsel %vm665, %v1306, %v1307
      %v1309 = vrot.slane %v1263, 5
      %v1310 = vrot.slane %v1309, 4
      %v1311 = vrot.slane %v1264, 5
      %v1312 = vsel %vm665, %v1310, %v1311
      %1313 = vrot.lane.b32.xlu0 %v1284, 64
      %v1314 = vpop.permute.xlu0 %1313
      %1315 = vrot.lane.b32.xlu0 %v1288, 64
      %v1316 = vpop.permute.xlu0 %1315
      %1317 = vrot.lane.b32.xlu0 %v1292, 64
      %v1318 = vpop.permute.xlu0 %1317
      %1319 = vrot.lane.b32.xlu0 %v1296, 64
      %v1320 = vpop.permute.xlu0 %1319
      %1321 = vrot.lane.b32.xlu0 %v1300, 64
      %v1322 = vpop.permute.xlu0 %1321
      %1323 = vrot.lane.b32.xlu0 %v1304, 64
      %v1324 = vpop.permute.xlu0 %1323
      %1325 = vrot.lane.b32.xlu0 %v1308, 64
      %v1326 = vpop.permute.xlu0 %1325
      %1327 = vrot.lane.b32.xlu0 %v1312, 64
      %v1328 = vpop.permute.xlu0 %1327
      %vm1337 = vcmask 585216
      %1338 = vst.msk [vmem:[#allocation3] sm:$0xf] %vm1337, %v1314
      %1339 = vst.msk [vmem:[#allocation3 + $0x4] sm:$0xf] %vm1337, %v1316
      %1340 = vst.msk [vmem:[#allocation3 + $0x8] sm:$0xf] %vm1337, %v1318
      %1341 = vst.msk [vmem:[#allocation3 + $0xc] sm:$0xf] %vm1337, %v1320
      %1342 = vst.msk [vmem:[#allocation3 + $0x10] sm:$0xf] %vm1337, %v1322
      %1343 = vst.msk [vmem:[#allocation3 + $0x14] sm:$0xf] %vm1337, %v1324
      %1344 = vst.msk [vmem:[#allocation3 + $0x18] sm:$0xf] %vm1337, %v1326
      %1345 = vst.msk [vmem:[#allocation3 + $0x1c] sm:$0xf] %vm1337, %v1328
      %v1346 = vld [vmem:[#allocation3] sm:$0xf]
      %v1347 = vld [vmem:[#allocation3 + $0x4] sm:$0xf]
      %v1348 = vld [vmem:[#allocation3 + $0x8] sm:$0xf]
      %v1349 = vld [vmem:[#allocation3 + $0xc] sm:$0xf]
      %v1350 = vld [vmem:[#allocation3 + $0x10] sm:$0xf]
      %v1351 = vld [vmem:[#allocation3 + $0x14] sm:$0xf]
      %v1352 = vld [vmem:[#allocation3 + $0x18] sm:$0xf]
      %v1353 = vld [vmem:[#allocation3 + $0x1c] sm:$0xf]
      %v1354 = vld [vmem:[%s3] sm:$0xf]
      %v1355 = vld [vmem:[%s3 + $0x4] sm:$0xf]
      %v1356 = vld [vmem:[%s3 + $0x8] sm:$0xf]
      %v1357 = vld [vmem:[%s3 + $0xc] sm:$0xf]
      %v1358 = vld [vmem:[%s3 + $0x10] sm:$0xf]
      %v1359 = vld [vmem:[%s3 + $0x14] sm:$0xf]
      %v1360 = vld [vmem:[%s3 + $0x18] sm:$0xf]
      %v1361 = vld [vmem:[%s3 + $0x1c] sm:$0xf]
      %v1362 = vld [vmem:[%s3 + $0x20] sm:$0xf]
      %v1371 = vunpack.c.l.b16 %v1346
      %v1372 = vunpack.c.l.b16 %v1347
      %v1373 = vunpack.c.l.b16 %v1348
      %v1374 = vunpack.c.l.b16 %v1349
      %v1375 = vunpack.c.l.b16 %v1350
      %v1376 = vunpack.c.l.b16 %v1351
      %v1377 = vunpack.c.l.b16 %v1352
      %v1378 = vunpack.c.l.b16 %v1353
      %v1379 = vpack.c.b16 %v1372, %v1371
      %v1380 = vpack.c.b16 %v1374, %v1373
      %v1381 = vpack.c.b16 %v1376, %v1375
      %v1382 = vpack.c.b16 %v1378, %v1377
      %v1392 = vunpack.c.l.b16 %v1354
      %v1393 = vunpack.c.l.b16 %v1355
      %v1394 = vunpack.c.l.b16 %v1356
      %v1395 = vunpack.c.l.b16 %v1357
      %v1396 = vunpack.c.l.b16 %v1358
      %v1397 = vunpack.c.l.b16 %v1359
      %v1398 = vunpack.c.l.b16 %v1360
      %v1399 = vunpack.c.l.b16 %v1361
      %v1400 = vunpack.c.l.b16 %v1362
      %v1401 = vpack.c.b16 %v1393, %v1392
      %v1402 = vpack.c.b16 %v1395, %v1394
      %v1403 = vpack.c.b16 %v1397, %v1396
      %v1404 = vpack.c.b16 %v1399, %v1398
      %v1405 = vpack.c.b16 %v1400, %v1400
      %vm1410 = vcmask 588800
      %v1412 = vsel %vm1410, %v1379, 0
      %v1415 = vsel %vm1410, %v1380, 0
      %v1418 = vsel %vm1410, %v1381, 0
      %v1421 = vsel %vm1410, %v1382, 0
      %vm1423 = vcmask 1043456
      %v1425 = vsel %vm1423, %v1405, 0
      %1427 = vmatpush.bf16.msra.mxu0 0
      %1428 = vmatpush.bf16.msra.mxu0 0
      %1429 = vmatpush.bf16.msra.mxu0 0
      %1430 = vmatpush.bf16.msra.mxu0 %v1425
      %1431 = vmatpush.bf16.msra.mxu0 %v1404
      %1432 = vmatpush.bf16.msra.mxu0 %v1403
      %1433 = vmatpush.bf16.msra.mxu0 %v1402
      %1434 = vmatpush.bf16.msra.mxu0 %v1401
      %1435 = vmatmul.bf16.gmra.mxu0 %v1412
      %v1436 = vpop.f32.mrf.mxu0
      %v1437 = vadd.f32 0.0, %v1436
      %v1438 = vpop.f32.mrf.mxu0
      %v1439 = vadd.f32 0.0, %v1438
      %1440 = vmatmul.bf16.gmra.mxu0 %v1415
      %v1441 = vpop.f32.mrf.mxu0
      %v1442 = vadd.f32 0.0, %v1441
      %v1443 = vpop.f32.mrf.mxu0
      %v1444 = vadd.f32 0.0, %v1443
      %1445 = vmatmul.bf16.gmra.mxu0 %v1418
      %v1446 = vpop.f32.mrf.mxu0
      %v1447 = vadd.f32 0.0, %v1446
      %v1448 = vpop.f32.mrf.mxu0
      %v1449 = vadd.f32 0.0, %v1448
      %1450 = vmatmul.bf16.gmra.mxu0 %v1421
      %v1451 = vpop.f32.mrf.mxu0
      %v1452 = vadd.f32 0.0, %v1451
      %v1453 = vpop.f32.mrf.mxu0
      %v1454 = vadd.f32 0.0, %v1453
      %1455 = vdwg.mxu0
      %v1456 = vpack.c.bf16 %v1437, %v1437
      %v1457 = vpack.c.bf16 %v1439, %v1439
      %v1458 = vpack.c.bf16 %v1442, %v1442
      %v1459 = vpack.c.bf16 %v1444, %v1444
      %v1460 = vpack.c.bf16 %v1447, %v1447
      %v1461 = vpack.c.bf16 %v1449, %v1449
      %v1462 = vpack.c.bf16 %v1452, %v1452
      %v1463 = vpack.c.bf16 %v1454, %v1454
      %1464 = vst.msk [vmem:[%s231] sm:$0xf] %vm286, %v1456
      %1465 = vst.msk [vmem:[%s231 + $0x4] sm:$0xf] %vm286, %v1457
      %1466 = vst.msk [vmem:[%s231 + $0x8] sm:$0xf] %vm286, %v1458
      %1467 = vst.msk [vmem:[%s231 + $0xc] sm:$0xf] %vm286, %v1459
      %1468 = vst.msk [vmem:[%s231 + $0x10] sm:$0xf] %vm286, %v1460
      %1469 = vst.msk [vmem:[%s231 + $0x14] sm:$0xf] %vm286, %v1461
      %1470 = vst.msk [vmem:[%s231 + $0x18] sm:$0xf] %vm286, %v1462
      %1471 = vst.msk [vmem:[%s231 + $0x1c] sm:$0xf] %vm286, %v1463
      %vm1472 = vcmask 64512
      %v1473 = vsel %vm1472, %v1437, 0.0
      %v1474 = vsel %vm1472, %v1439, 0.0
      %v1475 = vadd.f32 %v1473, %v1474
      %v1476 = vsel %vm1472, %v1442, 0.0
      %v1477 = vadd.f32 %v1475, %v1476
      %v1478 = vsel %vm1472, %v1444, 0.0
      %v1479 = vadd.f32 %v1477, %v1478
      %v1480 = vsel %vm1472, %v1447, 0.0
      %v1481 = vadd.f32 %v1479, %v1480
      %v1482 = vsel %vm1472, %v1449, 0.0
      %v1483 = vadd.f32 %v1481, %v1482
      %v1484 = vsel %vm1472, %v1452, 0.0
      %v1485 = vadd.f32 %v1483, %v1484
      %v1486 = vsel %vm1472, %v1454, 0.0
      %v1487 = vadd.f32 %v1485, %v1486
      %v1488 = vrot.slane %v1487, 4
      %v1489 = vadd.f32 %v1487, %v1488
      %v1490 = vrot.slane %v1489, 2
      %v1491 = vadd.f32 %v1489, %v1490
      %v1492 = vrot.slane %v1491, 1
      %v1493 = vadd.f32 %v1491, %v1492
      %v1494 = vmul.f32 %v1493, 0.015625
      %v1495 = vsub.f32 %v1437, %v1494
      %v1496 = vsub.f32 %v1439, %v1494
      %v1497 = vsub.f32 %v1442, %v1494
      %v1498 = vsub.f32 %v1444, %v1494
      %v1499 = vsub.f32 %v1447, %v1494
      %v1500 = vsub.f32 %v1449, %v1494
      %v1501 = vsub.f32 %v1452, %v1494
      %v1502 = vsub.f32 %v1454, %v1494
      %v1503 = vmul.f32 %v1495, %v1495
      %v1504 = vmul.f32 %v1496, %v1496
      %v1505 = vmul.f32 %v1497, %v1497
      %v1506 = vmul.f32 %v1498, %v1498
      %v1507 = vmul.f32 %v1499, %v1499
      %v1508 = vmul.f32 %v1500, %v1500
      %v1509 = vmul.f32 %v1501, %v1501
      %v1510 = vmul.f32 %v1502, %v1502
      %v1511 = vsel %vm1472, %v1503, 0.0
      %v1512 = vsel %vm1472, %v1504, 0.0
      %v1513 = vadd.f32 %v1511, %v1512
      %v1514 = vsel %vm1472, %v1505, 0.0
      %v1515 = vadd.f32 %v1513, %v1514
      %v1516 = vsel %vm1472, %v1506, 0.0
      %v1517 = vadd.f32 %v1515, %v1516
      %v1518 = vsel %vm1472, %v1507, 0.0
      %v1519 = vadd.f32 %v1517, %v1518
      %v1520 = vsel %vm1472, %v1508, 0.0
      %v1521 = vadd.f32 %v1519, %v1520
      %v1522 = vsel %vm1472, %v1509, 0.0
      %v1523 = vadd.f32 %v1521, %v1522
      %v1524 = vsel %vm1472, %v1510, 0.0
      %v1525 = vadd.f32 %v1523, %v1524
      %v1526 = vrot.slane %v1525, 4
      %v1527 = vadd.f32 %v1525, %v1526
      %v1528 = vrot.slane %v1527, 2
      %v1529 = vadd.f32 %v1527, %v1528
      %v1530 = vrot.slane %v1529, 1
      %v1531 = vadd.f32 %v1529, %v1530
      %vm1532 = vcmask 1040384
      %v1533 = vsel %vm1532, %v1493, %v1531
      %vm1534 = vcmask 1041408
      %v1535 = vsel %vm1534, %v1533, 0.0
      %1536 = vst.msk [vmem:[%s236] sm:$0xff] %vm1472, %v1535
      %s1537 = smul.u32 8, %s17
      %p1538 = scmp.lt.s32.totalorder %s1537, 15
      %s1539 = scalar_select %p1538, %s1537, 15
      %s1540 = smul.addr %s1539, 4
      %s1541 = scalar_lea.vmem %s4, %s1540
      %p1542 = scmp.lt.s32.totalorder %s17, 1
      %s1543 = scalar_select %p1542, %s17, 1
      %s1544 = smul.addr %s1543, 8
      %s1545 = scalar_lea.vmem %s5, %s1544
      // Predicated region
      $region37: #{residual_block_forward.5} parent=35 // pred_check
        %p1546 = pneg %p124
      $region38: #{residual_block_forward.5} parent=35 // pred_check_branch
        %1548 = sbr.rel (%p1546) target = $region40
      $region39: #{residual_block_forward.5} parent=35 // pred_region
        %s1549 = smul.u32 8, %s17
      $region40: #{residual_block_forward.5} parent=35 // pred_fallthru
        _
      // Predicated region
      $region41: #{residual_block_forward.5} parent=35 // pred_check
        %p1550 = pneg %p150
      $region42: #{residual_block_forward.5} parent=35 // pred_check_branch
        %1552 = sbr.rel (%p1550) target = $region44
      $region43: #{residual_block_forward.5} parent=35 // pred_region
        _
      $region44: #{residual_block_forward.5} parent=35 // pred_fallthru
        _
    $region36: #{residual_block_forward.5} parent=5 // pred_fallthru
      _
    %p1553 = scmp.le.s32.totalorder 2, %s12
    // Predicated region
    $region45: #{residual_block_forward.5} parent=5 // pred_check
      %p1554 = pneg %p1553
    $region46: #{residual_block_forward.5} parent=5 // pred_check_branch
      %1556 = sbr.rel (%p1554) target = $region48
    $region47: #{residual_block_forward.5} parent=5 // pred_region
      %s1557 = ssub.s32 %s12, 2
      // Predicated region
      $region49: #{residual_block_forward.5} parent=47 // pred_check
        %p1558 = pneg %p130
      $region50: #{residual_block_forward.5} parent=47 // pred_check_branch
        %1560 = sbr.rel (%p1558) target = $region52
      $region51: #{residual_block_forward.5} parent=47 // pred_region
        %s1561 = smul.u32 8, %s18
        %p1562 = scmp.lt.s32.totalorder %s1561, 15
        %s1563 = scalar_select %p1562, %s1561, 15
        %s1564 = smul.addr %s1563, 4
        %s1565 = scalar_lea.vmem %s4, %s1564
      $region52: #{residual_block_forward.5} parent=47 // pred_fallthru
        _
      // Predicated region
      $region53: #{residual_block_forward.5} parent=47 // pred_check
        %p1566 = pneg %p156
      $region54: #{residual_block_forward.5} parent=47 // pred_check_branch
        %1568 = sbr.rel (%p1566) target = $region56
      $region55: #{residual_block_forward.5} parent=47 // pred_region
        %p1569 = scmp.lt.s32.totalorder %s18, 1
        %s1570 = scalar_select %p1569, %s18, 1
        %s1571 = smul.addr %s1570, 8
        %s1572 = scalar_lea.vmem %s5, %s1571
      $region56: #{residual_block_forward.5} parent=47 // pred_fallthru
        _
    $region48: #{residual_block_forward.5} parent=5 // pred_fallthru
      _
  $region6: #{residual_block_forward.5} parent=0 // loop_footer
    %s16 = sadd.s32 1, %s12
  $region7: #{residual_block_forward.5} parent=0 // loop_footer_branch
    %11 = sbr.rel target = $region3
  $region8: #{residual_block_forward.5} parent=0 // loop_exit
    _

</llo_original>
